<compile_context>
chip_gen: v7x
topology: tpu7x:2x2x1
jax: 0.10.0
libtpu: 0.0.40
codegen_flags: <defaults>
</compile_context>

<pallas_src>
import functools
import math

import jax
import jax.numpy as jnp
from jax.experimental import pallas as pl
from jax.experimental.pallas import tpu as pltpu

# ---- tiny synthetic BERT config (no checkpoint loading) ----
VOCAB = 100
HIDDEN = 32
N_HEADS = 2
HEAD_DIM = HIDDEN // N_HEADS
INTER = 64
N_LAYERS = 2
MAX_POS = 16
NUM_LABELS = 5
LN_EPS = 1e-12

VMEM = pltpu.MemorySpace.VMEM
SMEM = pltpu.MemorySpace.SMEM


# ------------------------- the fused kernel -------------------------

def _bert_crf_kernel(
    x_ref, attn_bias_ref, mask_tm_ref, labels_tm_ref,
    labels_s_ref, mask_s_ref, trans_s_ref,
    emb_g_ref, emb_b_ref,
    wqv_ref, bqv_ref, wk_ref, bk_ref, wo_ref, bo_ref,
    ln1_g_ref, ln1_b_ref,
    w1_ref, b1_ref, w2_ref, b2_ref,
    ln2_g_ref, ln2_b_ref,
    cls_w_ref, cls_b_ref,
    trans_t_ref, start_ref, end_ref,
    logits_ref, nll_ref,
    *, B, S, n_layers, n_heads, head_dim, scale, eps):
  f32 = jnp.float32
  H = n_heads * head_dim
  L = cls_b_ref.shape[-1]
  nt_last = (((1,), (1,)), ((), ()))        # contract last dims: A @ B.T
  bnn = (((2,), (1,)), ((0,), (0,)))        # head-batched NN matmul

  def layer_norm(h, g, b):
    mu = jnp.mean(h, axis=-1, keepdims=True)
    d = h - mu
    var = jnp.mean(d * d, axis=-1, keepdims=True)
    return d * jax.lax.rsqrt(var + eps) * g + b

  def gelu(h):
    # TODO(synk): HF BERT uses erf-GELU; tanh approximation used here.
    c = 0.7978845608028654
    return 0.5 * h * (1.0 + jnp.tanh(c * (h + 0.044715 * h * h * h)))

  # ---- embedding LayerNorm (dropout = identity in eval mode) ----
  x = layer_norm(x_ref[...], emb_g_ref[...], emb_b_ref[...])   # (B*S, H) time-major rows
  attn_bias = attn_bias_ref[...]                               # (B*S, B*S)

  # ---- transformer encoder: all activations stay resident in VMEM / vregs ----
  # TODO(synk): at real BERT sizes move layers onto an `arbitrary` grid axis with
  # BlockSpec-streamed weights, add a `parallel` token-tile axis (v7x: 2 TCs),
  # target 256-aligned MXU tiles on v6e/v7x (128 on v5e), and stream K/V
  # flash-style instead of the dense (B*S, B*S) bias (v7x VMEM = 64 MiB).
  for l in range(n_layers):
    # Q+V fused into ONE token-major matmul; K via one feature-major matmul so
    # per-head K slices feed the score matmul with no transpose.
    qv = jnp.dot(x, wqv_ref[l], preferred_element_type=f32) + bqv_ref[l]     # (BS, 2H)
    k_fm = jax.lax.dot_general(wk_ref[l], x, nt_last,
                               preferred_element_type=f32) + bk_ref[l]       # (H, BS)
    q3 = jnp.stack([qv[:, h * head_dim:(h + 1) * head_dim]
                    for h in range(n_heads)], axis=0)          # (nh, BS, hd)
    v3 = jnp.stack([qv[:, H + h * head_dim:H + (h + 1) * head_dim]
                    for h in range(n_heads)], axis=0)          # (nh, BS, hd) token-major
    k3 = jnp.stack([k_fm[h * head_dim:(h + 1) * head_dim, :]
                    for h in range(n_heads)], axis=0)          # (nh, hd, BS) feature-major

    # head-batched NN contractions (single dot_general issues, no per-head loop)
    s3 = jax.lax.dot_general(q3, k3, bnn, preferred_element_type=f32)        # (nh, BS, BS)
    s3 = s3 * scale + attn_bias[None, :, :]
    m = jnp.max(s3, axis=-1, keepdims=True)
    e = jnp.exp(s3 - m)
    p = e / jnp.sum(e, axis=-1, keepdims=True)       # exact division (torch parity)
    ctx3 = jax.lax.dot_general(p, v3, bnn, preferred_element_type=f32)       # (nh, BS, hd)
    ao3 = jax.lax.dot_general(ctx3, wo_ref[l], bnn,
                              preferred_element_type=f32)                    # (nh, BS, H)
    ao = jnp.sum(ao3, axis=0) + bo_ref[l]
    x = layer_norm(ao + x, ln1_g_ref[l], ln1_b_ref[l])

    ff = gelu(jnp.dot(x, w1_ref[l], preferred_element_type=f32) + b1_ref[l])
    ff = jnp.dot(ff, w2_ref[l], preferred_element_type=f32) + b2_ref[l]
    x = layer_norm(ff + x, ln2_g_ref[l], ln2_b_ref[l])

  # ---- token-classification head: ONE contiguous store (time-major rows) ----
  logits2d = jnp.dot(x, cls_w_ref[...],
                     preferred_element_type=f32) + cls_b_ref[...]            # (B*S, L)
  logits_ref[...] = logits2d

  # ---- CRF negative log-likelihood (torchcrf semantics, reduction='sum') ----
  # Batch-vectorized; emissions sliced from the in-vreg logits value (no output
  # read-back), one contiguous (B, L) slab per time step.
  trans_t = trans_t_ref[...]       # (L, L); trans_t[j, i] = transitions[i, j]
  start = start_ref[...]           # (1, L)
  end = end_ref[...]               # (1, L)
  lane = jax.lax.broadcasted_iota(jnp.int32, (B, L), 1)

  e0 = logits2d[0:B, :]                                     # (B, L)
  oh = (lane == labels_tm_ref[0:B, :]).astype(f32)          # (B, L)
  alpha = start + e0                                        # (B, L)
  gold_vec = alpha * oh                                     # start[y0] + e0[y0]
  last_oh = oh

  # TODO(synk): at long seq lengths stage emissions in a (S, B, L) VMEM scratch
  # and convert this static unroll to lax.fori_loop.
  for t in range(1, S):
    e_t = logits2d[t * B:(t + 1) * B, :]                    # (B, L)
    m_t = mask_tm_ref[t * B:(t + 1) * B, :]                 # (B, 1)
    oh_t = (lane == labels_tm_ref[t * B:(t + 1) * B, :]).astype(f32)
    gold_vec = gold_vec + e_t * oh_t * m_t                  # deferred reduction
    last_oh = jnp.where(m_t > 0.0, oh_t, last_oh)
    # partition function, overflow-safe log-space, vectorized over the batch:
    #   alpha'_{b,j} = logsumexp_i(alpha_{b,i} + T_ij) + e_t_{b,j}
    tmp = alpha[:, None, :] + trans_t[None, :, :]           # (B, j, i)
    mx = jnp.max(tmp, axis=-1)
    nxt = mx + jnp.log(jnp.sum(jnp.exp(tmp - mx[..., None]), axis=-1)) + e_t
    alpha = jnp.where(m_t > 0.0, nxt, alpha)

  gold_vec = gold_vec + end * last_oh
  gold_emit = jnp.sum(gold_vec, axis=-1, keepdims=True)     # (B, 1): one reduce total

  # gold-path transition score: scalar SMEM lookups (scalar slot is idle, this
  # chain runs off the vector critical path)
  row = jax.lax.broadcasted_iota(jnp.int32, (B, 1), 0)
  trans_gold = jnp.zeros((B, 1), f32)
  for b in range(B):
    acc = jnp.float32(0.0)
    for t in range(1, S):
      tr = trans_s_ref[labels_s_ref[b, t - 1] * L + labels_s_ref[b, t]]
      acc = acc + jnp.where(mask_s_ref[b, t] > 0, tr, jnp.float32(0.0))
    trans_gold = trans_gold + jnp.where(row == b, acc, jnp.float32(0.0))

  fin = alpha + end
  mz = jnp.max(fin, axis=-1, keepdims=True)
  logz = mz + jnp.log(jnp.sum(jnp.exp(fin - mz), axis=-1, keepdims=True))   # (B, 1)

  nll_ref[...] = logz - (gold_emit + trans_gold)


# ------------------------- params / forward -------------------------

def init_params(key):
  ks = iter(jax.random.split(key, 16))

  def nrm(shape, sc=0.02):
    return (sc * jax.random.normal(next(ks), shape)).astype(jnp.float32)

  H, NL, NH, HD = HIDDEN, N_LAYERS, N_HEADS, HEAD_DIM
  return {
      "word_emb": nrm((VOCAB, H)),
      "pos_emb": nrm((MAX_POS, H)),
      "type_emb": nrm((2, H)),
      "emb_ln_g": jnp.ones((1, H), jnp.float32),
      "emb_ln_b": jnp.zeros((1, H), jnp.float32),
      # stacked per-layer weights (leading layer/head axes indexed in-kernel):
      "wqv": nrm((NL, H, 2 * H)),            # fused Q (cols :H) + V (cols H:), token-major
      "bqv": jnp.zeros((NL, 1, 2 * H), jnp.float32),
      "wk_fm": nrm((NL, H, H)),              # K, feature-major (out_feat, in_feat)
      "bk_fm": jnp.zeros((NL, H, 1), jnp.float32),
      "wo_h": nrm((NL, NH, HD, H)),          # W_O split per head
      "bo": jnp.zeros((NL, 1, H), jnp.float32),
      "ln1_g": jnp.ones((NL, 1, H), jnp.float32),
      "ln1_b": jnp.zeros((NL, 1, H), jnp.float32),
      "w1": nrm((NL, H, INTER)),
      "b1": jnp.zeros((NL, 1, INTER), jnp.float32),
      "w2": nrm((NL, INTER, H)),
      "b2": jnp.zeros((NL, 1, H), jnp.float32),
      "ln2_g": jnp.ones((NL, 1, H), jnp.float32),
      "ln2_b": jnp.zeros((NL, 1, H), jnp.float32),
      "cls_w": nrm((H, NUM_LABELS)),
      "cls_b": jnp.zeros((1, NUM_LABELS), jnp.float32),
      "crf_start": nrm((1, NUM_LABELS), 0.1),
      "crf_end": nrm((1, NUM_LABELS), 0.1),
      "crf_trans": nrm((NUM_LABELS, NUM_LABELS), 0.1),
  }


def bert_crf_forward(params, input_ids, attention_mask, labels):
  B, S = input_ids.shape
  BS = B * S

  # Glue outside the kernel: embedding gathers + (free) time-major reorder +
  # dense additive attention bias.  Everything else (embedding LN, all encoder
  # layers, classifier, CRF NLL) runs in ONE fused pallas_call so activations
  # never leave VMEM between ops.
  x = (jnp.take(params["word_emb"], input_ids, axis=0)
       + params["pos_emb"][:S][None, :, :]
       + params["type_emb"][0][None, None, :])                  # (B, S, H)
  # time-major row ordering (row = t*B + b): CRF reads contiguous (B, L) slabs,
  # logits are one dense store; the transposes live here in XLA, not in-kernel.
  x_tm = jnp.transpose(x, (1, 0, 2)).reshape(BS, HIDDEN).astype(jnp.float32)

  maskf = attention_mask.astype(jnp.float32)                    # (B, S)
  mask_tm = maskf.T.reshape(BS, 1)                              # row = t*B + b
  # one (B*S, B*S) additive bias shared by all heads/layers: -1e9 on padded keys
  # and cross-batch pairs.  NOTE: torchcrf requires attention_mask[:, 0] == 1.
  batch_of = jnp.arange(BS, dtype=jnp.int32) % B
  same_batch = batch_of[:, None] == batch_of[None, :]
  key_valid = (mask_tm.reshape(-1) > 0.0)[None, :]
  attn_bias = jnp.where(same_batch & key_valid, 0.0, -1e9).astype(jnp.float32)

  labels_c = jnp.where(labels < 0, 0, labels).astype(jnp.int32)  # labels[labels<0]=0
  labels_tm = labels_c.T.reshape(BS, 1)
  mask_i = attention_mask.astype(jnp.int32)
  trans_flat = params["crf_trans"].reshape(-1)     # (L*L,) SMEM gold-path lookup table

  kernel = functools.partial(
      _bert_crf_kernel, B=B, S=S, n_layers=N_LAYERS, n_heads=N_HEADS,
      head_dim=HEAD_DIM, scale=1.0 / math.sqrt(HEAD_DIM), eps=LN_EPS)

  def vm():
    return pl.BlockSpec(memory_space=VMEM)

  def sm():
    return pl.BlockSpec(memory_space=SMEM)

  # Footprint is a few hundred KiB -> default scoped VMEM limit is fine on
  # v5e/v6e/v7x; re-derive per generation only when tiles are scaled up.
  logits_tm, nll = pl.pallas_call(
      kernel,
      out_shape=(jax.ShapeDtypeStruct((BS, NUM_LABELS), jnp.float32),
                 jax.ShapeDtypeStruct((B, 1), jnp.float32)),
      in_specs=[vm(), vm(), vm(), vm(), sm(), sm(), sm()]
               + [vm() for _ in range(21)],
      out_specs=(vm(), vm()),
  )(x_tm, attn_bias, mask_tm, labels_tm,
    labels_c, mask_i, trans_flat,
    params["emb_ln_g"], params["emb_ln_b"],
    params["wqv"], params["bqv"], params["wk_fm"], params["bk_fm"],
    params["wo_h"], params["bo"],
    params["ln1_g"], params["ln1_b"],
    params["w1"], params["b1"], params["w2"], params["b2"],
    params["ln2_g"], params["ln2_b"],
    params["cls_w"], params["cls_b"],
    params["crf_trans"].T, params["crf_start"], params["crf_end"])

  logits = jnp.transpose(logits_tm.reshape(S, B, NUM_LABELS), (1, 0, 2))
  loss = jnp.sum(nll)  # torchcrf reduction='sum': loss = -sum_b log p(y_b | x_b)
  # TODO(synk): CRF Viterbi decode (inference branch, labels=None) not implemented.
  return {"loss": loss, "logits": logits}


if __name__ == "__main__":
  B, S = 2, 8
  key = jax.random.PRNGKey(0)
  kp, ki, kl = jax.random.split(key, 3)
  params = init_params(kp)

  input_ids = jax.random.randint(ki, (B, S), 0, VOCAB, dtype=jnp.int32)
  attention_mask = jnp.array([[1, 1, 1, 1, 1, 1, 1, 1],
                              [1, 1, 1, 1, 1, 0, 0, 0]], dtype=jnp.int32)
  labels = jax.random.randint(kl, (B, S), 0, NUM_LABELS, dtype=jnp.int32)
  labels = jnp.where(attention_mask == 0, -100, labels)  # padded labels < 0

  fwd = jax.jit(bert_crf_forward)
  out = fwd(params, input_ids, attention_mask, labels)
  jax.block_until_ready(out)
  print("KERNEL_OK")
</pallas_src>

<mosaic_0001>
module attributes {stable_mosaic.version = 11 : i64} {
  func.func @_bert_crf_kernel(%arg0: memref<16x32xf32, #tpu.memory_space<vmem>>, %arg1: memref<16x16xf32, #tpu.memory_space<vmem>>, %arg2: memref<16x1xf32, #tpu.memory_space<vmem>>, %arg3: memref<16x1xi32, #tpu.memory_space<vmem>>, %arg4: memref<2x8xi32, #tpu.memory_space<smem>>, %arg5: memref<2x8xi32, #tpu.memory_space<smem>>, %arg6: memref<25xf32, #tpu.memory_space<smem>>, %arg7: memref<1x32xf32, #tpu.memory_space<vmem>>, %arg8: memref<1x32xf32, #tpu.memory_space<vmem>>, %arg9: memref<2x32x64xf32, #tpu.memory_space<vmem>>, %arg10: memref<2x1x64xf32, #tpu.memory_space<vmem>>, %arg11: memref<2x32x32xf32, #tpu.memory_space<vmem>>, %arg12: memref<2x32x1xf32, #tpu.memory_space<vmem>>, %arg13: memref<2x2x16x32xf32, #tpu.memory_space<vmem>>, %arg14: memref<2x1x32xf32, #tpu.memory_space<vmem>>, %arg15: memref<2x1x32xf32, #tpu.memory_space<vmem>>, %arg16: memref<2x1x32xf32, #tpu.memory_space<vmem>>, %arg17: memref<2x32x64xf32, #tpu.memory_space<vmem>>, %arg18: memref<2x1x64xf32, #tpu.memory_space<vmem>>, %arg19: memref<2x64x32xf32, #tpu.memory_space<vmem>>, %arg20: memref<2x1x32xf32, #tpu.memory_space<vmem>>, %arg21: memref<2x1x32xf32, #tpu.memory_space<vmem>>, %arg22: memref<2x1x32xf32, #tpu.memory_space<vmem>>, %arg23: memref<32x5xf32, #tpu.memory_space<vmem>>, %arg24: memref<1x5xf32, #tpu.memory_space<vmem>>, %arg25: memref<5x5xf32, #tpu.memory_space<vmem>>, %arg26: memref<1x5xf32, #tpu.memory_space<vmem>>, %arg27: memref<1x5xf32, #tpu.memory_space<vmem>>, %arg28: memref<16x5xf32, #tpu.memory_space<vmem>>, %arg29: memref<2x1xf32, #tpu.memory_space<vmem>>) attributes {dimension_semantics = [], scalar_prefetch = 0 : i64, scratch_operands = 0 : i64, tpu.core_type = #tpu.core_type<tc>} {
    %c0 = arith.constant 0 : index
    %c0_0 = arith.constant 0 : index
    %0 = vector.load %arg0[%c0, %c0_0] : memref<16x32xf32, #tpu.memory_space<vmem>>, vector<16x32xf32>
    %c0_1 = arith.constant 0 : index
    %c0_2 = arith.constant 0 : index
    %1 = vector.load %arg7[%c0_1, %c0_2] : memref<1x32xf32, #tpu.memory_space<vmem>>, vector<1x32xf32>
    %c0_3 = arith.constant 0 : index
    %c0_4 = arith.constant 0 : index
    %2 = vector.load %arg8[%c0_3, %c0_4] : memref<1x32xf32, #tpu.memory_space<vmem>>, vector<1x32xf32>
    %cst = arith.constant dense<0.000000e+00> : vector<16xf32>
    %3 = vector.multi_reduction <add>, %0, %cst [1] : vector<16x32xf32> to vector<16xf32>
    %4 = vector.shape_cast %3 : vector<16xf32> to vector<16x1xf32>
    %cst_5 = arith.constant 3.200000e+01 : f32
    %5 = vector.broadcast %cst_5 : f32 to vector<16x1xf32>
    %6 = arith.divf %4, %5 : vector<16x1xf32>
    %7 = vector.broadcast %6 : vector<16x1xf32> to vector<16x32xf32>
    %8 = arith.subf %0, %7 : vector<16x32xf32>
    %9 = arith.mulf %8, %8 : vector<16x32xf32>
    %cst_6 = arith.constant dense<0.000000e+00> : vector<16xf32>
    %10 = vector.multi_reduction <add>, %9, %cst_6 [1] : vector<16x32xf32> to vector<16xf32>
    %11 = vector.shape_cast %10 : vector<16xf32> to vector<16x1xf32>
    %cst_7 = arith.constant 3.200000e+01 : f32
    %12 = vector.broadcast %cst_7 : f32 to vector<16x1xf32>
    %13 = arith.divf %11, %12 : vector<16x1xf32>
    %cst_8 = arith.constant 9.99999996E-13 : f32
    %14 = vector.broadcast %cst_8 : f32 to vector<16x1xf32>
    %15 = arith.addf %13, %14 : vector<16x1xf32>
    %16 = math.rsqrt %15 : vector<16x1xf32>
    %17 = vector.broadcast %16 : vector<16x1xf32> to vector<16x32xf32>
    %18 = arith.mulf %8, %17 : vector<16x32xf32>
    %19 = vector.broadcast %1 : vector<1x32xf32> to vector<16x32xf32>
    %20 = arith.mulf %18, %19 : vector<16x32xf32>
    %21 = vector.broadcast %2 : vector<1x32xf32> to vector<16x32xf32>
    %22 = arith.addf %20, %21 : vector<16x32xf32>
    %c0_9 = arith.constant 0 : index
    %c0_10 = arith.constant 0 : index
    %23 = vector.load %arg1[%c0_9, %c0_10] : memref<16x16xf32, #tpu.memory_space<vmem>>, vector<16x16xf32>
    %c0_11 = arith.constant 0 : index
    %c0_12 = arith.constant 0 : index
    %c0_13 = arith.constant 0 : index
    %24 = vector.load %arg9[%c0_11, %c0_12, %c0_13] : memref<2x32x64xf32, #tpu.memory_space<vmem>>, vector<1x32x64xf32>
    %25 = vector.shape_cast %24 : vector<1x32x64xf32> to vector<32x64xf32>
    %cst_14 = arith.constant dense<0.000000e+00> : vector<16x64xf32>
    %26 = tpu.matmul %22, %25, %cst_14 {dimension_numbers = #tpu.dot_dimension_numbers<[1], [0], [0], [1], [0, 0, 1, 1], [], []>} : vector<16x32xf32>, vector<32x64xf32>, vector<16x64xf32> -> vector<16x64xf32>
    %c0_15 = arith.constant 0 : index
    %c0_16 = arith.constant 0 : index
    %c0_17 = arith.constant 0 : index
    %27 = vector.load %arg10[%c0_15, %c0_16, %c0_17] : memref<2x1x64xf32, #tpu.memory_space<vmem>>, vector<1x1x64xf32>
    %28 = vector.shape_cast %27 : vector<1x1x64xf32> to vector<1x64xf32>
    %29 = vector.broadcast %28 : vector<1x64xf32> to vector<16x64xf32>
    %30 = arith.addf %26, %29 : vector<16x64xf32>
    %c0_18 = arith.constant 0 : index
    %c0_19 = arith.constant 0 : index
    %c0_20 = arith.constant 0 : index
    %31 = vector.load %arg11[%c0_18, %c0_19, %c0_20] : memref<2x32x32xf32, #tpu.memory_space<vmem>>, vector<1x32x32xf32>
    %32 = vector.shape_cast %31 : vector<1x32x32xf32> to vector<32x32xf32>
    %cst_21 = arith.constant dense<0.000000e+00> : vector<32x16xf32>
    %33 = tpu.matmul %32, %22, %cst_21 {dimension_numbers = #tpu.dot_dimension_numbers<[1], [1], [0], [0], [0, 0, 1, 0], [], []>} : vector<32x32xf32>, vector<16x32xf32>, vector<32x16xf32> -> vector<32x16xf32>
    %c0_22 = arith.constant 0 : index
    %c0_23 = arith.constant 0 : index
    %c0_24 = arith.constant 0 : index
    %34 = vector.load %arg12[%c0_22, %c0_23, %c0_24] : memref<2x32x1xf32, #tpu.memory_space<vmem>>, vector<1x32x1xf32>
    %35 = vector.shape_cast %34 : vector<1x32x1xf32> to vector<32x1xf32>
    %36 = vector.broadcast %35 : vector<32x1xf32> to vector<32x16xf32>
    %37 = arith.addf %33, %36 : vector<32x16xf32>
    %38 = vector.extract_strided_slice %30 {offsets = [0, 0], sizes = [16, 16], strides = [1, 1]} : vector<16x64xf32> to vector<16x16xf32>
    %39 = vector.extract_strided_slice %30 {offsets = [0, 16], sizes = [16, 16], strides = [1, 1]} : vector<16x64xf32> to vector<16x16xf32>
    %40 = vector.shape_cast %38 : vector<16x16xf32> to vector<1x16x16xf32>
    %41 = vector.shape_cast %39 : vector<16x16xf32> to vector<1x16x16xf32>
    %42 = tpu.concatenate %40, %41 in 0 : vector<1x16x16xf32>, vector<1x16x16xf32> -> vector<2x16x16xf32>
    %43 = vector.extract_strided_slice %30 {offsets = [0, 32], sizes = [16, 16], strides = [1, 1]} : vector<16x64xf32> to vector<16x16xf32>
    %44 = vector.extract_strided_slice %30 {offsets = [0, 48], sizes = [16, 16], strides = [1, 1]} : vector<16x64xf32> to vector<16x16xf32>
    %45 = vector.shape_cast %43 : vector<16x16xf32> to vector<1x16x16xf32>
    %46 = vector.shape_cast %44 : vector<16x16xf32> to vector<1x16x16xf32>
    %47 = tpu.concatenate %45, %46 in 0 : vector<1x16x16xf32>, vector<1x16x16xf32> -> vector<2x16x16xf32>
    %48 = vector.extract_strided_slice %37 {offsets = [0, 0], sizes = [16, 16], strides = [1, 1]} : vector<32x16xf32> to vector<16x16xf32>
    %49 = vector.extract_strided_slice %37 {offsets = [16, 0], sizes = [16, 16], strides = [1, 1]} : vector<32x16xf32> to vector<16x16xf32>
    %50 = vector.shape_cast %48 : vector<16x16xf32> to vector<1x16x16xf32>
    %51 = vector.shape_cast %49 : vector<16x16xf32> to vector<1x16x16xf32>
    %52 = tpu.concatenate %50, %51 in 0 : vector<1x16x16xf32>, vector<1x16x16xf32> -> vector<2x16x16xf32>
    %cst_25 = arith.constant dense<0.000000e+00> : vector<2x16x16xf32>
    %53 = tpu.matmul %42, %52, %cst_25 {dimension_numbers = #tpu.dot_dimension_numbers<[2], [1], [1], [2], [0, 0, 0, 1, 1, 2], [0], [0]>} : vector<2x16x16xf32>, vector<2x16x16xf32>, vector<2x16x16xf32> -> vector<2x16x16xf32>
    %cst_26 = arith.constant 2.500000e-01 : f32
    %54 = vector.broadcast %cst_26 : f32 to vector<2x16x16xf32>
    %55 = arith.mulf %53, %54 : vector<2x16x16xf32>
    %56 = vector.shape_cast %23 : vector<16x16xf32> to vector<1x16x16xf32>
    %57 = vector.broadcast %56 : vector<1x16x16xf32> to vector<2x16x16xf32>
    %58 = arith.addf %55, %57 : vector<2x16x16xf32>
    %cst_27 = arith.constant dense<0xFF800000> : vector<2x16xf32>
    %59 = vector.multi_reduction <maximumf>, %58, %cst_27 [2] : vector<2x16x16xf32> to vector<2x16xf32>
    %60 = vector.shape_cast %59 : vector<2x16xf32> to vector<2x16x1xf32>
    %61 = vector.broadcast %60 : vector<2x16x1xf32> to vector<2x16x16xf32>
    %62 = arith.subf %58, %61 : vector<2x16x16xf32>
    %63 = math.exp %62 : vector<2x16x16xf32>
    %cst_28 = arith.constant dense<0.000000e+00> : vector<2x16xf32>
    %64 = vector.multi_reduction <add>, %63, %cst_28 [2] : vector<2x16x16xf32> to vector<2x16xf32>
    %65 = vector.shape_cast %64 : vector<2x16xf32> to vector<2x16x1xf32>
    %66 = vector.broadcast %65 : vector<2x16x1xf32> to vector<2x16x16xf32>
    %67 = arith.divf %63, %66 : vector<2x16x16xf32>
    %cst_29 = arith.constant dense<0.000000e+00> : vector<2x16x16xf32>
    %68 = tpu.matmul %67, %47, %cst_29 {dimension_numbers = #tpu.dot_dimension_numbers<[2], [1], [1], [2], [0, 0, 0, 1, 1, 2], [0], [0]>} : vector<2x16x16xf32>, vector<2x16x16xf32>, vector<2x16x16xf32> -> vector<2x16x16xf32>
    %c0_30 = arith.constant 0 : index
    %c0_31 = arith.constant 0 : index
    %c0_32 = arith.constant 0 : index
    %c0_33 = arith.constant 0 : index
    %69 = vector.load %arg13[%c0_30, %c0_31, %c0_32, %c0_33] : memref<2x2x16x32xf32, #tpu.memory_space<vmem>>, vector<1x2x16x32xf32>
    %70 = vector.shape_cast %69 : vector<1x2x16x32xf32> to vector<2x16x32xf32>
    %cst_34 = arith.constant dense<0.000000e+00> : vector<2x16x32xf32>
    %71 = tpu.matmul %68, %70, %cst_34 {dimension_numbers = #tpu.dot_dimension_numbers<[2], [1], [1], [2], [0, 0, 0, 1, 1, 2], [0], [0]>} : vector<2x16x16xf32>, vector<2x16x32xf32>, vector<2x16x32xf32> -> vector<2x16x32xf32>
    %cst_35 = arith.constant dense<0.000000e+00> : vector<16x32xf32>
    %72 = vector.multi_reduction <add>, %71, %cst_35 [0] : vector<2x16x32xf32> to vector<16x32xf32>
    %c0_36 = arith.constant 0 : index
    %c0_37 = arith.constant 0 : index
    %c0_38 = arith.constant 0 : index
    %73 = vector.load %arg14[%c0_36, %c0_37, %c0_38] : memref<2x1x32xf32, #tpu.memory_space<vmem>>, vector<1x1x32xf32>
    %74 = vector.shape_cast %73 : vector<1x1x32xf32> to vector<1x32xf32>
    %75 = vector.broadcast %74 : vector<1x32xf32> to vector<16x32xf32>
    %76 = arith.addf %72, %75 : vector<16x32xf32>
    %77 = arith.addf %76, %22 : vector<16x32xf32>
    %c0_39 = arith.constant 0 : index
    %c0_40 = arith.constant 0 : index
    %c0_41 = arith.constant 0 : index
    %78 = vector.load %arg15[%c0_39, %c0_40, %c0_41] : memref<2x1x32xf32, #tpu.memory_space<vmem>>, vector<1x1x32xf32>
    %79 = vector.shape_cast %78 : vector<1x1x32xf32> to vector<1x32xf32>
    %c0_42 = arith.constant 0 : index
    %c0_43 = arith.constant 0 : index
    %c0_44 = arith.constant 0 : index
    %80 = vector.load %arg16[%c0_42, %c0_43, %c0_44] : memref<2x1x32xf32, #tpu.memory_space<vmem>>, vector<1x1x32xf32>
    %81 = vector.shape_cast %80 : vector<1x1x32xf32> to vector<1x32xf32>
    %cst_45 = arith.constant dense<0.000000e+00> : vector<16xf32>
    %82 = vector.multi_reduction <add>, %77, %cst_45 [1] : vector<16x32xf32> to vector<16xf32>
    %83 = vector.shape_cast %82 : vector<16xf32> to vector<16x1xf32>
    %cst_46 = arith.constant 3.200000e+01 : f32
    %84 = vector.broadcast %cst_46 : f32 to vector<16x1xf32>
    %85 = arith.divf %83, %84 : vector<16x1xf32>
    %86 = vector.broadcast %85 : vector<16x1xf32> to vector<16x32xf32>
    %87 = arith.subf %77, %86 : vector<16x32xf32>
    %88 = arith.mulf %87, %87 : vector<16x32xf32>
    %cst_47 = arith.constant dense<0.000000e+00> : vector<16xf32>
    %89 = vector.multi_reduction <add>, %88, %cst_47 [1] : vector<16x32xf32> to vector<16xf32>
    %90 = vector.shape_cast %89 : vector<16xf32> to vector<16x1xf32>
    %cst_48 = arith.constant 3.200000e+01 : f32
    %91 = vector.broadcast %cst_48 : f32 to vector<16x1xf32>
    %92 = arith.divf %90, %91 : vector<16x1xf32>
    %cst_49 = arith.constant 9.99999996E-13 : f32
    %93 = vector.broadcast %cst_49 : f32 to vector<16x1xf32>
    %94 = arith.addf %92, %93 : vector<16x1xf32>
    %95 = math.rsqrt %94 : vector<16x1xf32>
    %96 = vector.broadcast %95 : vector<16x1xf32> to vector<16x32xf32>
    %97 = arith.mulf %87, %96 : vector<16x32xf32>
    %98 = vector.broadcast %79 : vector<1x32xf32> to vector<16x32xf32>
    %99 = arith.mulf %97, %98 : vector<16x32xf32>
    %100 = vector.broadcast %81 : vector<1x32xf32> to vector<16x32xf32>
    %101 = arith.addf %99, %100 : vector<16x32xf32>
    %c0_50 = arith.constant 0 : index
    %c0_51 = arith.constant 0 : index
    %c0_52 = arith.constant 0 : index
    %102 = vector.load %arg17[%c0_50, %c0_51, %c0_52] : memref<2x32x64xf32, #tpu.memory_space<vmem>>, vector<1x32x64xf32>
    %103 = vector.shape_cast %102 : vector<1x32x64xf32> to vector<32x64xf32>
    %cst_53 = arith.constant dense<0.000000e+00> : vector<16x64xf32>
    %104 = tpu.matmul %101, %103, %cst_53 {dimension_numbers = #tpu.dot_dimension_numbers<[1], [0], [0], [1], [0, 0, 1, 1], [], []>} : vector<16x32xf32>, vector<32x64xf32>, vector<16x64xf32> -> vector<16x64xf32>
    %c0_54 = arith.constant 0 : index
    %c0_55 = arith.constant 0 : index
    %c0_56 = arith.constant 0 : index
    %105 = vector.load %arg18[%c0_54, %c0_55, %c0_56] : memref<2x1x64xf32, #tpu.memory_space<vmem>>, vector<1x1x64xf32>
    %106 = vector.shape_cast %105 : vector<1x1x64xf32> to vector<1x64xf32>
    %107 = vector.broadcast %106 : vector<1x64xf32> to vector<16x64xf32>
    %108 = arith.addf %104, %107 : vector<16x64xf32>
    %cst_57 = arith.constant 5.000000e-01 : f32
    %109 = vector.broadcast %cst_57 : f32 to vector<16x64xf32>
    %110 = arith.mulf %109, %108 : vector<16x64xf32>
    %cst_58 = arith.constant 4.471500e-02 : f32
    %111 = vector.broadcast %cst_58 : f32 to vector<16x64xf32>
    %112 = arith.mulf %111, %108 : vector<16x64xf32>
    %113 = arith.mulf %112, %108 : vector<16x64xf32>
    %114 = arith.mulf %113, %108 : vector<16x64xf32>
    %115 = arith.addf %108, %114 : vector<16x64xf32>
    %cst_59 = arith.constant 0.797884583 : f32
    %116 = vector.broadcast %cst_59 : f32 to vector<16x64xf32>
    %117 = arith.mulf %116, %115 : vector<16x64xf32>
    %118 = math.tanh %117 : vector<16x64xf32>
    %cst_60 = arith.constant 1.000000e+00 : f32
    %119 = vector.broadcast %cst_60 : f32 to vector<16x64xf32>
    %120 = arith.addf %119, %118 : vector<16x64xf32>
    %121 = arith.mulf %110, %120 : vector<16x64xf32>
    %c0_61 = arith.constant 0 : index
    %c0_62 = arith.constant 0 : index
    %c0_63 = arith.constant 0 : index
    %122 = vector.load %arg19[%c0_61, %c0_62, %c0_63] : memref<2x64x32xf32, #tpu.memory_space<vmem>>, vector<1x64x32xf32>
    %123 = vector.shape_cast %122 : vector<1x64x32xf32> to vector<64x32xf32>
    %cst_64 = arith.constant dense<0.000000e+00> : vector<16x32xf32>
    %124 = tpu.matmul %121, %123, %cst_64 {dimension_numbers = #tpu.dot_dimension_numbers<[1], [0], [0], [1], [0, 0, 1, 1], [], []>} : vector<16x64xf32>, vector<64x32xf32>, vector<16x32xf32> -> vector<16x32xf32>
    %c0_65 = arith.constant 0 : index
    %c0_66 = arith.constant 0 : index
    %c0_67 = arith.constant 0 : index
    %125 = vector.load %arg20[%c0_65, %c0_66, %c0_67] : memref<2x1x32xf32, #tpu.memory_space<vmem>>, vector<1x1x32xf32>
    %126 = vector.shape_cast %125 : vector<1x1x32xf32> to vector<1x32xf32>
    %127 = vector.broadcast %126 : vector<1x32xf32> to vector<16x32xf32>
    %128 = arith.addf %124, %127 : vector<16x32xf32>
    %129 = arith.addf %128, %101 : vector<16x32xf32>
    %c0_68 = arith.constant 0 : index
    %c0_69 = arith.constant 0 : index
    %c0_70 = arith.constant 0 : index
    %130 = vector.load %arg21[%c0_68, %c0_69, %c0_70] : memref<2x1x32xf32, #tpu.memory_space<vmem>>, vector<1x1x32xf32>
    %131 = vector.shape_cast %130 : vector<1x1x32xf32> to vector<1x32xf32>
    %c0_71 = arith.constant 0 : index
    %c0_72 = arith.constant 0 : index
    %c0_73 = arith.constant 0 : index
    %132 = vector.load %arg22[%c0_71, %c0_72, %c0_73] : memref<2x1x32xf32, #tpu.memory_space<vmem>>, vector<1x1x32xf32>
    %133 = vector.shape_cast %132 : vector<1x1x32xf32> to vector<1x32xf32>
    %cst_74 = arith.constant dense<0.000000e+00> : vector<16xf32>
    %134 = vector.multi_reduction <add>, %129, %cst_74 [1] : vector<16x32xf32> to vector<16xf32>
    %135 = vector.shape_cast %134 : vector<16xf32> to vector<16x1xf32>
    %cst_75 = arith.constant 3.200000e+01 : f32
    %136 = vector.broadcast %cst_75 : f32 to vector<16x1xf32>
    %137 = arith.divf %135, %136 : vector<16x1xf32>
    %138 = vector.broadcast %137 : vector<16x1xf32> to vector<16x32xf32>
    %139 = arith.subf %129, %138 : vector<16x32xf32>
    %140 = arith.mulf %139, %139 : vector<16x32xf32>
    %cst_76 = arith.constant dense<0.000000e+00> : vector<16xf32>
    %141 = vector.multi_reduction <add>, %140, %cst_76 [1] : vector<16x32xf32> to vector<16xf32>
    %142 = vector.shape_cast %141 : vector<16xf32> to vector<16x1xf32>
    %cst_77 = arith.constant 3.200000e+01 : f32
    %143 = vector.broadcast %cst_77 : f32 to vector<16x1xf32>
    %144 = arith.divf %142, %143 : vector<16x1xf32>
    %cst_78 = arith.constant 9.99999996E-13 : f32
    %145 = vector.broadcast %cst_78 : f32 to vector<16x1xf32>
    %146 = arith.addf %144, %145 : vector<16x1xf32>
    %147 = math.rsqrt %146 : vector<16x1xf32>
    %148 = vector.broadcast %147 : vector<16x1xf32> to vector<16x32xf32>
    %149 = arith.mulf %139, %148 : vector<16x32xf32>
    %150 = vector.broadcast %131 : vector<1x32xf32> to vector<16x32xf32>
    %151 = arith.mulf %149, %150 : vector<16x32xf32>
    %152 = vector.broadcast %133 : vector<1x32xf32> to vector<16x32xf32>
    %153 = arith.addf %151, %152 : vector<16x32xf32>
    %c1 = arith.constant 1 : index
    %c0_79 = arith.constant 0 : index
    %c0_80 = arith.constant 0 : index
    %154 = vector.load %arg9[%c1, %c0_79, %c0_80] : memref<2x32x64xf32, #tpu.memory_space<vmem>>, vector<1x32x64xf32>
    %155 = vector.shape_cast %154 : vector<1x32x64xf32> to vector<32x64xf32>
    %cst_81 = arith.constant dense<0.000000e+00> : vector<16x64xf32>
    %156 = tpu.matmul %153, %155, %cst_81 {dimension_numbers = #tpu.dot_dimension_numbers<[1], [0], [0], [1], [0, 0, 1, 1], [], []>} : vector<16x32xf32>, vector<32x64xf32>, vector<16x64xf32> -> vector<16x64xf32>
    %c1_82 = arith.constant 1 : index
    %c0_83 = arith.constant 0 : index
    %c0_84 = arith.constant 0 : index
    %157 = vector.load %arg10[%c1_82, %c0_83, %c0_84] : memref<2x1x64xf32, #tpu.memory_space<vmem>>, vector<1x1x64xf32>
    %158 = vector.shape_cast %157 : vector<1x1x64xf32> to vector<1x64xf32>
    %159 = vector.broadcast %158 : vector<1x64xf32> to vector<16x64xf32>
    %160 = arith.addf %156, %159 : vector<16x64xf32>
    %c1_85 = arith.constant 1 : index
    %c0_86 = arith.constant 0 : index
    %c0_87 = arith.constant 0 : index
    %161 = vector.load %arg11[%c1_85, %c0_86, %c0_87] : memref<2x32x32xf32, #tpu.memory_space<vmem>>, vector<1x32x32xf32>
    %162 = vector.shape_cast %161 : vector<1x32x32xf32> to vector<32x32xf32>
    %cst_88 = arith.constant dense<0.000000e+00> : vector<32x16xf32>
    %163 = tpu.matmul %162, %153, %cst_88 {dimension_numbers = #tpu.dot_dimension_numbers<[1], [1], [0], [0], [0, 0, 1, 0], [], []>} : vector<32x32xf32>, vector<16x32xf32>, vector<32x16xf32> -> vector<32x16xf32>
    %c1_89 = arith.constant 1 : index
    %c0_90 = arith.constant 0 : index
    %c0_91 = arith.constant 0 : index
    %164 = vector.load %arg12[%c1_89, %c0_90, %c0_91] : memref<2x32x1xf32, #tpu.memory_space<vmem>>, vector<1x32x1xf32>
    %165 = vector.shape_cast %164 : vector<1x32x1xf32> to vector<32x1xf32>
    %166 = vector.broadcast %165 : vector<32x1xf32> to vector<32x16xf32>
    %167 = arith.addf %163, %166 : vector<32x16xf32>
    %168 = vector.extract_strided_slice %160 {offsets = [0, 0], sizes = [16, 16], strides = [1, 1]} : vector<16x64xf32> to vector<16x16xf32>
    %169 = vector.extract_strided_slice %160 {offsets = [0, 16], sizes = [16, 16], strides = [1, 1]} : vector<16x64xf32> to vector<16x16xf32>
    %170 = vector.shape_cast %168 : vector<16x16xf32> to vector<1x16x16xf32>
    %171 = vector.shape_cast %169 : vector<16x16xf32> to vector<1x16x16xf32>
    %172 = tpu.concatenate %170, %171 in 0 : vector<1x16x16xf32>, vector<1x16x16xf32> -> vector<2x16x16xf32>
    %173 = vector.extract_strided_slice %160 {offsets = [0, 32], sizes = [16, 16], strides = [1, 1]} : vector<16x64xf32> to vector<16x16xf32>
    %174 = vector.extract_strided_slice %160 {offsets = [0, 48], sizes = [16, 16], strides = [1, 1]} : vector<16x64xf32> to vector<16x16xf32>
    %175 = vector.shape_cast %173 : vector<16x16xf32> to vector<1x16x16xf32>
    %176 = vector.shape_cast %174 : vector<16x16xf32> to vector<1x16x16xf32>
    %177 = tpu.concatenate %175, %176 in 0 : vector<1x16x16xf32>, vector<1x16x16xf32> -> vector<2x16x16xf32>
    %178 = vector.extract_strided_slice %167 {offsets = [0, 0], sizes = [16, 16], strides = [1, 1]} : vector<32x16xf32> to vector<16x16xf32>
    %179 = vector.extract_strided_slice %167 {offsets = [16, 0], sizes = [16, 16], strides = [1, 1]} : vector<32x16xf32> to vector<16x16xf32>
    %180 = vector.shape_cast %178 : vector<16x16xf32> to vector<1x16x16xf32>
    %181 = vector.shape_cast %179 : vector<16x16xf32> to vector<1x16x16xf32>
    %182 = tpu.concatenate %180, %181 in 0 : vector<1x16x16xf32>, vector<1x16x16xf32> -> vector<2x16x16xf32>
    %cst_92 = arith.constant dense<0.000000e+00> : vector<2x16x16xf32>
    %183 = tpu.matmul %172, %182, %cst_92 {dimension_numbers = #tpu.dot_dimension_numbers<[2], [1], [1], [2], [0, 0, 0, 1, 1, 2], [0], [0]>} : vector<2x16x16xf32>, vector<2x16x16xf32>, vector<2x16x16xf32> -> vector<2x16x16xf32>
    %cst_93 = arith.constant 2.500000e-01 : f32
    %184 = vector.broadcast %cst_93 : f32 to vector<2x16x16xf32>
    %185 = arith.mulf %183, %184 : vector<2x16x16xf32>
    %186 = vector.shape_cast %23 : vector<16x16xf32> to vector<1x16x16xf32>
    %187 = vector.broadcast %186 : vector<1x16x16xf32> to vector<2x16x16xf32>
    %188 = arith.addf %185, %187 : vector<2x16x16xf32>
    %cst_94 = arith.constant dense<0xFF800000> : vector<2x16xf32>
    %189 = vector.multi_reduction <maximumf>, %188, %cst_94 [2] : vector<2x16x16xf32> to vector<2x16xf32>
    %190 = vector.shape_cast %189 : vector<2x16xf32> to vector<2x16x1xf32>
    %191 = vector.broadcast %190 : vector<2x16x1xf32> to vector<2x16x16xf32>
    %192 = arith.subf %188, %191 : vector<2x16x16xf32>
    %193 = math.exp %192 : vector<2x16x16xf32>
    %cst_95 = arith.constant dense<0.000000e+00> : vector<2x16xf32>
    %194 = vector.multi_reduction <add>, %193, %cst_95 [2] : vector<2x16x16xf32> to vector<2x16xf32>
    %195 = vector.shape_cast %194 : vector<2x16xf32> to vector<2x16x1xf32>
    %196 = vector.broadcast %195 : vector<2x16x1xf32> to vector<2x16x16xf32>
    %197 = arith.divf %193, %196 : vector<2x16x16xf32>
    %cst_96 = arith.constant dense<0.000000e+00> : vector<2x16x16xf32>
    %198 = tpu.matmul %197, %177, %cst_96 {dimension_numbers = #tpu.dot_dimension_numbers<[2], [1], [1], [2], [0, 0, 0, 1, 1, 2], [0], [0]>} : vector<2x16x16xf32>, vector<2x16x16xf32>, vector<2x16x16xf32> -> vector<2x16x16xf32>
    %c1_97 = arith.constant 1 : index
    %c0_98 = arith.constant 0 : index
    %c0_99 = arith.constant 0 : index
    %c0_100 = arith.constant 0 : index
    %199 = vector.load %arg13[%c1_97, %c0_98, %c0_99, %c0_100] : memref<2x2x16x32xf32, #tpu.memory_space<vmem>>, vector<1x2x16x32xf32>
    %200 = vector.shape_cast %199 : vector<1x2x16x32xf32> to vector<2x16x32xf32>
    %cst_101 = arith.constant dense<0.000000e+00> : vector<2x16x32xf32>
    %201 = tpu.matmul %198, %200, %cst_101 {dimension_numbers = #tpu.dot_dimension_numbers<[2], [1], [1], [2], [0, 0, 0, 1, 1, 2], [0], [0]>} : vector<2x16x16xf32>, vector<2x16x32xf32>, vector<2x16x32xf32> -> vector<2x16x32xf32>
    %cst_102 = arith.constant dense<0.000000e+00> : vector<16x32xf32>
    %202 = vector.multi_reduction <add>, %201, %cst_102 [0] : vector<2x16x32xf32> to vector<16x32xf32>
    %c1_103 = arith.constant 1 : index
    %c0_104 = arith.constant 0 : index
    %c0_105 = arith.constant 0 : index
    %203 = vector.load %arg14[%c1_103, %c0_104, %c0_105] : memref<2x1x32xf32, #tpu.memory_space<vmem>>, vector<1x1x32xf32>
    %204 = vector.shape_cast %203 : vector<1x1x32xf32> to vector<1x32xf32>
    %205 = vector.broadcast %204 : vector<1x32xf32> to vector<16x32xf32>
    %206 = arith.addf %202, %205 : vector<16x32xf32>
    %207 = arith.addf %206, %153 : vector<16x32xf32>
    %c1_106 = arith.constant 1 : index
    %c0_107 = arith.constant 0 : index
    %c0_108 = arith.constant 0 : index
    %208 = vector.load %arg15[%c1_106, %c0_107, %c0_108] : memref<2x1x32xf32, #tpu.memory_space<vmem>>, vector<1x1x32xf32>
    %209 = vector.shape_cast %208 : vector<1x1x32xf32> to vector<1x32xf32>
    %c1_109 = arith.constant 1 : index
    %c0_110 = arith.constant 0 : index
    %c0_111 = arith.constant 0 : index
    %210 = vector.load %arg16[%c1_109, %c0_110, %c0_111] : memref<2x1x32xf32, #tpu.memory_space<vmem>>, vector<1x1x32xf32>
    %211 = vector.shape_cast %210 : vector<1x1x32xf32> to vector<1x32xf32>
    %cst_112 = arith.constant dense<0.000000e+00> : vector<16xf32>
    %212 = vector.multi_reduction <add>, %207, %cst_112 [1] : vector<16x32xf32> to vector<16xf32>
    %213 = vector.shape_cast %212 : vector<16xf32> to vector<16x1xf32>
    %cst_113 = arith.constant 3.200000e+01 : f32
    %214 = vector.broadcast %cst_113 : f32 to vector<16x1xf32>
    %215 = arith.divf %213, %214 : vector<16x1xf32>
    %216 = vector.broadcast %215 : vector<16x1xf32> to vector<16x32xf32>
    %217 = arith.subf %207, %216 : vector<16x32xf32>
    %218 = arith.mulf %217, %217 : vector<16x32xf32>
    %cst_114 = arith.constant dense<0.000000e+00> : vector<16xf32>
    %219 = vector.multi_reduction <add>, %218, %cst_114 [1] : vector<16x32xf32> to vector<16xf32>
    %220 = vector.shape_cast %219 : vector<16xf32> to vector<16x1xf32>
    %cst_115 = arith.constant 3.200000e+01 : f32
    %221 = vector.broadcast %cst_115 : f32 to vector<16x1xf32>
    %222 = arith.divf %220, %221 : vector<16x1xf32>
    %cst_116 = arith.constant 9.99999996E-13 : f32
    %223 = vector.broadcast %cst_116 : f32 to vector<16x1xf32>
    %224 = arith.addf %222, %223 : vector<16x1xf32>
    %225 = math.rsqrt %224 : vector<16x1xf32>
    %226 = vector.broadcast %225 : vector<16x1xf32> to vector<16x32xf32>
    %227 = arith.mulf %217, %226 : vector<16x32xf32>
    %228 = vector.broadcast %209 : vector<1x32xf32> to vector<16x32xf32>
    %229 = arith.mulf %227, %228 : vector<16x32xf32>
    %230 = vector.broadcast %211 : vector<1x32xf32> to vector<16x32xf32>
    %231 = arith.addf %229, %230 : vector<16x32xf32>
    %c1_117 = arith.constant 1 : index
    %c0_118 = arith.constant 0 : index
    %c0_119 = arith.constant 0 : index
    %232 = vector.load %arg17[%c1_117, %c0_118, %c0_119] : memref<2x32x64xf32, #tpu.memory_space<vmem>>, vector<1x32x64xf32>
    %233 = vector.shape_cast %232 : vector<1x32x64xf32> to vector<32x64xf32>
    %cst_120 = arith.constant dense<0.000000e+00> : vector<16x64xf32>
    %234 = tpu.matmul %231, %233, %cst_120 {dimension_numbers = #tpu.dot_dimension_numbers<[1], [0], [0], [1], [0, 0, 1, 1], [], []>} : vector<16x32xf32>, vector<32x64xf32>, vector<16x64xf32> -> vector<16x64xf32>
    %c1_121 = arith.constant 1 : index
    %c0_122 = arith.constant 0 : index
    %c0_123 = arith.constant 0 : index
    %235 = vector.load %arg18[%c1_121, %c0_122, %c0_123] : memref<2x1x64xf32, #tpu.memory_space<vmem>>, vector<1x1x64xf32>
    %236 = vector.shape_cast %235 : vector<1x1x64xf32> to vector<1x64xf32>
    %237 = vector.broadcast %236 : vector<1x64xf32> to vector<16x64xf32>
    %238 = arith.addf %234, %237 : vector<16x64xf32>
    %cst_124 = arith.constant 5.000000e-01 : f32
    %239 = vector.broadcast %cst_124 : f32 to vector<16x64xf32>
    %240 = arith.mulf %239, %238 : vector<16x64xf32>
    %cst_125 = arith.constant 4.471500e-02 : f32
    %241 = vector.broadcast %cst_125 : f32 to vector<16x64xf32>
    %242 = arith.mulf %241, %238 : vector<16x64xf32>
    %243 = arith.mulf %242, %238 : vector<16x64xf32>
    %244 = arith.mulf %243, %238 : vector<16x64xf32>
    %245 = arith.addf %238, %244 : vector<16x64xf32>
    %cst_126 = arith.constant 0.797884583 : f32
    %246 = vector.broadcast %cst_126 : f32 to vector<16x64xf32>
    %247 = arith.mulf %246, %245 : vector<16x64xf32>
    %248 = math.tanh %247 : vector<16x64xf32>
    %cst_127 = arith.constant 1.000000e+00 : f32
    %249 = vector.broadcast %cst_127 : f32 to vector<16x64xf32>
    %250 = arith.addf %249, %248 : vector<16x64xf32>
    %251 = arith.mulf %240, %250 : vector<16x64xf32>
    %c1_128 = arith.constant 1 : index
    %c0_129 = arith.constant 0 : index
    %c0_130 = arith.constant 0 : index
    %252 = vector.load %arg19[%c1_128, %c0_129, %c0_130] : memref<2x64x32xf32, #tpu.memory_space<vmem>>, vector<1x64x32xf32>
    %253 = vector.shape_cast %252 : vector<1x64x32xf32> to vector<64x32xf32>
    %cst_131 = arith.constant dense<0.000000e+00> : vector<16x32xf32>
    %254 = tpu.matmul %251, %253, %cst_131 {dimension_numbers = #tpu.dot_dimension_numbers<[1], [0], [0], [1], [0, 0, 1, 1], [], []>} : vector<16x64xf32>, vector<64x32xf32>, vector<16x32xf32> -> vector<16x32xf32>
    %c1_132 = arith.constant 1 : index
    %c0_133 = arith.constant 0 : index
    %c0_134 = arith.constant 0 : index
    %255 = vector.load %arg20[%c1_132, %c0_133, %c0_134] : memref<2x1x32xf32, #tpu.memory_space<vmem>>, vector<1x1x32xf32>
    %256 = vector.shape_cast %255 : vector<1x1x32xf32> to vector<1x32xf32>
    %257 = vector.broadcast %256 : vector<1x32xf32> to vector<16x32xf32>
    %258 = arith.addf %254, %257 : vector<16x32xf32>
    %259 = arith.addf %258, %231 : vector<16x32xf32>
    %c1_135 = arith.constant 1 : index
    %c0_136 = arith.constant 0 : index
    %c0_137 = arith.constant 0 : index
    %260 = vector.load %arg21[%c1_135, %c0_136, %c0_137] : memref<2x1x32xf32, #tpu.memory_space<vmem>>, vector<1x1x32xf32>
    %261 = vector.shape_cast %260 : vector<1x1x32xf32> to vector<1x32xf32>
    %c1_138 = arith.constant 1 : index
    %c0_139 = arith.constant 0 : index
    %c0_140 = arith.constant 0 : index
    %262 = vector.load %arg22[%c1_138, %c0_139, %c0_140] : memref<2x1x32xf32, #tpu.memory_space<vmem>>, vector<1x1x32xf32>
    %263 = vector.shape_cast %262 : vector<1x1x32xf32> to vector<1x32xf32>
    %cst_141 = arith.constant dense<0.000000e+00> : vector<16xf32>
    %264 = vector.multi_reduction <add>, %259, %cst_141 [1] : vector<16x32xf32> to vector<16xf32>
    %265 = vector.shape_cast %264 : vector<16xf32> to vector<16x1xf32>
    %cst_142 = arith.constant 3.200000e+01 : f32
    %266 = vector.broadcast %cst_142 : f32 to vector<16x1xf32>
    %267 = arith.divf %265, %266 : vector<16x1xf32>
    %268 = vector.broadcast %267 : vector<16x1xf32> to vector<16x32xf32>
    %269 = arith.subf %259, %268 : vector<16x32xf32>
    %270 = arith.mulf %269, %269 : vector<16x32xf32>
    %cst_143 = arith.constant dense<0.000000e+00> : vector<16xf32>
    %271 = vector.multi_reduction <add>, %270, %cst_143 [1] : vector<16x32xf32> to vector<16xf32>
    %272 = vector.shape_cast %271 : vector<16xf32> to vector<16x1xf32>
    %cst_144 = arith.constant 3.200000e+01 : f32
    %273 = vector.broadcast %cst_144 : f32 to vector<16x1xf32>
    %274 = arith.divf %272, %273 : vector<16x1xf32>
    %cst_145 = arith.constant 9.99999996E-13 : f32
    %275 = vector.broadcast %cst_145 : f32 to vector<16x1xf32>
    %276 = arith.addf %274, %275 : vector<16x1xf32>
    %277 = math.rsqrt %276 : vector<16x1xf32>
    %278 = vector.broadcast %277 : vector<16x1xf32> to vector<16x32xf32>
    %279 = arith.mulf %269, %278 : vector<16x32xf32>
    %280 = vector.broadcast %261 : vector<1x32xf32> to vector<16x32xf32>
    %281 = arith.mulf %279, %280 : vector<16x32xf32>
    %282 = vector.broadcast %263 : vector<1x32xf32> to vector<16x32xf32>
    %283 = arith.addf %281, %282 : vector<16x32xf32>
    %c0_146 = arith.constant 0 : index
    %c0_147 = arith.constant 0 : index
    %284 = vector.load %arg23[%c0_146, %c0_147] : memref<32x5xf32, #tpu.memory_space<vmem>>, vector<32x5xf32>
    %cst_148 = arith.constant dense<0.000000e+00> : vector<16x5xf32>
    %285 = tpu.matmul %283, %284, %cst_148 {dimension_numbers = #tpu.dot_dimension_numbers<[1], [0], [0], [1], [0, 0, 1, 1], [], []>} : vector<16x32xf32>, vector<32x5xf32>, vector<16x5xf32> -> vector<16x5xf32>
    %c0_149 = arith.constant 0 : index
    %c0_150 = arith.constant 0 : index
    %286 = vector.load %arg24[%c0_149, %c0_150] : memref<1x5xf32, #tpu.memory_space<vmem>>, vector<1x5xf32>
    %287 = vector.broadcast %286 : vector<1x5xf32> to vector<16x5xf32>
    %288 = arith.addf %285, %287 : vector<16x5xf32>
    %c0_151 = arith.constant 0 : index
    %c0_152 = arith.constant 0 : index
    %289 = vector.load %arg28[%c0_151, %c0_152] : memref<16x5xf32, #tpu.memory_space<vmem>>, vector<16x5xf32>
    tpu.vector_store %arg28[%c0_151, %c0_152], %288 {strides = array<i32>} : memref<16x5xf32, #tpu.memory_space<vmem>>, vector<16x5xf32>,
    %c0_153 = arith.constant 0 : index
    %c0_154 = arith.constant 0 : index
    %290 = vector.load %arg25[%c0_153, %c0_154] : memref<5x5xf32, #tpu.memory_space<vmem>>, vector<5x5xf32>
    %c0_155 = arith.constant 0 : index
    %c0_156 = arith.constant 0 : index
    %291 = vector.load %arg26[%c0_155, %c0_156] : memref<1x5xf32, #tpu.memory_space<vmem>>, vector<1x5xf32>
    %c0_157 = arith.constant 0 : index
    %c0_158 = arith.constant 0 : index
    %292 = vector.load %arg27[%c0_157, %c0_158] : memref<1x5xf32, #tpu.memory_space<vmem>>, vector<1x5xf32>
    %293 = tpu.iota {dimensions = array<i32: 1>} : vector<2x5xi32>
    %294 = vector.extract_strided_slice %288 {offsets = [0, 0], sizes = [2, 5], strides = [1, 1]} : vector<16x5xf32> to vector<2x5xf32>
    %c0_159 = arith.constant 0 : index
    %c0_160 = arith.constant 0 : index
    %295 = vector.load %arg3[%c0_159, %c0_160] : memref<16x1xi32, #tpu.memory_space<vmem>>, vector<2x1xi32>
    %296 = vector.broadcast %295 : vector<2x1xi32> to vector<2x5xi32>
    %297 = arith.cmpi eq, %293, %296 : vector<2x5xi32>
    %298 = arith.extui %297 : vector<2x5xi1> to vector<2x5xi32>
    %299 = arith.sitofp %298 : vector<2x5xi32> to vector<2x5xf32>
    %300 = vector.broadcast %291 : vector<1x5xf32> to vector<2x5xf32>
    %301 = arith.addf %300, %294 : vector<2x5xf32>
    %302 = arith.mulf %301, %299 : vector<2x5xf32>
    %303 = vector.extract_strided_slice %288 {offsets = [2, 0], sizes = [2, 5], strides = [1, 1]} : vector<16x5xf32> to vector<2x5xf32>
    %c2 = arith.constant 2 : index
    %c0_161 = arith.constant 0 : index
    %304 = vector.load %arg2[%c2, %c0_161] : memref<16x1xf32, #tpu.memory_space<vmem>>, vector<2x1xf32>
    %c2_162 = arith.constant 2 : index
    %c0_163 = arith.constant 0 : index
    %305 = vector.load %arg3[%c2_162, %c0_163] : memref<16x1xi32, #tpu.memory_space<vmem>>, vector<2x1xi32>
    %306 = vector.broadcast %305 : vector<2x1xi32> to vector<2x5xi32>
    %307 = arith.cmpi eq, %293, %306 : vector<2x5xi32>
    %308 = arith.extui %307 : vector<2x5xi1> to vector<2x5xi32>
    %309 = arith.sitofp %308 : vector<2x5xi32> to vector<2x5xf32>
    %310 = arith.mulf %303, %309 : vector<2x5xf32>
    %311 = vector.broadcast %304 : vector<2x1xf32> to vector<2x5xf32>
    %312 = arith.mulf %310, %311 : vector<2x5xf32>
    %313 = arith.addf %302, %312 : vector<2x5xf32>
    %cst_164 = arith.constant 0.000000e+00 : f32
    %314 = vector.broadcast %cst_164 : f32 to vector<2x1xf32>
    %315 = arith.cmpf ogt, %304, %314 : vector<2x1xf32>
    %316 = vector.shape_cast %315 : vector<2x1xi1> to vector<2x1xi1>
    %317 = vector.broadcast %316 : vector<2x1xi1> to vector<2x5xi1>
    %318 = arith.select %317, %309, %299 : vector<2x5xi1>, vector<2x5xf32>
    %319 = vector.shape_cast %301 : vector<2x5xf32> to vector<2x1x5xf32>
    %320 = vector.shape_cast %290 : vector<5x5xf32> to vector<1x5x5xf32>
    %321 = vector.broadcast %319 : vector<2x1x5xf32> to vector<2x5x5xf32>
    %322 = vector.broadcast %320 : vector<1x5x5xf32> to vector<2x5x5xf32>
    %323 = arith.addf %321, %322 : vector<2x5x5xf32>
    %cst_165 = arith.constant dense<0xFF800000> : vector<2x5xf32>
    %324 = vector.multi_reduction <maximumf>, %323, %cst_165 [2] : vector<2x5x5xf32> to vector<2x5xf32>
    %325 = vector.shape_cast %324 : vector<2x5xf32> to vector<2x5x1xf32>
    %326 = vector.broadcast %325 : vector<2x5x1xf32> to vector<2x5x5xf32>
    %327 = arith.subf %323, %326 : vector<2x5x5xf32>
    %328 = math.exp %327 : vector<2x5x5xf32>
    %cst_166 = arith.constant dense<0.000000e+00> : vector<2x5xf32>
    %329 = vector.multi_reduction <add>, %328, %cst_166 [2] : vector<2x5x5xf32> to vector<2x5xf32>
    %330 = math.log %329 : vector<2x5xf32>
    %331 = arith.addf %324, %330 : vector<2x5xf32>
    %332 = arith.addf %331, %303 : vector<2x5xf32>
    %cst_167 = arith.constant 0.000000e+00 : f32
    %333 = vector.broadcast %cst_167 : f32 to vector<2x1xf32>
    %334 = arith.cmpf ogt, %304, %333 : vector<2x1xf32>
    %335 = vector.shape_cast %334 : vector<2x1xi1> to vector<2x1xi1>
    %336 = vector.broadcast %335 : vector<2x1xi1> to vector<2x5xi1>
    %337 = arith.select %336, %332, %301 : vector<2x5xi1>, vector<2x5xf32>
    %338 = vector.extract_strided_slice %288 {offsets = [4, 0], sizes = [2, 5], strides = [1, 1]} : vector<16x5xf32> to vector<2x5xf32>
    %c4 = arith.constant 4 : index
    %c0_168 = arith.constant 0 : index
    %339 = vector.load %arg2[%c4, %c0_168] : memref<16x1xf32, #tpu.memory_space<vmem>>, vector<2x1xf32>
    %c4_169 = arith.constant 4 : index
    %c0_170 = arith.constant 0 : index
    %340 = vector.load %arg3[%c4_169, %c0_170] : memref<16x1xi32, #tpu.memory_space<vmem>>, vector<2x1xi32>
    %341 = vector.broadcast %340 : vector<2x1xi32> to vector<2x5xi32>
    %342 = arith.cmpi eq, %293, %341 : vector<2x5xi32>
    %343 = arith.extui %342 : vector<2x5xi1> to vector<2x5xi32>
    %344 = arith.sitofp %343 : vector<2x5xi32> to vector<2x5xf32>
    %345 = arith.mulf %338, %344 : vector<2x5xf32>
    %346 = vector.broadcast %339 : vector<2x1xf32> to vector<2x5xf32>
    %347 = arith.mulf %345, %346 : vector<2x5xf32>
    %348 = arith.addf %313, %347 : vector<2x5xf32>
    %cst_171 = arith.constant 0.000000e+00 : f32
    %349 = vector.broadcast %cst_171 : f32 to vector<2x1xf32>
    %350 = arith.cmpf ogt, %339, %349 : vector<2x1xf32>
    %351 = vector.shape_cast %350 : vector<2x1xi1> to vector<2x1xi1>
    %352 = vector.broadcast %351 : vector<2x1xi1> to vector<2x5xi1>
    %353 = arith.select %352, %344, %318 : vector<2x5xi1>, vector<2x5xf32>
    %354 = vector.shape_cast %337 : vector<2x5xf32> to vector<2x1x5xf32>
    %355 = vector.shape_cast %290 : vector<5x5xf32> to vector<1x5x5xf32>
    %356 = vector.broadcast %354 : vector<2x1x5xf32> to vector<2x5x5xf32>
    %357 = vector.broadcast %355 : vector<1x5x5xf32> to vector<2x5x5xf32>
    %358 = arith.addf %356, %357 : vector<2x5x5xf32>
    %cst_172 = arith.constant dense<0xFF800000> : vector<2x5xf32>
    %359 = vector.multi_reduction <maximumf>, %358, %cst_172 [2] : vector<2x5x5xf32> to vector<2x5xf32>
    %360 = vector.shape_cast %359 : vector<2x5xf32> to vector<2x5x1xf32>
    %361 = vector.broadcast %360 : vector<2x5x1xf32> to vector<2x5x5xf32>
    %362 = arith.subf %358, %361 : vector<2x5x5xf32>
    %363 = math.exp %362 : vector<2x5x5xf32>
    %cst_173 = arith.constant dense<0.000000e+00> : vector<2x5xf32>
    %364 = vector.multi_reduction <add>, %363, %cst_173 [2] : vector<2x5x5xf32> to vector<2x5xf32>
    %365 = math.log %364 : vector<2x5xf32>
    %366 = arith.addf %359, %365 : vector<2x5xf32>
    %367 = arith.addf %366, %338 : vector<2x5xf32>
    %cst_174 = arith.constant 0.000000e+00 : f32
    %368 = vector.broadcast %cst_174 : f32 to vector<2x1xf32>
    %369 = arith.cmpf ogt, %339, %368 : vector<2x1xf32>
    %370 = vector.shape_cast %369 : vector<2x1xi1> to vector<2x1xi1>
    %371 = vector.broadcast %370 : vector<2x1xi1> to vector<2x5xi1>
    %372 = arith.select %371, %367, %337 : vector<2x5xi1>, vector<2x5xf32>
    %373 = vector.extract_strided_slice %288 {offsets = [6, 0], sizes = [2, 5], strides = [1, 1]} : vector<16x5xf32> to vector<2x5xf32>
    %c6 = arith.constant 6 : index
    %c0_175 = arith.constant 0 : index
    %374 = vector.load %arg2[%c6, %c0_175] : memref<16x1xf32, #tpu.memory_space<vmem>>, vector<2x1xf32>
    %c6_176 = arith.constant 6 : index
    %c0_177 = arith.constant 0 : index
    %375 = vector.load %arg3[%c6_176, %c0_177] : memref<16x1xi32, #tpu.memory_space<vmem>>, vector<2x1xi32>
    %376 = vector.broadcast %375 : vector<2x1xi32> to vector<2x5xi32>
    %377 = arith.cmpi eq, %293, %376 : vector<2x5xi32>
    %378 = arith.extui %377 : vector<2x5xi1> to vector<2x5xi32>
    %379 = arith.sitofp %378 : vector<2x5xi32> to vector<2x5xf32>
    %380 = arith.mulf %373, %379 : vector<2x5xf32>
    %381 = vector.broadcast %374 : vector<2x1xf32> to vector<2x5xf32>
    %382 = arith.mulf %380, %381 : vector<2x5xf32>
    %383 = arith.addf %348, %382 : vector<2x5xf32>
    %cst_178 = arith.constant 0.000000e+00 : f32
    %384 = vector.broadcast %cst_178 : f32 to vector<2x1xf32>
    %385 = arith.cmpf ogt, %374, %384 : vector<2x1xf32>
    %386 = vector.shape_cast %385 : vector<2x1xi1> to vector<2x1xi1>
    %387 = vector.broadcast %386 : vector<2x1xi1> to vector<2x5xi1>
    %388 = arith.select %387, %379, %353 : vector<2x5xi1>, vector<2x5xf32>
    %389 = vector.shape_cast %372 : vector<2x5xf32> to vector<2x1x5xf32>
    %390 = vector.shape_cast %290 : vector<5x5xf32> to vector<1x5x5xf32>
    %391 = vector.broadcast %389 : vector<2x1x5xf32> to vector<2x5x5xf32>
    %392 = vector.broadcast %390 : vector<1x5x5xf32> to vector<2x5x5xf32>
    %393 = arith.addf %391, %392 : vector<2x5x5xf32>
    %cst_179 = arith.constant dense<0xFF800000> : vector<2x5xf32>
    %394 = vector.multi_reduction <maximumf>, %393, %cst_179 [2] : vector<2x5x5xf32> to vector<2x5xf32>
    %395 = vector.shape_cast %394 : vector<2x5xf32> to vector<2x5x1xf32>
    %396 = vector.broadcast %395 : vector<2x5x1xf32> to vector<2x5x5xf32>
    %397 = arith.subf %393, %396 : vector<2x5x5xf32>
    %398 = math.exp %397 : vector<2x5x5xf32>
    %cst_180 = arith.constant dense<0.000000e+00> : vector<2x5xf32>
    %399 = vector.multi_reduction <add>, %398, %cst_180 [2] : vector<2x5x5xf32> to vector<2x5xf32>
    %400 = math.log %399 : vector<2x5xf32>
    %401 = arith.addf %394, %400 : vector<2x5xf32>
    %402 = arith.addf %401, %373 : vector<2x5xf32>
    %cst_181 = arith.constant 0.000000e+00 : f32
    %403 = vector.broadcast %cst_181 : f32 to vector<2x1xf32>
    %404 = arith.cmpf ogt, %374, %403 : vector<2x1xf32>
    %405 = vector.shape_cast %404 : vector<2x1xi1> to vector<2x1xi1>
    %406 = vector.broadcast %405 : vector<2x1xi1> to vector<2x5xi1>
    %407 = arith.select %406, %402, %372 : vector<2x5xi1>, vector<2x5xf32>
    %408 = vector.extract_strided_slice %288 {offsets = [8, 0], sizes = [2, 5], strides = [1, 1]} : vector<16x5xf32> to vector<2x5xf32>
    %c8 = arith.constant 8 : index
    %c0_182 = arith.constant 0 : index
    %409 = vector.load %arg2[%c8, %c0_182] : memref<16x1xf32, #tpu.memory_space<vmem>>, vector<2x1xf32>
    %c8_183 = arith.constant 8 : index
    %c0_184 = arith.constant 0 : index
    %410 = vector.load %arg3[%c8_183, %c0_184] : memref<16x1xi32, #tpu.memory_space<vmem>>, vector<2x1xi32>
    %411 = vector.broadcast %410 : vector<2x1xi32> to vector<2x5xi32>
    %412 = arith.cmpi eq, %293, %411 : vector<2x5xi32>
    %413 = arith.extui %412 : vector<2x5xi1> to vector<2x5xi32>
    %414 = arith.sitofp %413 : vector<2x5xi32> to vector<2x5xf32>
    %415 = arith.mulf %408, %414 : vector<2x5xf32>
    %416 = vector.broadcast %409 : vector<2x1xf32> to vector<2x5xf32>
    %417 = arith.mulf %415, %416 : vector<2x5xf32>
    %418 = arith.addf %383, %417 : vector<2x5xf32>
    %cst_185 = arith.constant 0.000000e+00 : f32
    %419 = vector.broadcast %cst_185 : f32 to vector<2x1xf32>
    %420 = arith.cmpf ogt, %409, %419 : vector<2x1xf32>
    %421 = vector.shape_cast %420 : vector<2x1xi1> to vector<2x1xi1>
    %422 = vector.broadcast %421 : vector<2x1xi1> to vector<2x5xi1>
    %423 = arith.select %422, %414, %388 : vector<2x5xi1>, vector<2x5xf32>
    %424 = vector.shape_cast %407 : vector<2x5xf32> to vector<2x1x5xf32>
    %425 = vector.shape_cast %290 : vector<5x5xf32> to vector<1x5x5xf32>
    %426 = vector.broadcast %424 : vector<2x1x5xf32> to vector<2x5x5xf32>
    %427 = vector.broadcast %425 : vector<1x5x5xf32> to vector<2x5x5xf32>
    %428 = arith.addf %426, %427 : vector<2x5x5xf32>
    %cst_186 = arith.constant dense<0xFF800000> : vector<2x5xf32>
    %429 = vector.multi_reduction <maximumf>, %428, %cst_186 [2] : vector<2x5x5xf32> to vector<2x5xf32>
    %430 = vector.shape_cast %429 : vector<2x5xf32> to vector<2x5x1xf32>
    %431 = vector.broadcast %430 : vector<2x5x1xf32> to vector<2x5x5xf32>
    %432 = arith.subf %428, %431 : vector<2x5x5xf32>
    %433 = math.exp %432 : vector<2x5x5xf32>
    %cst_187 = arith.constant dense<0.000000e+00> : vector<2x5xf32>
    %434 = vector.multi_reduction <add>, %433, %cst_187 [2] : vector<2x5x5xf32> to vector<2x5xf32>
    %435 = math.log %434 : vector<2x5xf32>
    %436 = arith.addf %429, %435 : vector<2x5xf32>
    %437 = arith.addf %436, %408 : vector<2x5xf32>
    %cst_188 = arith.constant 0.000000e+00 : f32
    %438 = vector.broadcast %cst_188 : f32 to vector<2x1xf32>
    %439 = arith.cmpf ogt, %409, %438 : vector<2x1xf32>
    %440 = vector.shape_cast %439 : vector<2x1xi1> to vector<2x1xi1>
    %441 = vector.broadcast %440 : vector<2x1xi1> to vector<2x5xi1>
    %442 = arith.select %441, %437, %407 : vector<2x5xi1>, vector<2x5xf32>
    %443 = vector.extract_strided_slice %288 {offsets = [10, 0], sizes = [2, 5], strides = [1, 1]} : vector<16x5xf32> to vector<2x5xf32>
    %c10 = arith.constant 10 : index
    %c0_189 = arith.constant 0 : index
    %444 = vector.load %arg2[%c10, %c0_189] : memref<16x1xf32, #tpu.memory_space<vmem>>, vector<2x1xf32>
    %c10_190 = arith.constant 10 : index
    %c0_191 = arith.constant 0 : index
    %445 = vector.load %arg3[%c10_190, %c0_191] : memref<16x1xi32, #tpu.memory_space<vmem>>, vector<2x1xi32>
    %446 = vector.broadcast %445 : vector<2x1xi32> to vector<2x5xi32>
    %447 = arith.cmpi eq, %293, %446 : vector<2x5xi32>
    %448 = arith.extui %447 : vector<2x5xi1> to vector<2x5xi32>
    %449 = arith.sitofp %448 : vector<2x5xi32> to vector<2x5xf32>
    %450 = arith.mulf %443, %449 : vector<2x5xf32>
    %451 = vector.broadcast %444 : vector<2x1xf32> to vector<2x5xf32>
    %452 = arith.mulf %450, %451 : vector<2x5xf32>
    %453 = arith.addf %418, %452 : vector<2x5xf32>
    %cst_192 = arith.constant 0.000000e+00 : f32
    %454 = vector.broadcast %cst_192 : f32 to vector<2x1xf32>
    %455 = arith.cmpf ogt, %444, %454 : vector<2x1xf32>
    %456 = vector.shape_cast %455 : vector<2x1xi1> to vector<2x1xi1>
    %457 = vector.broadcast %456 : vector<2x1xi1> to vector<2x5xi1>
    %458 = arith.select %457, %449, %423 : vector<2x5xi1>, vector<2x5xf32>
    %459 = vector.shape_cast %442 : vector<2x5xf32> to vector<2x1x5xf32>
    %460 = vector.shape_cast %290 : vector<5x5xf32> to vector<1x5x5xf32>
    %461 = vector.broadcast %459 : vector<2x1x5xf32> to vector<2x5x5xf32>
    %462 = vector.broadcast %460 : vector<1x5x5xf32> to vector<2x5x5xf32>
    %463 = arith.addf %461, %462 : vector<2x5x5xf32>
    %cst_193 = arith.constant dense<0xFF800000> : vector<2x5xf32>
    %464 = vector.multi_reduction <maximumf>, %463, %cst_193 [2] : vector<2x5x5xf32> to vector<2x5xf32>
    %465 = vector.shape_cast %464 : vector<2x5xf32> to vector<2x5x1xf32>
    %466 = vector.broadcast %465 : vector<2x5x1xf32> to vector<2x5x5xf32>
    %467 = arith.subf %463, %466 : vector<2x5x5xf32>
    %468 = math.exp %467 : vector<2x5x5xf32>
    %cst_194 = arith.constant dense<0.000000e+00> : vector<2x5xf32>
    %469 = vector.multi_reduction <add>, %468, %cst_194 [2] : vector<2x5x5xf32> to vector<2x5xf32>
    %470 = math.log %469 : vector<2x5xf32>
    %471 = arith.addf %464, %470 : vector<2x5xf32>
    %472 = arith.addf %471, %443 : vector<2x5xf32>
    %cst_195 = arith.constant 0.000000e+00 : f32
    %473 = vector.broadcast %cst_195 : f32 to vector<2x1xf32>
    %474 = arith.cmpf ogt, %444, %473 : vector<2x1xf32>
    %475 = vector.shape_cast %474 : vector<2x1xi1> to vector<2x1xi1>
    %476 = vector.broadcast %475 : vector<2x1xi1> to vector<2x5xi1>
    %477 = arith.select %476, %472, %442 : vector<2x5xi1>, vector<2x5xf32>
    %478 = vector.extract_strided_slice %288 {offsets = [12, 0], sizes = [2, 5], strides = [1, 1]} : vector<16x5xf32> to vector<2x5xf32>
    %c12 = arith.constant 12 : index
    %c0_196 = arith.constant 0 : index
    %479 = vector.load %arg2[%c12, %c0_196] : memref<16x1xf32, #tpu.memory_space<vmem>>, vector<2x1xf32>
    %c12_197 = arith.constant 12 : index
    %c0_198 = arith.constant 0 : index
    %480 = vector.load %arg3[%c12_197, %c0_198] : memref<16x1xi32, #tpu.memory_space<vmem>>, vector<2x1xi32>
    %481 = vector.broadcast %480 : vector<2x1xi32> to vector<2x5xi32>
    %482 = arith.cmpi eq, %293, %481 : vector<2x5xi32>
    %483 = arith.extui %482 : vector<2x5xi1> to vector<2x5xi32>
    %484 = arith.sitofp %483 : vector<2x5xi32> to vector<2x5xf32>
    %485 = arith.mulf %478, %484 : vector<2x5xf32>
    %486 = vector.broadcast %479 : vector<2x1xf32> to vector<2x5xf32>
    %487 = arith.mulf %485, %486 : vector<2x5xf32>
    %488 = arith.addf %453, %487 : vector<2x5xf32>
    %cst_199 = arith.constant 0.000000e+00 : f32
    %489 = vector.broadcast %cst_199 : f32 to vector<2x1xf32>
    %490 = arith.cmpf ogt, %479, %489 : vector<2x1xf32>
    %491 = vector.shape_cast %490 : vector<2x1xi1> to vector<2x1xi1>
    %492 = vector.broadcast %491 : vector<2x1xi1> to vector<2x5xi1>
    %493 = arith.select %492, %484, %458 : vector<2x5xi1>, vector<2x5xf32>
    %494 = vector.shape_cast %477 : vector<2x5xf32> to vector<2x1x5xf32>
    %495 = vector.shape_cast %290 : vector<5x5xf32> to vector<1x5x5xf32>
    %496 = vector.broadcast %494 : vector<2x1x5xf32> to vector<2x5x5xf32>
    %497 = vector.broadcast %495 : vector<1x5x5xf32> to vector<2x5x5xf32>
    %498 = arith.addf %496, %497 : vector<2x5x5xf32>
    %cst_200 = arith.constant dense<0xFF800000> : vector<2x5xf32>
    %499 = vector.multi_reduction <maximumf>, %498, %cst_200 [2] : vector<2x5x5xf32> to vector<2x5xf32>
    %500 = vector.shape_cast %499 : vector<2x5xf32> to vector<2x5x1xf32>
    %501 = vector.broadcast %500 : vector<2x5x1xf32> to vector<2x5x5xf32>
    %502 = arith.subf %498, %501 : vector<2x5x5xf32>
    %503 = math.exp %502 : vector<2x5x5xf32>
    %cst_201 = arith.constant dense<0.000000e+00> : vector<2x5xf32>
    %504 = vector.multi_reduction <add>, %503, %cst_201 [2] : vector<2x5x5xf32> to vector<2x5xf32>
    %505 = math.log %504 : vector<2x5xf32>
    %506 = arith.addf %499, %505 : vector<2x5xf32>
    %507 = arith.addf %506, %478 : vector<2x5xf32>
    %cst_202 = arith.constant 0.000000e+00 : f32
    %508 = vector.broadcast %cst_202 : f32 to vector<2x1xf32>
    %509 = arith.cmpf ogt, %479, %508 : vector<2x1xf32>
    %510 = vector.shape_cast %509 : vector<2x1xi1> to vector<2x1xi1>
    %511 = vector.broadcast %510 : vector<2x1xi1> to vector<2x5xi1>
    %512 = arith.select %511, %507, %477 : vector<2x5xi1>, vector<2x5xf32>
    %513 = vector.extract_strided_slice %288 {offsets = [14, 0], sizes = [2, 5], strides = [1, 1]} : vector<16x5xf32> to vector<2x5xf32>
    %c14 = arith.constant 14 : index
    %c0_203 = arith.constant 0 : index
    %514 = vector.load %arg2[%c14, %c0_203] : memref<16x1xf32, #tpu.memory_space<vmem>>, vector<2x1xf32>
    %c14_204 = arith.constant 14 : index
    %c0_205 = arith.constant 0 : index
    %515 = vector.load %arg3[%c14_204, %c0_205] : memref<16x1xi32, #tpu.memory_space<vmem>>, vector<2x1xi32>
    %516 = vector.broadcast %515 : vector<2x1xi32> to vector<2x5xi32>
    %517 = arith.cmpi eq, %293, %516 : vector<2x5xi32>
    %518 = arith.extui %517 : vector<2x5xi1> to vector<2x5xi32>
    %519 = arith.sitofp %518 : vector<2x5xi32> to vector<2x5xf32>
    %520 = arith.mulf %513, %519 : vector<2x5xf32>
    %521 = vector.broadcast %514 : vector<2x1xf32> to vector<2x5xf32>
    %522 = arith.mulf %520, %521 : vector<2x5xf32>
    %523 = arith.addf %488, %522 : vector<2x5xf32>
    %cst_206 = arith.constant 0.000000e+00 : f32
    %524 = vector.broadcast %cst_206 : f32 to vector<2x1xf32>
    %525 = arith.cmpf ogt, %514, %524 : vector<2x1xf32>
    %526 = vector.shape_cast %525 : vector<2x1xi1> to vector<2x1xi1>
    %527 = vector.broadcast %526 : vector<2x1xi1> to vector<2x5xi1>
    %528 = arith.select %527, %519, %493 : vector<2x5xi1>, vector<2x5xf32>
    %529 = vector.shape_cast %512 : vector<2x5xf32> to vector<2x1x5xf32>
    %530 = vector.shape_cast %290 : vector<5x5xf32> to vector<1x5x5xf32>
    %531 = vector.broadcast %529 : vector<2x1x5xf32> to vector<2x5x5xf32>
    %532 = vector.broadcast %530 : vector<1x5x5xf32> to vector<2x5x5xf32>
    %533 = arith.addf %531, %532 : vector<2x5x5xf32>
    %cst_207 = arith.constant dense<0xFF800000> : vector<2x5xf32>
    %534 = vector.multi_reduction <maximumf>, %533, %cst_207 [2] : vector<2x5x5xf32> to vector<2x5xf32>
    %535 = vector.shape_cast %534 : vector<2x5xf32> to vector<2x5x1xf32>
    %536 = vector.broadcast %535 : vector<2x5x1xf32> to vector<2x5x5xf32>
    %537 = arith.subf %533, %536 : vector<2x5x5xf32>
    %538 = math.exp %537 : vector<2x5x5xf32>
    %cst_208 = arith.constant dense<0.000000e+00> : vector<2x5xf32>
    %539 = vector.multi_reduction <add>, %538, %cst_208 [2] : vector<2x5x5xf32> to vector<2x5xf32>
    %540 = math.log %539 : vector<2x5xf32>
    %541 = arith.addf %534, %540 : vector<2x5xf32>
    %542 = arith.addf %541, %513 : vector<2x5xf32>
    %cst_209 = arith.constant 0.000000e+00 : f32
    %543 = vector.broadcast %cst_209 : f32 to vector<2x1xf32>
    %544 = arith.cmpf ogt, %514, %543 : vector<2x1xf32>
    %545 = vector.shape_cast %544 : vector<2x1xi1> to vector<2x1xi1>
    %546 = vector.broadcast %545 : vector<2x1xi1> to vector<2x5xi1>
    %547 = arith.select %546, %542, %512 : vector<2x5xi1>, vector<2x5xf32>
    %548 = vector.broadcast %292 : vector<1x5xf32> to vector<2x5xf32>
    %549 = arith.mulf %548, %528 : vector<2x5xf32>
    %550 = arith.addf %523, %549 : vector<2x5xf32>
    %cst_210 = arith.constant dense<0.000000e+00> : vector<2xf32>
    %551 = vector.multi_reduction <add>, %550, %cst_210 [1] : vector<2x5xf32> to vector<2xf32>
    %552 = vector.shape_cast %551 : vector<2xf32> to vector<2x1xf32>
    %553 = tpu.iota {dimensions = array<i32: 0>} : vector<2x1xi32>
    %cst_211 = arith.constant 0.000000e+00 : f32
    %554 = vector.broadcast %cst_211 : f32 to vector<2x1xf32>
    %c0_212 = arith.constant 0 : index
    %c0_213 = arith.constant 0 : index
    %555 = memref.load %arg4[%c0_212, %c0_213] : memref<2x8xi32, #tpu.memory_space<smem>>
    %c5_i32 = arith.constant 5 : i32
    %556 = arith.muli %555, %c5_i32 : i32
    %c0_214 = arith.constant 0 : index
    %c1_215 = arith.constant 1 : index
    %557 = memref.load %arg4[%c0_214, %c1_215] : memref<2x8xi32, #tpu.memory_space<smem>>
    %558 = arith.addi %556, %557 : i32
    %559 = arith.index_cast %558 : i32 to index
    %560 = memref.load %arg6[%559] : memref<25xf32, #tpu.memory_space<smem>>
    %c0_216 = arith.constant 0 : index
    %c1_217 = arith.constant 1 : index
    %561 = memref.load %arg5[%c0_216, %c1_217] : memref<2x8xi32, #tpu.memory_space<smem>>
    %c0_i32 = arith.constant 0 : i32
    %562 = arith.cmpi sgt, %561, %c0_i32 : i32
    %cst_218 = arith.constant 0.000000e+00 : f32
    %563 = arith.select %562, %560, %cst_218 : f32
    %cst_219 = arith.constant 0.000000e+00 : f32
    %564 = arith.addf %cst_219, %563 : f32
    %c0_220 = arith.constant 0 : index
    %c1_221 = arith.constant 1 : index
    %565 = memref.load %arg4[%c0_220, %c1_221] : memref<2x8xi32, #tpu.memory_space<smem>>
    %c5_i32_222 = arith.constant 5 : i32
    %566 = arith.muli %565, %c5_i32_222 : i32
    %c0_223 = arith.constant 0 : index
    %c2_224 = arith.constant 2 : index
    %567 = memref.load %arg4[%c0_223, %c2_224] : memref<2x8xi32, #tpu.memory_space<smem>>
    %568 = arith.addi %566, %567 : i32
    %569 = arith.index_cast %568 : i32 to index
    %570 = memref.load %arg6[%569] : memref<25xf32, #tpu.memory_space<smem>>
    %c0_225 = arith.constant 0 : index
    %c2_226 = arith.constant 2 : index
    %571 = memref.load %arg5[%c0_225, %c2_226] : memref<2x8xi32, #tpu.memory_space<smem>>
    %c0_i32_227 = arith.constant 0 : i32
    %572 = arith.cmpi sgt, %571, %c0_i32_227 : i32
    %cst_228 = arith.constant 0.000000e+00 : f32
    %573 = arith.select %572, %570, %cst_228 : f32
    %574 = arith.addf %564, %573 : f32
    %c0_229 = arith.constant 0 : index
    %c2_230 = arith.constant 2 : index
    %575 = memref.load %arg4[%c0_229, %c2_230] : memref<2x8xi32, #tpu.memory_space<smem>>
    %c5_i32_231 = arith.constant 5 : i32
    %576 = arith.muli %575, %c5_i32_231 : i32
    %c0_232 = arith.constant 0 : index
    %c3 = arith.constant 3 : index
    %577 = memref.load %arg4[%c0_232, %c3] : memref<2x8xi32, #tpu.memory_space<smem>>
    %578 = arith.addi %576, %577 : i32
    %579 = arith.index_cast %578 : i32 to index
    %580 = memref.load %arg6[%579] : memref<25xf32, #tpu.memory_space<smem>>
    %c0_233 = arith.constant 0 : index
    %c3_234 = arith.constant 3 : index
    %581 = memref.load %arg5[%c0_233, %c3_234] : memref<2x8xi32, #tpu.memory_space<smem>>
    %c0_i32_235 = arith.constant 0 : i32
    %582 = arith.cmpi sgt, %581, %c0_i32_235 : i32
    %cst_236 = arith.constant 0.000000e+00 : f32
    %583 = arith.select %582, %580, %cst_236 : f32
    %584 = arith.addf %574, %583 : f32
    %c0_237 = arith.constant 0 : index
    %c3_238 = arith.constant 3 : index
    %585 = memref.load %arg4[%c0_237, %c3_238] : memref<2x8xi32, #tpu.memory_space<smem>>
    %c5_i32_239 = arith.constant 5 : i32
    %586 = arith.muli %585, %c5_i32_239 : i32
    %c0_240 = arith.constant 0 : index
    %c4_241 = arith.constant 4 : index
    %587 = memref.load %arg4[%c0_240, %c4_241] : memref<2x8xi32, #tpu.memory_space<smem>>
    %588 = arith.addi %586, %587 : i32
    %589 = arith.index_cast %588 : i32 to index
    %590 = memref.load %arg6[%589] : memref<25xf32, #tpu.memory_space<smem>>
    %c0_242 = arith.constant 0 : index
    %c4_243 = arith.constant 4 : index
    %591 = memref.load %arg5[%c0_242, %c4_243] : memref<2x8xi32, #tpu.memory_space<smem>>
    %c0_i32_244 = arith.constant 0 : i32
    %592 = arith.cmpi sgt, %591, %c0_i32_244 : i32
    %cst_245 = arith.constant 0.000000e+00 : f32
    %593 = arith.select %592, %590, %cst_245 : f32
    %594 = arith.addf %584, %593 : f32
    %c0_246 = arith.constant 0 : index
    %c4_247 = arith.constant 4 : index
    %595 = memref.load %arg4[%c0_246, %c4_247] : memref<2x8xi32, #tpu.memory_space<smem>>
    %c5_i32_248 = arith.constant 5 : i32
    %596 = arith.muli %595, %c5_i32_248 : i32
    %c0_249 = arith.constant 0 : index
    %c5 = arith.constant 5 : index
    %597 = memref.load %arg4[%c0_249, %c5] : memref<2x8xi32, #tpu.memory_space<smem>>
    %598 = arith.addi %596, %597 : i32
    %599 = arith.index_cast %598 : i32 to index
    %600 = memref.load %arg6[%599] : memref<25xf32, #tpu.memory_space<smem>>
    %c0_250 = arith.constant 0 : index
    %c5_251 = arith.constant 5 : index
    %601 = memref.load %arg5[%c0_250, %c5_251] : memref<2x8xi32, #tpu.memory_space<smem>>
    %c0_i32_252 = arith.constant 0 : i32
    %602 = arith.cmpi sgt, %601, %c0_i32_252 : i32
    %cst_253 = arith.constant 0.000000e+00 : f32
    %603 = arith.select %602, %600, %cst_253 : f32
    %604 = arith.addf %594, %603 : f32
    %c0_254 = arith.constant 0 : index
    %c5_255 = arith.constant 5 : index
    %605 = memref.load %arg4[%c0_254, %c5_255] : memref<2x8xi32, #tpu.memory_space<smem>>
    %c5_i32_256 = arith.constant 5 : i32
    %606 = arith.muli %605, %c5_i32_256 : i32
    %c0_257 = arith.constant 0 : index
    %c6_258 = arith.constant 6 : index
    %607 = memref.load %arg4[%c0_257, %c6_258] : memref<2x8xi32, #tpu.memory_space<smem>>
    %608 = arith.addi %606, %607 : i32
    %609 = arith.index_cast %608 : i32 to index
    %610 = memref.load %arg6[%609] : memref<25xf32, #tpu.memory_space<smem>>
    %c0_259 = arith.constant 0 : index
    %c6_260 = arith.constant 6 : index
    %611 = memref.load %arg5[%c0_259, %c6_260] : memref<2x8xi32, #tpu.memory_space<smem>>
    %c0_i32_261 = arith.constant 0 : i32
    %612 = arith.cmpi sgt, %611, %c0_i32_261 : i32
    %cst_262 = arith.constant 0.000000e+00 : f32
    %613 = arith.select %612, %610, %cst_262 : f32
    %614 = arith.addf %604, %613 : f32
    %c0_263 = arith.constant 0 : index
    %c6_264 = arith.constant 6 : index
    %615 = memref.load %arg4[%c0_263, %c6_264] : memref<2x8xi32, #tpu.memory_space<smem>>
    %c5_i32_265 = arith.constant 5 : i32
    %616 = arith.muli %615, %c5_i32_265 : i32
    %c0_266 = arith.constant 0 : index
    %c7 = arith.constant 7 : index
    %617 = memref.load %arg4[%c0_266, %c7] : memref<2x8xi32, #tpu.memory_space<smem>>
    %618 = arith.addi %616, %617 : i32
    %619 = arith.index_cast %618 : i32 to index
    %620 = memref.load %arg6[%619] : memref<25xf32, #tpu.memory_space<smem>>
    %c0_267 = arith.constant 0 : index
    %c7_268 = arith.constant 7 : index
    %621 = memref.load %arg5[%c0_267, %c7_268] : memref<2x8xi32, #tpu.memory_space<smem>>
    %c0_i32_269 = arith.constant 0 : i32
    %622 = arith.cmpi sgt, %621, %c0_i32_269 : i32
    %cst_270 = arith.constant 0.000000e+00 : f32
    %623 = arith.select %622, %620, %cst_270 : f32
    %624 = arith.addf %614, %623 : f32
    %c0_i32_271 = arith.constant 0 : i32
    %625 = vector.broadcast %c0_i32_271 : i32 to vector<2x1xi32>
    %626 = arith.cmpi eq, %553, %625 : vector<2x1xi32>
    %cst_272 = arith.constant 0.000000e+00 : f32
    %627 = vector.broadcast %624 : f32 to vector<2x1xf32>
    %628 = vector.broadcast %cst_272 : f32 to vector<2x1xf32>
    %629 = arith.select %626, %627, %628 : vector<2x1xi1>, vector<2x1xf32>
    %630 = arith.addf %554, %629 : vector<2x1xf32>
    %c1_273 = arith.constant 1 : index
    %c0_274 = arith.constant 0 : index
    %631 = memref.load %arg4[%c1_273, %c0_274] : memref<2x8xi32, #tpu.memory_space<smem>>
    %c5_i32_275 = arith.constant 5 : i32
    %632 = arith.muli %631, %c5_i32_275 : i32
    %c1_276 = arith.constant 1 : index
    %c1_277 = arith.constant 1 : index
    %633 = memref.load %arg4[%c1_276, %c1_277] : memref<2x8xi32, #tpu.memory_space<smem>>
    %634 = arith.addi %632, %633 : i32
    %635 = arith.index_cast %634 : i32 to index
    %636 = memref.load %arg6[%635] : memref<25xf32, #tpu.memory_space<smem>>
    %c1_278 = arith.constant 1 : index
    %c1_279 = arith.constant 1 : index
    %637 = memref.load %arg5[%c1_278, %c1_279] : memref<2x8xi32, #tpu.memory_space<smem>>
    %c0_i32_280 = arith.constant 0 : i32
    %638 = arith.cmpi sgt, %637, %c0_i32_280 : i32
    %cst_281 = arith.constant 0.000000e+00 : f32
    %639 = arith.select %638, %636, %cst_281 : f32
    %cst_282 = arith.constant 0.000000e+00 : f32
    %640 = arith.addf %cst_282, %639 : f32
    %c1_283 = arith.constant 1 : index
    %c1_284 = arith.constant 1 : index
    %641 = memref.load %arg4[%c1_283, %c1_284] : memref<2x8xi32, #tpu.memory_space<smem>>
    %c5_i32_285 = arith.constant 5 : i32
    %642 = arith.muli %641, %c5_i32_285 : i32
    %c1_286 = arith.constant 1 : index
    %c2_287 = arith.constant 2 : index
    %643 = memref.load %arg4[%c1_286, %c2_287] : memref<2x8xi32, #tpu.memory_space<smem>>
    %644 = arith.addi %642, %643 : i32
    %645 = arith.index_cast %644 : i32 to index
    %646 = memref.load %arg6[%645] : memref<25xf32, #tpu.memory_space<smem>>
    %c1_288 = arith.constant 1 : index
    %c2_289 = arith.constant 2 : index
    %647 = memref.load %arg5[%c1_288, %c2_289] : memref<2x8xi32, #tpu.memory_space<smem>>
    %c0_i32_290 = arith.constant 0 : i32
    %648 = arith.cmpi sgt, %647, %c0_i32_290 : i32
    %cst_291 = arith.constant 0.000000e+00 : f32
    %649 = arith.select %648, %646, %cst_291 : f32
    %650 = arith.addf %640, %649 : f32
    %c1_292 = arith.constant 1 : index
    %c2_293 = arith.constant 2 : index
    %651 = memref.load %arg4[%c1_292, %c2_293] : memref<2x8xi32, #tpu.memory_space<smem>>
    %c5_i32_294 = arith.constant 5 : i32
    %652 = arith.muli %651, %c5_i32_294 : i32
    %c1_295 = arith.constant 1 : index
    %c3_296 = arith.constant 3 : index
    %653 = memref.load %arg4[%c1_295, %c3_296] : memref<2x8xi32, #tpu.memory_space<smem>>
    %654 = arith.addi %652, %653 : i32
    %655 = arith.index_cast %654 : i32 to index
    %656 = memref.load %arg6[%655] : memref<25xf32, #tpu.memory_space<smem>>
    %c1_297 = arith.constant 1 : index
    %c3_298 = arith.constant 3 : index
    %657 = memref.load %arg5[%c1_297, %c3_298] : memref<2x8xi32, #tpu.memory_space<smem>>
    %c0_i32_299 = arith.constant 0 : i32
    %658 = arith.cmpi sgt, %657, %c0_i32_299 : i32
    %cst_300 = arith.constant 0.000000e+00 : f32
    %659 = arith.select %658, %656, %cst_300 : f32
    %660 = arith.addf %650, %659 : f32
    %c1_301 = arith.constant 1 : index
    %c3_302 = arith.constant 3 : index
    %661 = memref.load %arg4[%c1_301, %c3_302] : memref<2x8xi32, #tpu.memory_space<smem>>
    %c5_i32_303 = arith.constant 5 : i32
    %662 = arith.muli %661, %c5_i32_303 : i32
    %c1_304 = arith.constant 1 : index
    %c4_305 = arith.constant 4 : index
    %663 = memref.load %arg4[%c1_304, %c4_305] : memref<2x8xi32, #tpu.memory_space<smem>>
    %664 = arith.addi %662, %663 : i32
    %665 = arith.index_cast %664 : i32 to index
    %666 = memref.load %arg6[%665] : memref<25xf32, #tpu.memory_space<smem>>
    %c1_306 = arith.constant 1 : index
    %c4_307 = arith.constant 4 : index
    %667 = memref.load %arg5[%c1_306, %c4_307] : memref<2x8xi32, #tpu.memory_space<smem>>
    %c0_i32_308 = arith.constant 0 : i32
    %668 = arith.cmpi sgt, %667, %c0_i32_308 : i32
    %cst_309 = arith.constant 0.000000e+00 : f32
    %669 = arith.select %668, %666, %cst_309 : f32
    %670 = arith.addf %660, %669 : f32
    %c1_310 = arith.constant 1 : index
    %c4_311 = arith.constant 4 : index
    %671 = memref.load %arg4[%c1_310, %c4_311] : memref<2x8xi32, #tpu.memory_space<smem>>
    %c5_i32_312 = arith.constant 5 : i32
    %672 = arith.muli %671, %c5_i32_312 : i32
    %c1_313 = arith.constant 1 : index
    %c5_314 = arith.constant 5 : index
    %673 = memref.load %arg4[%c1_313, %c5_314] : memref<2x8xi32, #tpu.memory_space<smem>>
    %674 = arith.addi %672, %673 : i32
    %675 = arith.index_cast %674 : i32 to index
    %676 = memref.load %arg6[%675] : memref<25xf32, #tpu.memory_space<smem>>
    %c1_315 = arith.constant 1 : index
    %c5_316 = arith.constant 5 : index
    %677 = memref.load %arg5[%c1_315, %c5_316] : memref<2x8xi32, #tpu.memory_space<smem>>
    %c0_i32_317 = arith.constant 0 : i32
    %678 = arith.cmpi sgt, %677, %c0_i32_317 : i32
    %cst_318 = arith.constant 0.000000e+00 : f32
    %679 = arith.select %678, %676, %cst_318 : f32
    %680 = arith.addf %670, %679 : f32
    %c1_319 = arith.constant 1 : index
    %c5_320 = arith.constant 5 : index
    %681 = memref.load %arg4[%c1_319, %c5_320] : memref<2x8xi32, #tpu.memory_space<smem>>
    %c5_i32_321 = arith.constant 5 : i32
    %682 = arith.muli %681, %c5_i32_321 : i32
    %c1_322 = arith.constant 1 : index
    %c6_323 = arith.constant 6 : index
    %683 = memref.load %arg4[%c1_322, %c6_323] : memref<2x8xi32, #tpu.memory_space<smem>>
    %684 = arith.addi %682, %683 : i32
    %685 = arith.index_cast %684 : i32 to index
    %686 = memref.load %arg6[%685] : memref<25xf32, #tpu.memory_space<smem>>
    %c1_324 = arith.constant 1 : index
    %c6_325 = arith.constant 6 : index
    %687 = memref.load %arg5[%c1_324, %c6_325] : memref<2x8xi32, #tpu.memory_space<smem>>
    %c0_i32_326 = arith.constant 0 : i32
    %688 = arith.cmpi sgt, %687, %c0_i32_326 : i32
    %cst_327 = arith.constant 0.000000e+00 : f32
    %689 = arith.select %688, %686, %cst_327 : f32
    %690 = arith.addf %680, %689 : f32
    %c1_328 = arith.constant 1 : index
    %c6_329 = arith.constant 6 : index
    %691 = memref.load %arg4[%c1_328, %c6_329] : memref<2x8xi32, #tpu.memory_space<smem>>
    %c5_i32_330 = arith.constant 5 : i32
    %692 = arith.muli %691, %c5_i32_330 : i32
    %c1_331 = arith.constant 1 : index
    %c7_332 = arith.constant 7 : index
    %693 = memref.load %arg4[%c1_331, %c7_332] : memref<2x8xi32, #tpu.memory_space<smem>>
    %694 = arith.addi %692, %693 : i32
    %695 = arith.index_cast %694 : i32 to index
    %696 = memref.load %arg6[%695] : memref<25xf32, #tpu.memory_space<smem>>
    %c1_333 = arith.constant 1 : index
    %c7_334 = arith.constant 7 : index
    %697 = memref.load %arg5[%c1_333, %c7_334] : memref<2x8xi32, #tpu.memory_space<smem>>
    %c0_i32_335 = arith.constant 0 : i32
    %698 = arith.cmpi sgt, %697, %c0_i32_335 : i32
    %cst_336 = arith.constant 0.000000e+00 : f32
    %699 = arith.select %698, %696, %cst_336 : f32
    %700 = arith.addf %690, %699 : f32
    %c1_i32 = arith.constant 1 : i32
    %701 = vector.broadcast %c1_i32 : i32 to vector<2x1xi32>
    %702 = arith.cmpi eq, %553, %701 : vector<2x1xi32>
    %cst_337 = arith.constant 0.000000e+00 : f32
    %703 = vector.broadcast %700 : f32 to vector<2x1xf32>
    %704 = vector.broadcast %cst_337 : f32 to vector<2x1xf32>
    %705 = arith.select %702, %703, %704 : vector<2x1xi1>, vector<2x1xf32>
    %706 = arith.addf %630, %705 : vector<2x1xf32>
    %707 = vector.broadcast %292 : vector<1x5xf32> to vector<2x5xf32>
    %708 = arith.addf %547, %707 : vector<2x5xf32>
    %cst_338 = arith.constant dense<0xFF800000> : vector<2xf32>
    %709 = vector.multi_reduction <maximumf>, %708, %cst_338 [1] : vector<2x5xf32> to vector<2xf32>
    %710 = vector.shape_cast %709 : vector<2xf32> to vector<2x1xf32>
    %711 = vector.broadcast %710 : vector<2x1xf32> to vector<2x5xf32>
    %712 = arith.subf %708, %711 : vector<2x5xf32>
    %713 = math.exp %712 : vector<2x5xf32>
    %cst_339 = arith.constant dense<0.000000e+00> : vector<2xf32>
    %714 = vector.multi_reduction <add>, %713, %cst_339 [1] : vector<2x5xf32> to vector<2xf32>
    %715 = vector.shape_cast %714 : vector<2xf32> to vector<2x1xf32>
    %716 = math.log %715 : vector<2x1xf32>
    %717 = arith.addf %710, %716 : vector<2x1xf32>
    %718 = arith.addf %552, %706 : vector<2x1xf32>
    %719 = arith.subf %717, %718 : vector<2x1xf32>
    %c0_340 = arith.constant 0 : index
    %c0_341 = arith.constant 0 : index
    %720 = vector.load %arg29[%c0_340, %c0_341] : memref<2x1xf32, #tpu.memory_space<vmem>>, vector<2x1xf32>
    tpu.vector_store %arg29[%c0_340, %c0_341], %719 {strides = array<i32>} : memref<2x1xf32, #tpu.memory_space<vmem>>, vector<2x1xf32>,
    return
  }
}

</mosaic_0001>

<llo_original>
// kernel: bert_crf_forward.1
$region0: #{bert_crf_forward.1}
  #allocation0 [shape = 'u32[]', space=smem, size = 0x4, offset = 0x4, fixed_abs, tag = 'smem constant byte address 0x4 - core index']
  #allocation1 [shape = 'u32[144,128]{1,0:T(1,128)}', space=vmem, size = 0x12000, scoped, tag = 'internal scratch']
  %s0 = inlined_call_operand.smem [shape: u32[30], index: -1, kind: input, shape index: {}]
  %s1 = sld [smem:[%s0]]
  %s2 = scalar_lea.smem %s0, 1
  %s3 = sld [smem:[%s2]]
  %s4 = scalar_lea.smem %s0, 2
  %s5 = sld [smem:[%s4]]
  %s6 = scalar_lea.smem %s0, 3
  %s7 = sld [smem:[%s6]]
  %s8 = scalar_lea.smem %s0, 4
  %s9 = sld [smem:[%s8]]
  %s10 = scalar_lea.smem %s0, 5
  %s11 = sld [smem:[%s10]]
  %s12 = scalar_lea.smem %s0, 6
  %s13 = sld [smem:[%s12]]
  %s14 = scalar_lea.smem %s0, 7
  %s15 = sld [smem:[%s14]]
  %s16 = scalar_lea.smem %s0, 8
  %s17 = sld [smem:[%s16]]
  %s18 = scalar_lea.smem %s0, 9
  %s19 = sld [smem:[%s18]]
  %s20 = scalar_lea.smem %s0, 10
  %s21 = sld [smem:[%s20]]
  %s22 = scalar_lea.smem %s0, 11
  %s23 = sld [smem:[%s22]]
  %s24 = scalar_lea.smem %s0, 12
  %s25 = sld [smem:[%s24]]
  %s26 = scalar_lea.smem %s0, 13
  %s27 = sld [smem:[%s26]]
  %s28 = scalar_lea.smem %s0, 14
  %s29 = sld [smem:[%s28]]
  %s30 = scalar_lea.smem %s0, 15
  %s31 = sld [smem:[%s30]]
  %s32 = scalar_lea.smem %s0, 16
  %s33 = sld [smem:[%s32]]
  %s34 = scalar_lea.smem %s0, 17
  %s35 = sld [smem:[%s34]]
  %s36 = scalar_lea.smem %s0, 18
  %s37 = sld [smem:[%s36]]
  %s38 = scalar_lea.smem %s0, 19
  %s39 = sld [smem:[%s38]]
  %s40 = scalar_lea.smem %s0, 20
  %s41 = sld [smem:[%s40]]
  %s42 = scalar_lea.smem %s0, 21
  %s43 = sld [smem:[%s42]]
  %s44 = scalar_lea.smem %s0, 22
  %s45 = sld [smem:[%s44]]
  %s46 = scalar_lea.smem %s0, 23
  %s47 = sld [smem:[%s46]]
  %s48 = scalar_lea.smem %s0, 24
  %s49 = sld [smem:[%s48]]
  %s50 = scalar_lea.smem %s0, 25
  %s51 = sld [smem:[%s50]]
  %s52 = scalar_lea.smem %s0, 26
  %s53 = sld [smem:[%s52]]
  %s54 = scalar_lea.smem %s0, 27
  %s55 = sld [smem:[%s54]]
  %s56 = scalar_lea.smem %s0, 28
  %s57 = sld [smem:[%s56]]
  %s58 = scalar_lea.smem %s0, 29
  %s59 = sld [smem:[%s58]]
  %60 = xla_tuple %s57, %s59
  %s61 = sld [smem:[#allocation0]]
  $region142: #{bert_crf_forward.1} parent=0
    _
  %s63 = ssub.s32 1, %s61
  %s64 = scalar_select 0, %s63, %s61
  $region1: #{bert_crf_forward.1} parent=0
    #allocation2 [shape = 'u8[1024]{0}', space=smem, size = 0x400, scoped, tag = 'input window, operand 4, single buffered']
    #allocation3 [shape = 's32[1]{0}', space=sflag, size = 0x4, scoped, tag = 'scoped memory for bert_crf_forward.1']
    #allocation4 [shape = 'u8[1024]{0}', space=smem, size = 0x400, scoped, tag = 'input window, operand 5, single buffered']
    #allocation5 [shape = 's32[1]{0}', space=sflag, size = 0x4, scoped, tag = 'scoped memory for bert_crf_forward.1']
    #allocation6 [shape = 'u8[512]{0}', space=smem, size = 0x200, scoped, tag = 'input window, operand 6, single buffered']
    %65 = vsyncpa [#allocation3], 0
    %66 = vsyncpa [#allocation5], 0
    // Predicated region
    $region2: #{bert_crf_forward.1} parent=1 // pred_check
      _
    $region3: #{bert_crf_forward.1} parent=1 // pred_check_branch
      %68 = sbr.rel (0) target = $region5
    $region4: #{bert_crf_forward.1} parent=1 // pred_region
      _
    $region5: #{bert_crf_forward.1} parent=1 // pred_fallthru
      _
    // Predicated region
    $region6: #{bert_crf_forward.1} parent=1 // pred_check
      _
    $region7: #{bert_crf_forward.1} parent=1 // pred_check_branch
      %70 = sbr.rel (0) target = $region9
    $region8: #{bert_crf_forward.1} parent=1 // pred_region
      _
    $region9: #{bert_crf_forward.1} parent=1 // pred_fallthru
      _
    // Predicated region
    $region10: #{bert_crf_forward.1} parent=1 // pred_check
      _
    $region11: #{bert_crf_forward.1} parent=1 // pred_check_branch
      %72 = sbr.rel (0) target = $region13
    $region12: #{bert_crf_forward.1} parent=1 // pred_region
      _
    $region13: #{bert_crf_forward.1} parent=1 // pred_fallthru
      _
    // Predicated region
    $region14: #{bert_crf_forward.1} parent=1 // pred_check
      _
    $region15: #{bert_crf_forward.1} parent=1 // pred_check_branch
      %74 = sbr.rel (0) target = $region17
    $region16: #{bert_crf_forward.1} parent=1 // pred_region
      _
    $region17: #{bert_crf_forward.1} parent=1 // pred_fallthru
      _
    // Predicated region
    $region18: #{bert_crf_forward.1} parent=1 // pred_check
      _
    $region19: #{bert_crf_forward.1} parent=1 // pred_check_branch
      %76 = sbr.rel (0) target = $region21
    $region20: #{bert_crf_forward.1} parent=1 // pred_region
      %s78 = ssub.s32 32, 32
      %79 = vsyncadd [#allocation3], %s78
      %s81 = sshll.u32 %s9, 4
      %s82 = int_to_ptr.vmem [resolvable:$true] %s81
      %84 = dma.vmem_to_smem %s82, 32, [#allocation2], [#allocation3]
    $region21: #{bert_crf_forward.1} parent=1 // pred_fallthru
      _
    // Predicated region
    $region22: #{bert_crf_forward.1} parent=1 // pred_check
      _
    $region23: #{bert_crf_forward.1} parent=1 // pred_check_branch
      %86 = sbr.rel (0) target = $region25
    $region24: #{bert_crf_forward.1} parent=1 // pred_region
      %s88 = ssub.s32 32, 32
      %89 = vsyncadd [#allocation5], %s88
      %s91 = sshll.u32 %s11, 4
      %s92 = int_to_ptr.vmem [resolvable:$true] %s91
      %94 = dma.vmem_to_smem %s92, 32, [#allocation4], [#allocation5]
    $region25: #{bert_crf_forward.1} parent=1 // pred_fallthru
      _
    // Predicated region
    $region26: #{bert_crf_forward.1} parent=1 // pred_check
      _
    $region27: #{bert_crf_forward.1} parent=1 // pred_check_branch
      %96 = sbr.rel (0) target = $region29
    $region28: #{bert_crf_forward.1} parent=1 // pred_region
      %s98 = ssub.s32 16, 16
      %99 = vsyncadd [#allocation5], %s98
      %s101 = sshll.u32 %s13, 4
      %s102 = int_to_ptr.vmem [resolvable:$true] %s101
      %104 = dma.vmem_to_smem %s102, 16, [#allocation6], [#allocation5]
    $region29: #{bert_crf_forward.1} parent=1 // pred_fallthru
      _
    // Predicated region
    $region30: #{bert_crf_forward.1} parent=1 // pred_check
      _
    $region31: #{bert_crf_forward.1} parent=1 // pred_check_branch
      %106 = sbr.rel (0) target = $region33
    $region32: #{bert_crf_forward.1} parent=1 // pred_region
      _
    $region33: #{bert_crf_forward.1} parent=1 // pred_fallthru
      _
    // Predicated region
    $region34: #{bert_crf_forward.1} parent=1 // pred_check
      _
    $region35: #{bert_crf_forward.1} parent=1 // pred_check_branch
      %108 = sbr.rel (0) target = $region37
    $region36: #{bert_crf_forward.1} parent=1 // pred_region
      _
    $region37: #{bert_crf_forward.1} parent=1 // pred_fallthru
      _
    // Predicated region
    $region38: #{bert_crf_forward.1} parent=1 // pred_check
      _
    $region39: #{bert_crf_forward.1} parent=1 // pred_check_branch
      %110 = sbr.rel (0) target = $region41
    $region40: #{bert_crf_forward.1} parent=1 // pred_region
      _
    $region41: #{bert_crf_forward.1} parent=1 // pred_fallthru
      _
    // Predicated region
    $region42: #{bert_crf_forward.1} parent=1 // pred_check
      _
    $region43: #{bert_crf_forward.1} parent=1 // pred_check_branch
      %112 = sbr.rel (0) target = $region45
    $region44: #{bert_crf_forward.1} parent=1 // pred_region
      _
    $region45: #{bert_crf_forward.1} parent=1 // pred_fallthru
      _
    // Predicated region
    $region46: #{bert_crf_forward.1} parent=1 // pred_check
      _
    $region47: #{bert_crf_forward.1} parent=1 // pred_check_branch
      %114 = sbr.rel (0) target = $region49
    $region48: #{bert_crf_forward.1} parent=1 // pred_region
      _
    $region49: #{bert_crf_forward.1} parent=1 // pred_fallthru
      _
    // Predicated region
    $region50: #{bert_crf_forward.1} parent=1 // pred_check
      _
    $region51: #{bert_crf_forward.1} parent=1 // pred_check_branch
      %116 = sbr.rel (0) target = $region53
    $region52: #{bert_crf_forward.1} parent=1 // pred_region
      _
    $region53: #{bert_crf_forward.1} parent=1 // pred_fallthru
      _
    // Predicated region
    $region54: #{bert_crf_forward.1} parent=1 // pred_check
      _
    $region55: #{bert_crf_forward.1} parent=1 // pred_check_branch
      %118 = sbr.rel (0) target = $region57
    $region56: #{bert_crf_forward.1} parent=1 // pred_region
      _
    $region57: #{bert_crf_forward.1} parent=1 // pred_fallthru
      _
    // Predicated region
    $region58: #{bert_crf_forward.1} parent=1 // pred_check
      _
    $region59: #{bert_crf_forward.1} parent=1 // pred_check_branch
      %120 = sbr.rel (0) target = $region61
    $region60: #{bert_crf_forward.1} parent=1 // pred_region
      _
    $region61: #{bert_crf_forward.1} parent=1 // pred_fallthru
      _
    // Predicated region
    $region62: #{bert_crf_forward.1} parent=1 // pred_check
      _
    $region63: #{bert_crf_forward.1} parent=1 // pred_check_branch
      %122 = sbr.rel (0) target = $region65
    $region64: #{bert_crf_forward.1} parent=1 // pred_region
      _
    $region65: #{bert_crf_forward.1} parent=1 // pred_fallthru
      _
    // Predicated region
    $region66: #{bert_crf_forward.1} parent=1 // pred_check
      _
    $region67: #{bert_crf_forward.1} parent=1 // pred_check_branch
      %124 = sbr.rel (0) target = $region69
    $region68: #{bert_crf_forward.1} parent=1 // pred_region
      _
    $region69: #{bert_crf_forward.1} parent=1 // pred_fallthru
      _
    // Predicated region
    $region70: #{bert_crf_forward.1} parent=1 // pred_check
      _
    $region71: #{bert_crf_forward.1} parent=1 // pred_check_branch
      %126 = sbr.rel (0) target = $region73
    $region72: #{bert_crf_forward.1} parent=1 // pred_region
      _
    $region73: #{bert_crf_forward.1} parent=1 // pred_fallthru
      _
    // Predicated region
    $region74: #{bert_crf_forward.1} parent=1 // pred_check
      _
    $region75: #{bert_crf_forward.1} parent=1 // pred_check_branch
      %128 = sbr.rel (0) target = $region77
    $region76: #{bert_crf_forward.1} parent=1 // pred_region
      _
    $region77: #{bert_crf_forward.1} parent=1 // pred_fallthru
      _
    // Predicated region
    $region78: #{bert_crf_forward.1} parent=1 // pred_check
      _
    $region79: #{bert_crf_forward.1} parent=1 // pred_check_branch
      %130 = sbr.rel (0) target = $region81
    $region80: #{bert_crf_forward.1} parent=1 // pred_region
      _
    $region81: #{bert_crf_forward.1} parent=1 // pred_fallthru
      _
    // Predicated region
    $region82: #{bert_crf_forward.1} parent=1 // pred_check
      _
    $region83: #{bert_crf_forward.1} parent=1 // pred_check_branch
      %132 = sbr.rel (0) target = $region85
    $region84: #{bert_crf_forward.1} parent=1 // pred_region
      _
    $region85: #{bert_crf_forward.1} parent=1 // pred_fallthru
      _
    // Predicated region
    $region86: #{bert_crf_forward.1} parent=1 // pred_check
      _
    $region87: #{bert_crf_forward.1} parent=1 // pred_check_branch
      %134 = sbr.rel (0) target = $region89
    $region88: #{bert_crf_forward.1} parent=1 // pred_region
      _
    $region89: #{bert_crf_forward.1} parent=1 // pred_fallthru
      _
    // Predicated region
    $region90: #{bert_crf_forward.1} parent=1 // pred_check
      _
    $region91: #{bert_crf_forward.1} parent=1 // pred_check_branch
      %136 = sbr.rel (0) target = $region93
    $region92: #{bert_crf_forward.1} parent=1 // pred_region
      _
    $region93: #{bert_crf_forward.1} parent=1 // pred_fallthru
      _
    // Predicated region
    $region94: #{bert_crf_forward.1} parent=1 // pred_check
      _
    $region95: #{bert_crf_forward.1} parent=1 // pred_check_branch
      %138 = sbr.rel (0) target = $region97
    $region96: #{bert_crf_forward.1} parent=1 // pred_region
      _
    $region97: #{bert_crf_forward.1} parent=1 // pred_fallthru
      _
    // Predicated region
    $region98: #{bert_crf_forward.1} parent=1 // pred_check
      _
    $region99: #{bert_crf_forward.1} parent=1 // pred_check_branch
      %140 = sbr.rel (0) target = $region101
    $region100: #{bert_crf_forward.1} parent=1 // pred_region
      _
    $region101: #{bert_crf_forward.1} parent=1 // pred_fallthru
      _
    // Predicated region
    $region102: #{bert_crf_forward.1} parent=1 // pred_check
      _
    $region103: #{bert_crf_forward.1} parent=1 // pred_check_branch
      %142 = sbr.rel (0) target = $region105
    $region104: #{bert_crf_forward.1} parent=1 // pred_region
      _
    $region105: #{bert_crf_forward.1} parent=1 // pred_fallthru
      _
    // Predicated region
    $region106: #{bert_crf_forward.1} parent=1 // pred_check
      _
    $region107: #{bert_crf_forward.1} parent=1 // pred_check_branch
      %144 = sbr.rel (0) target = $region109
    $region108: #{bert_crf_forward.1} parent=1 // pred_region
      _
    $region109: #{bert_crf_forward.1} parent=1 // pred_fallthru
      _
    // Predicated region
    $region110: #{bert_crf_forward.1} parent=1 // pred_check
      _
    $region111: #{bert_crf_forward.1} parent=1 // pred_check_branch
      %146 = sbr.rel (0) target = $region113
    $region112: #{bert_crf_forward.1} parent=1 // pred_region
      _
    $region113: #{bert_crf_forward.1} parent=1 // pred_fallthru
      _
    // Predicated region
    $region114: #{bert_crf_forward.1} parent=1 // pred_check
      _
    $region115: #{bert_crf_forward.1} parent=1 // pred_check_branch
      %148 = sbr.rel (0) target = $region117
    $region116: #{bert_crf_forward.1} parent=1 // pred_region
      %149 = dma.done [#allocation3], 32
    $region117: #{bert_crf_forward.1} parent=1 // pred_fallthru
      _
    // Predicated region
    $region118: #{bert_crf_forward.1} parent=1 // pred_check
      _
    $region119: #{bert_crf_forward.1} parent=1 // pred_check_branch
      %151 = sbr.rel (0) target = $region121
    $region120: #{bert_crf_forward.1} parent=1 // pred_region
      %152 = dma.done [#allocation5], 32
    $region121: #{bert_crf_forward.1} parent=1 // pred_fallthru
      _
    // Predicated region
    $region122: #{bert_crf_forward.1} parent=1 // pred_check
      _
    $region123: #{bert_crf_forward.1} parent=1 // pred_check_branch
      %154 = sbr.rel (0) target = $region125
    $region124: #{bert_crf_forward.1} parent=1 // pred_region
      %155 = dma.done [#allocation5], 16
    $region125: #{bert_crf_forward.1} parent=1 // pred_fallthru
      _
    %156 = sfence
    %v157 = vld [vmem:[%s1] sm:$0xff]
    %v158 = vld [vmem:[%s1 + $0x8] sm:$0xff]
    %v159 = vld [vmem:[%s15] sm:$0x1]
    %v160 = vld [vmem:[%s17] sm:$0x1]
    %vm161 = vcmask 261120
    %v162 = vsel %vm161, %v157, 0.0
    %163 = vadd.xlane.f32.xlu0 %v162
    %v164 = vpop.xlane.xlu0 %163
    %v165 = vsel %vm161, %v158, 0.0
    %166 = vadd.xlane.f32.xlu0 %v165
    %v167 = vpop.xlane.xlu0 %166
    %v168 = vrcp.pop 32.0
    %v169 = vmul.f32 %v164, %v168
    %v170 = vmul.f32 %v167, %v168
    %v171 = vsub.f32 %v157, %v169
    %v172 = vsub.f32 %v158, %v170
    %v173 = vmul.f32 %v171, %v171
    %v174 = vmul.f32 %v172, %v172
    %v175 = vsel %vm161, %v173, 0.0
    %176 = vadd.xlane.f32.xlu0 %v175
    %v177 = vpop.xlane.xlu0 %176
    %v178 = vsel %vm161, %v174, 0.0
    %179 = vadd.xlane.f32.xlu0 %v178
    %v180 = vpop.xlane.xlu0 %179
    %v181 = vmul.f32 %v177, %v168
    %v182 = vmul.f32 %v180, %v168
    %v183 = vadd.f32 %v181, 1e-12
    %v184 = vadd.f32 %v182, 1e-12
    %v185 = vrsqrt.pop %v183
    %v186 = vrsqrt.pop %v184
    %v187 = vmul.f32 %v171, %v185
    %v188 = vmul.f32 %v172, %v186
    %v190 = vlaneseq
    %v191 = vshrl.u32 %v190, 7
    %v192 = vsub.s32 0, %v191
    %v193 = vrot.slane %v159, %v192
    %v195 = vmul.f32 %v187, %v193
    %v196 = vmul.f32 %v188, %v193
    %v198 = vlaneseq
    %v199 = vshrl.u32 %v198, 7
    %v200 = vsub.s32 0, %v199
    %v201 = vrot.slane %v160, %v200
    %v203 = vadd.f32 %v195, %v201
    %v204 = vadd.f32 %v196, %v201
    %v205 = vld [vmem:[%s3] sm:$0xff]
    %v206 = vld [vmem:[%s3 + $0x8] sm:$0xff]
    %v207 = vld [vmem:[%s19] sm:$0xff]
    %v208 = vld [vmem:[%s19 + $0x8] sm:$0xff]
    %v209 = vld [vmem:[%s19 + $0x10] sm:$0xff]
    %v210 = vld [vmem:[%s19 + $0x18] sm:$0xff]
    %v211 = vld [vmem:[%s21] sm:$0x1]
    %v213 = vlaneseq
    %v214 = vshrl.u32 %v213, 7
    %v215 = vsub.s32 0, %v214
    %v216 = vrot.slane %v211, %v215
    %v219 = vsel %vm161, %v203, 0
    %v222 = vsel %vm161, %v204, 0
    %224 = vmatprep.subr.mxu0 0.0
    %225 = vmatpush1.msra.mxu0 %v207
    %226 = vmatprep.subr.mxu0 0.0
    %227 = vmatpush1.msra.mxu0 %v208
    %228 = vmatprep.subr.mxu0 0.0
    %229 = vmatpush1.msra.mxu0 %v209
    %230 = vmatprep.subr.mxu0 0.0
    %231 = vmatpush1.msra.mxu0 %v210
    %232 = vmatprep.subr.mxu0 0.0
    %233 = vmatpush1.msra.mxu0 0.0
    %234 = vmatprep.subr.mxu0 0.0
    %235 = vmatpush1.msra.mxu0 0.0
    %236 = vmatprep.subr.mxu0 0.0
    %237 = vmatpush1.msra.mxu0 0.0
    %238 = vmatprep.subr.mxu0 0.0
    %239 = vmatpush1.msra.mxu0 0.0
    %240 = vmatprep.subr.mxu0 0.0
    %241 = vmatpush1.msra.mxu0 0.0
    %242 = vmatprep.subr.mxu0 0.0
    %243 = vmatpush1.msra.mxu0 0.0
    %244 = vmatprep.subr.mxu0 0.0
    %245 = vmatpush1.msra.mxu0 0.0
    %246 = vmatprep.subr.mxu0 0.0
    %247 = vmatpush1.msra.mxu0 0.0
    %248 = vmatprep.subr.mxu0 0.0
    %249 = vmatpush1.msra.mxu0 0.0
    %250 = vmatprep.subr.mxu0 0.0
    %251 = vmatpush1.msra.mxu0 0.0
    %252 = vmatprep.subr.mxu0 0.0
    %253 = vmatpush1.msra.mxu0 0.0
    %254 = vmatprep.subr.mxu0 0.0
    %255 = vmatpush1.msra.mxu0 0.0
    %256 = vmatprep.subr.mxu0 0.0
    %257 = vmatpush1.msra.mxu0 0.0
    %258 = vmatprep.subr.mxu0 0.0
    %259 = vmatpush1.msra.mxu0 0.0
    %260 = vmatprep.subr.mxu0 0.0
    %261 = vmatpush1.msra.mxu0 0.0
    %262 = vmatprep.subr.mxu0 0.0
    %263 = vmatpush1.msra.mxu0 0.0
    %264 = vmatprep.subr.mxu0 0.0
    %265 = vmatpush1.msra.mxu0 0.0
    %266 = vmatprep.subr.mxu0 0.0
    %267 = vmatpush1.msra.mxu0 0.0
    %268 = vmatprep.subr.mxu0 0.0
    %269 = vmatpush1.msra.mxu0 0.0
    %270 = vmatprep.subr.mxu0 0.0
    %271 = vmatpush1.msra.mxu0 0.0
    %272 = vmatprep.subr.mxu0 0.0
    %273 = vmatpush1.msra.mxu0 0.0
    %274 = vmatprep.subr.mxu0 0.0
    %275 = vmatpush1.msra.mxu0 0.0
    %276 = vmatprep.subr.mxu0 0.0
    %277 = vmatpush1.msra.mxu0 0.0
    %278 = vmatprep.subr.mxu0 0.0
    %279 = vmatpush1.msra.mxu0 0.0
    %280 = vmatprep.subr.mxu0 0.0
    %281 = vmatpush1.msra.mxu0 0.0
    %282 = vmatprep.subr.mxu0 0.0
    %283 = vmatpush1.msra.mxu0 0.0
    %284 = vmatprep.subr.mxu0 0.0
    %285 = vmatpush1.msra.mxu0 0.0
    %286 = vmatprep.subr.mxu0 0.0
    %287 = vmatpush1.msra.mxu0 0.0
    %288 = vmatprep.mubr.f32.mxu0 0.0
    %289 = vmatmul.mubr.f32.gmra.mrb[0].mxu0 %v219
    %v290 = vpop.f32.mrb[0].mxu0
    %v291 = vadd.f32 %v216, %v290
    %v292 = vpop.f32.mrb[0].mxu0
    %293 = vmatprep.mubr.f32.mxu0 0.0
    %294 = vmatmul.mubr.f32.gmra.mrb[0].mxu0 %v222
    %v295 = vpop.f32.mrb[0].mxu0
    %v296 = vadd.f32 %v216, %v295
    %v297 = vpop.f32.mrb[0].mxu0
    %298 = vdwg.mxu0
    %v299 = vld [vmem:[%s23] sm:$0xff]
    %v300 = vld [vmem:[%s23 + $0x8] sm:$0xff]
    %v301 = vld [vmem:[%s23 + $0x10] sm:$0xff]
    %v302 = vld [vmem:[%s23 + $0x18] sm:$0xff]
    %v303 = vld [vmem:[%s25] sm:$0xff]
    %v304 = vld [vmem:[%s25 + $0x8] sm:$0xff]
    %v305 = vld [vmem:[%s25 + $0x10] sm:$0xff]
    %v306 = vld [vmem:[%s25 + $0x18] sm:$0xff]
    %308 = vset.pattern.permute.xlu0 0
    %309 = vperm.xlu0 %308, %v303
    %v310 = vpop.permute.xlu0 %309
    %313 = vset.pattern.permute.xlu0 0
    %314 = vperm.xlu0 %313, %v304
    %v315 = vpop.permute.xlu0 %314
    %318 = vset.pattern.permute.xlu0 0
    %319 = vperm.xlu0 %318, %v305
    %v320 = vpop.permute.xlu0 %319
    %323 = vset.pattern.permute.xlu0 0
    %324 = vperm.xlu0 %323, %v306
    %v325 = vpop.permute.xlu0 %324
    %v328 = vsel %vm161, %v299, 0
    %v331 = vsel %vm161, %v300, 0
    %v334 = vsel %vm161, %v301, 0
    %v337 = vsel %vm161, %v302, 0
    %339 = vmatprep.subr.mxu0 0.0
    %340 = vmatpush1.xpose.msra.mxu0 %v219
    %341 = vmatprep.subr.mxu0 0.0
    %342 = vmatpush1.xpose.msra.mxu0 %v222
    %343 = vmatprep.subr.mxu0 0.0
    %344 = vmatpush1.xpose.msra.mxu0 0.0
    %345 = vmatprep.subr.mxu0 0.0
    %346 = vmatpush1.xpose.msra.mxu0 0.0
    %347 = vmatprep.subr.mxu0 0.0
    %348 = vmatpush1.xpose.msra.mxu0 0.0
    %349 = vmatprep.subr.mxu0 0.0
    %350 = vmatpush1.xpose.msra.mxu0 0.0
    %351 = vmatprep.subr.mxu0 0.0
    %352 = vmatpush1.xpose.msra.mxu0 0.0
    %353 = vmatprep.subr.mxu0 0.0
    %354 = vmatpush1.xpose.msra.mxu0 0.0
    %355 = vmatprep.subr.mxu0 0.0
    %356 = vmatpush1.xpose.msra.mxu0 0.0
    %357 = vmatprep.subr.mxu0 0.0
    %358 = vmatpush1.xpose.msra.mxu0 0.0
    %359 = vmatprep.subr.mxu0 0.0
    %360 = vmatpush1.xpose.msra.mxu0 0.0
    %361 = vmatprep.subr.mxu0 0.0
    %362 = vmatpush1.xpose.msra.mxu0 0.0
    %363 = vmatprep.subr.mxu0 0.0
    %364 = vmatpush1.xpose.msra.mxu0 0.0
    %365 = vmatprep.subr.mxu0 0.0
    %366 = vmatpush1.xpose.msra.mxu0 0.0
    %367 = vmatprep.subr.mxu0 0.0
    %368 = vmatpush1.xpose.msra.mxu0 0.0
    %369 = vmatprep.subr.mxu0 0.0
    %370 = vmatpush1.xpose.msra.mxu0 0.0
    %371 = vmatprep.subr.mxu0 0.0
    %372 = vmatpush1.xpose.msra.mxu0 0.0
    %373 = vmatprep.subr.mxu0 0.0
    %374 = vmatpush1.xpose.msra.mxu0 0.0
    %375 = vmatprep.subr.mxu0 0.0
    %376 = vmatpush1.xpose.msra.mxu0 0.0
    %377 = vmatprep.subr.mxu0 0.0
    %378 = vmatpush1.xpose.msra.mxu0 0.0
    %379 = vmatprep.subr.mxu0 0.0
    %380 = vmatpush1.xpose.msra.mxu0 0.0
    %381 = vmatprep.subr.mxu0 0.0
    %382 = vmatpush1.xpose.msra.mxu0 0.0
    %383 = vmatprep.subr.mxu0 0.0
    %384 = vmatpush1.xpose.msra.mxu0 0.0
    %385 = vmatprep.subr.mxu0 0.0
    %386 = vmatpush1.xpose.msra.mxu0 0.0
    %387 = vmatprep.subr.mxu0 0.0
    %388 = vmatpush1.xpose.msra.mxu0 0.0
    %389 = vmatprep.subr.mxu0 0.0
    %390 = vmatpush1.xpose.msra.mxu0 0.0
    %391 = vmatprep.subr.mxu0 0.0
    %392 = vmatpush1.xpose.msra.mxu0 0.0
    %393 = vmatprep.subr.mxu0 0.0
    %394 = vmatpush1.xpose.msra.mxu0 0.0
    %395 = vmatprep.subr.mxu0 0.0
    %396 = vmatpush1.xpose.msra.mxu0 0.0
    %397 = vmatprep.subr.mxu0 0.0
    %398 = vmatpush1.xpose.msra.mxu0 0.0
    %399 = vmatprep.subr.mxu0 0.0
    %400 = vmatpush1.xpose.msra.mxu0 0.0
    %401 = vmatprep.subr.mxu0 0.0
    %402 = vmatpush1.xpose.msra.mxu0 0.0
    %403 = vmatprep.mubr.f32.mxu0 0.0
    %404 = vmatmul.mubr.f32.gmra.mrb[0].mxu0 %v328
    %v405 = vpop.f32.mrb[0].mxu0
    %v406 = vadd.f32 %v310, %v405
    %v407 = vpop.f32.mrb[0].mxu0
    %408 = vmatprep.mubr.f32.mxu0 0.0
    %409 = vmatmul.mubr.f32.gmra.mrb[0].mxu0 %v331
    %v410 = vpop.f32.mrb[0].mxu0
    %v411 = vadd.f32 %v315, %v410
    %v412 = vpop.f32.mrb[0].mxu0
    %413 = vmatprep.mubr.f32.mxu0 0.0
    %414 = vmatmul.mubr.f32.gmra.mrb[0].mxu0 %v334
    %v415 = vpop.f32.mrb[0].mxu0
    %v416 = vadd.f32 %v320, %v415
    %v417 = vpop.f32.mrb[0].mxu0
    %418 = vmatprep.mubr.f32.mxu0 0.0
    %419 = vmatmul.mubr.f32.gmra.mrb[0].mxu0 %v337
    %v420 = vpop.f32.mrb[0].mxu0
    %v421 = vadd.f32 %v325, %v420
    %v422 = vpop.f32.mrb[0].mxu0
    %423 = vdwg.mxu0
    %426 = vrot.lane.b32.xlu0 %v291, 112
    %v427 = vpop.permute.xlu0 %426
    %428 = vrot.lane.b32.xlu0 %v296, 112
    %v429 = vpop.permute.xlu0 %428
    %vm430 = vcmask 130048
    %v431 = vsel %vm430, %v291, 0
    %v433 = vsel %vm430, %v296, 0
    %435 = vmatprep.subr.mxu0 0.0
    %436 = vmatpush1.msra.mxu0 %v406
    %437 = vmatprep.subr.mxu0 0.0
    %438 = vmatpush1.msra.mxu0 %v411
    %439 = vmatprep.subr.mxu0 0.0
    %440 = vmatpush1.msra.mxu0 0.0
    %441 = vmatprep.subr.mxu0 0.0
    %442 = vmatpush1.msra.mxu0 0.0
    %443 = vmatprep.subr.mxu0 0.0
    %444 = vmatpush1.msra.mxu0 0.0
    %445 = vmatprep.subr.mxu0 0.0
    %446 = vmatpush1.msra.mxu0 0.0
    %447 = vmatprep.subr.mxu0 0.0
    %448 = vmatpush1.msra.mxu0 0.0
    %449 = vmatprep.subr.mxu0 0.0
    %450 = vmatpush1.msra.mxu0 0.0
    %451 = vmatprep.subr.mxu0 0.0
    %452 = vmatpush1.msra.mxu0 0.0
    %453 = vmatprep.subr.mxu0 0.0
    %454 = vmatpush1.msra.mxu0 0.0
    %455 = vmatprep.subr.mxu0 0.0
    %456 = vmatpush1.msra.mxu0 0.0
    %457 = vmatprep.subr.mxu0 0.0
    %458 = vmatpush1.msra.mxu0 0.0
    %459 = vmatprep.subr.mxu0 0.0
    %460 = vmatpush1.msra.mxu0 0.0
    %461 = vmatprep.subr.mxu0 0.0
    %462 = vmatpush1.msra.mxu0 0.0
    %463 = vmatprep.subr.mxu0 0.0
    %464 = vmatpush1.msra.mxu0 0.0
    %465 = vmatprep.subr.mxu0 0.0
    %466 = vmatpush1.msra.mxu0 0.0
    %467 = vmatprep.subr.mxu0 0.0
    %468 = vmatpush1.msra.mxu0 0.0
    %469 = vmatprep.subr.mxu0 0.0
    %470 = vmatpush1.msra.mxu0 0.0
    %471 = vmatprep.subr.mxu0 0.0
    %472 = vmatpush1.msra.mxu0 0.0
    %473 = vmatprep.subr.mxu0 0.0
    %474 = vmatpush1.msra.mxu0 0.0
    %475 = vmatprep.subr.mxu0 0.0
    %476 = vmatpush1.msra.mxu0 0.0
    %477 = vmatprep.subr.mxu0 0.0
    %478 = vmatpush1.msra.mxu0 0.0
    %479 = vmatprep.subr.mxu0 0.0
    %480 = vmatpush1.msra.mxu0 0.0
    %481 = vmatprep.subr.mxu0 0.0
    %482 = vmatpush1.msra.mxu0 0.0
    %483 = vmatprep.subr.mxu0 0.0
    %484 = vmatpush1.msra.mxu0 0.0
    %485 = vmatprep.subr.mxu0 0.0
    %486 = vmatpush1.msra.mxu0 0.0
    %487 = vmatprep.subr.mxu0 0.0
    %488 = vmatpush1.msra.mxu0 0.0
    %489 = vmatprep.subr.mxu0 0.0
    %490 = vmatpush1.msra.mxu0 0.0
    %491 = vmatprep.subr.mxu0 0.0
    %492 = vmatpush1.msra.mxu0 0.0
    %493 = vmatprep.subr.mxu0 0.0
    %494 = vmatpush1.msra.mxu0 0.0
    %495 = vmatprep.subr.mxu0 0.0
    %496 = vmatpush1.msra.mxu0 0.0
    %497 = vmatprep.subr.mxu0 0.0
    %498 = vmatpush1.msra.mxu0 0.0
    %499 = vmatprep.mubr.f32.mxu0 0.0
    %500 = vmatmul.mubr.f32.gmra.mrb[0].mxu0 %v431
    %v501 = vpop.f32.mrb[0].mxu0
    %v502 = vadd.f32 0.0, %v501
    %v503 = vpop.f32.mrb[0].mxu0
    %504 = vmatprep.mubr.f32.mxu0 0.0
    %505 = vmatmul.mubr.f32.gmra.mrb[0].mxu0 %v433
    %v506 = vpop.f32.mrb[0].mxu0
    %v507 = vadd.f32 0.0, %v506
    %v508 = vpop.f32.mrb[0].mxu0
    %509 = vdwg.mxu0
    %v510 = vsel %vm430, %v427, 0
    %v512 = vsel %vm430, %v429, 0
    %514 = vmatprep.subr.mxu0 0.0
    %515 = vmatpush1.msra.mxu0 %v416
    %516 = vmatprep.subr.mxu0 0.0
    %517 = vmatpush1.msra.mxu0 %v421
    %518 = vmatprep.subr.mxu0 0.0
    %519 = vmatpush1.msra.mxu0 0.0
    %520 = vmatprep.subr.mxu0 0.0
    %521 = vmatpush1.msra.mxu0 0.0
    %522 = vmatprep.subr.mxu0 0.0
    %523 = vmatpush1.msra.mxu0 0.0
    %524 = vmatprep.subr.mxu0 0.0
    %525 = vmatpush1.msra.mxu0 0.0
    %526 = vmatprep.subr.mxu0 0.0
    %527 = vmatpush1.msra.mxu0 0.0
    %528 = vmatprep.subr.mxu0 0.0
    %529 = vmatpush1.msra.mxu0 0.0
    %530 = vmatprep.subr.mxu0 0.0
    %531 = vmatpush1.msra.mxu0 0.0
    %532 = vmatprep.subr.mxu0 0.0
    %533 = vmatpush1.msra.mxu0 0.0
    %534 = vmatprep.subr.mxu0 0.0
    %535 = vmatpush1.msra.mxu0 0.0
    %536 = vmatprep.subr.mxu0 0.0
    %537 = vmatpush1.msra.mxu0 0.0
    %538 = vmatprep.subr.mxu0 0.0
    %539 = vmatpush1.msra.mxu0 0.0
    %540 = vmatprep.subr.mxu0 0.0
    %541 = vmatpush1.msra.mxu0 0.0
    %542 = vmatprep.subr.mxu0 0.0
    %543 = vmatpush1.msra.mxu0 0.0
    %544 = vmatprep.subr.mxu0 0.0
    %545 = vmatpush1.msra.mxu0 0.0
    %546 = vmatprep.subr.mxu0 0.0
    %547 = vmatpush1.msra.mxu0 0.0
    %548 = vmatprep.subr.mxu0 0.0
    %549 = vmatpush1.msra.mxu0 0.0
    %550 = vmatprep.subr.mxu0 0.0
    %551 = vmatpush1.msra.mxu0 0.0
    %552 = vmatprep.subr.mxu0 0.0
    %553 = vmatpush1.msra.mxu0 0.0
    %554 = vmatprep.subr.mxu0 0.0
    %555 = vmatpush1.msra.mxu0 0.0
    %556 = vmatprep.subr.mxu0 0.0
    %557 = vmatpush1.msra.mxu0 0.0
    %558 = vmatprep.subr.mxu0 0.0
    %559 = vmatpush1.msra.mxu0 0.0
    %560 = vmatprep.subr.mxu0 0.0
    %561 = vmatpush1.msra.mxu0 0.0
    %562 = vmatprep.subr.mxu0 0.0
    %563 = vmatpush1.msra.mxu0 0.0
    %564 = vmatprep.subr.mxu0 0.0
    %565 = vmatpush1.msra.mxu0 0.0
    %566 = vmatprep.subr.mxu0 0.0
    %567 = vmatpush1.msra.mxu0 0.0
    %568 = vmatprep.subr.mxu0 0.0
    %569 = vmatpush1.msra.mxu0 0.0
    %570 = vmatprep.subr.mxu0 0.0
    %571 = vmatpush1.msra.mxu0 0.0
    %572 = vmatprep.subr.mxu0 0.0
    %573 = vmatpush1.msra.mxu0 0.0
    %574 = vmatprep.subr.mxu0 0.0
    %575 = vmatpush1.msra.mxu0 0.0
    %576 = vmatprep.subr.mxu0 0.0
    %577 = vmatpush1.msra.mxu0 0.0
    %578 = vmatprep.mubr.f32.mxu0 0.0
    %579 = vmatmul.mubr.f32.gmra.mrb[0].mxu0 %v510
    %v580 = vpop.f32.mrb[0].mxu0
    %v581 = vadd.f32 0.0, %v580
    %v582 = vpop.f32.mrb[0].mxu0
    %583 = vmatprep.mubr.f32.mxu0 0.0
    %584 = vmatmul.mubr.f32.gmra.mrb[0].mxu0 %v512
    %v585 = vpop.f32.mrb[0].mxu0
    %v586 = vadd.f32 0.0, %v585
    %v587 = vpop.f32.mrb[0].mxu0
    %588 = vdwg.mxu0
    %v589 = vmul.f32 %v502, 0.25
    %v590 = vmul.f32 %v507, 0.25
    %v591 = vmul.f32 %v581, 0.25
    %v592 = vmul.f32 %v586, 0.25
    %v593 = vadd.f32 %v589, %v205
    %v594 = vadd.f32 %v590, %v206
    %v595 = vadd.f32 %v591, %v205
    %v596 = vadd.f32 %v592, %v206
    %v597 = vsel %vm430, %v593, -inf
    %598 = vmax.xlane.f32.xlu0 %v597
    %v599 = vpop.xlane.xlu0 %598
    %v600 = vsel %vm430, %v594, -inf
    %601 = vmax.xlane.f32.xlu0 %v600
    %v602 = vpop.xlane.xlu0 %601
    %v603 = vsel %vm430, %v595, -inf
    %604 = vmax.xlane.f32.xlu0 %v603
    %v605 = vpop.xlane.xlu0 %604
    %v606 = vsel %vm430, %v596, -inf
    %607 = vmax.xlane.f32.xlu0 %v606
    %v608 = vpop.xlane.xlu0 %607
    %v609 = vsub.f32 %v593, %v599
    %v610 = vsub.f32 %v594, %v602
    %v611 = vsub.f32 %v595, %v605
    %v612 = vsub.f32 %v596, %v608
    %v613 = vmul.f32 %v609, 1.442695
    %v614 = vpow.pop %v613
    %v615 = vmul.f32 %v610, 1.442695
    %v616 = vpow.pop %v615
    %v617 = vmul.f32 %v611, 1.442695
    %v618 = vpow.pop %v617
    %v619 = vmul.f32 %v612, 1.442695
    %v620 = vpow.pop %v619
    %v621 = vsel %vm430, %v614, 0.0
    %622 = vadd.xlane.f32.xlu0 %v621
    %v623 = vpop.xlane.xlu0 %622
    %v624 = vsel %vm430, %v616, 0.0
    %625 = vadd.xlane.f32.xlu0 %v624
    %v626 = vpop.xlane.xlu0 %625
    %v627 = vsel %vm430, %v618, 0.0
    %628 = vadd.xlane.f32.xlu0 %v627
    %v629 = vpop.xlane.xlu0 %628
    %v630 = vsel %vm430, %v620, 0.0
    %631 = vadd.xlane.f32.xlu0 %v630
    %v632 = vpop.xlane.xlu0 %631
    %v633 = vrcp.pop %v623
    %v634 = vmul.f32 %v614, %v633
    %v635 = vrcp.pop %v626
    %v636 = vmul.f32 %v616, %v635
    %v637 = vrcp.pop %v629
    %v638 = vmul.f32 %v618, %v637
    %v639 = vrcp.pop %v632
    %v640 = vmul.f32 %v620, %v639
    %641 = vrot.lane.b32.xlu0 %v291, 96
    %v642 = vpop.permute.xlu0 %641
    %643 = vrot.lane.b32.xlu0 %v296, 96
    %v644 = vpop.permute.xlu0 %643
    %v648 = vsel %vm430, %v634, 0
    %v651 = vsel %vm430, %v636, 0
    %653 = vmatprep.subr.mxu0 0.0
    %654 = vmatpush1.msra.mxu0 %v642
    %655 = vmatprep.subr.mxu0 0.0
    %656 = vmatpush1.msra.mxu0 %v644
    %657 = vmatprep.subr.mxu0 0.0
    %658 = vmatpush1.msra.mxu0 0.0
    %659 = vmatprep.subr.mxu0 0.0
    %660 = vmatpush1.msra.mxu0 0.0
    %661 = vmatprep.subr.mxu0 0.0
    %662 = vmatpush1.msra.mxu0 0.0
    %663 = vmatprep.subr.mxu0 0.0
    %664 = vmatpush1.msra.mxu0 0.0
    %665 = vmatprep.subr.mxu0 0.0
    %666 = vmatpush1.msra.mxu0 0.0
    %667 = vmatprep.subr.mxu0 0.0
    %668 = vmatpush1.msra.mxu0 0.0
    %669 = vmatprep.subr.mxu0 0.0
    %670 = vmatpush1.msra.mxu0 0.0
    %671 = vmatprep.subr.mxu0 0.0
    %672 = vmatpush1.msra.mxu0 0.0
    %673 = vmatprep.subr.mxu0 0.0
    %674 = vmatpush1.msra.mxu0 0.0
    %675 = vmatprep.subr.mxu0 0.0
    %676 = vmatpush1.msra.mxu0 0.0
    %677 = vmatprep.subr.mxu0 0.0
    %678 = vmatpush1.msra.mxu0 0.0
    %679 = vmatprep.subr.mxu0 0.0
    %680 = vmatpush1.msra.mxu0 0.0
    %681 = vmatprep.subr.mxu0 0.0
    %682 = vmatpush1.msra.mxu0 0.0
    %683 = vmatprep.subr.mxu0 0.0
    %684 = vmatpush1.msra.mxu0 0.0
    %685 = vmatprep.subr.mxu0 0.0
    %686 = vmatpush1.msra.mxu0 0.0
    %687 = vmatprep.subr.mxu0 0.0
    %688 = vmatpush1.msra.mxu0 0.0
    %689 = vmatprep.subr.mxu0 0.0
    %690 = vmatpush1.msra.mxu0 0.0
    %691 = vmatprep.subr.mxu0 0.0
    %692 = vmatpush1.msra.mxu0 0.0
    %693 = vmatprep.subr.mxu0 0.0
    %694 = vmatpush1.msra.mxu0 0.0
    %695 = vmatprep.subr.mxu0 0.0
    %696 = vmatpush1.msra.mxu0 0.0
    %697 = vmatprep.subr.mxu0 0.0
    %698 = vmatpush1.msra.mxu0 0.0
    %699 = vmatprep.subr.mxu0 0.0
    %700 = vmatpush1.msra.mxu0 0.0
    %701 = vmatprep.subr.mxu0 0.0
    %702 = vmatpush1.msra.mxu0 0.0
    %703 = vmatprep.subr.mxu0 0.0
    %704 = vmatpush1.msra.mxu0 0.0
    %705 = vmatprep.subr.mxu0 0.0
    %706 = vmatpush1.msra.mxu0 0.0
    %707 = vmatprep.subr.mxu0 0.0
    %708 = vmatpush1.msra.mxu0 0.0
    %709 = vmatprep.subr.mxu0 0.0
    %710 = vmatpush1.msra.mxu0 0.0
    %711 = vmatprep.subr.mxu0 0.0
    %712 = vmatpush1.msra.mxu0 0.0
    %713 = vmatprep.subr.mxu0 0.0
    %714 = vmatpush1.msra.mxu0 0.0
    %715 = vmatprep.subr.mxu0 0.0
    %716 = vmatpush1.msra.mxu0 0.0
    %717 = vmatprep.mubr.f32.mxu0 0.0
    %718 = vmatmul.mubr.f32.gmra.mrb[0].mxu0 %v648
    %v719 = vpop.f32.mrb[0].mxu0
    %v720 = vadd.f32 0.0, %v719
    %v721 = vpop.f32.mrb[0].mxu0
    %722 = vmatprep.mubr.f32.mxu0 0.0
    %723 = vmatmul.mubr.f32.gmra.mrb[0].mxu0 %v651
    %v724 = vpop.f32.mrb[0].mxu0
    %v725 = vadd.f32 0.0, %v724
    %v726 = vpop.f32.mrb[0].mxu0
    %727 = vdwg.mxu0
    %728 = vrot.lane.b32.xlu0 %v427, 96
    %v729 = vpop.permute.xlu0 %728
    %730 = vrot.lane.b32.xlu0 %v429, 96
    %v731 = vpop.permute.xlu0 %730
    %v735 = vsel %vm430, %v638, 0
    %v738 = vsel %vm430, %v640, 0
    %740 = vmatprep.subr.mxu0 0.0
    %741 = vmatpush1.msra.mxu0 %v729
    %742 = vmatprep.subr.mxu0 0.0
    %743 = vmatpush1.msra.mxu0 %v731
    %744 = vmatprep.subr.mxu0 0.0
    %745 = vmatpush1.msra.mxu0 0.0
    %746 = vmatprep.subr.mxu0 0.0
    %747 = vmatpush1.msra.mxu0 0.0
    %748 = vmatprep.subr.mxu0 0.0
    %749 = vmatpush1.msra.mxu0 0.0
    %750 = vmatprep.subr.mxu0 0.0
    %751 = vmatpush1.msra.mxu0 0.0
    %752 = vmatprep.subr.mxu0 0.0
    %753 = vmatpush1.msra.mxu0 0.0
    %754 = vmatprep.subr.mxu0 0.0
    %755 = vmatpush1.msra.mxu0 0.0
    %756 = vmatprep.subr.mxu0 0.0
    %757 = vmatpush1.msra.mxu0 0.0
    %758 = vmatprep.subr.mxu0 0.0
    %759 = vmatpush1.msra.mxu0 0.0
    %760 = vmatprep.subr.mxu0 0.0
    %761 = vmatpush1.msra.mxu0 0.0
    %762 = vmatprep.subr.mxu0 0.0
    %763 = vmatpush1.msra.mxu0 0.0
    %764 = vmatprep.subr.mxu0 0.0
    %765 = vmatpush1.msra.mxu0 0.0
    %766 = vmatprep.subr.mxu0 0.0
    %767 = vmatpush1.msra.mxu0 0.0
    %768 = vmatprep.subr.mxu0 0.0
    %769 = vmatpush1.msra.mxu0 0.0
    %770 = vmatprep.subr.mxu0 0.0
    %771 = vmatpush1.msra.mxu0 0.0
    %772 = vmatprep.subr.mxu0 0.0
    %773 = vmatpush1.msra.mxu0 0.0
    %774 = vmatprep.subr.mxu0 0.0
    %775 = vmatpush1.msra.mxu0 0.0
    %776 = vmatprep.subr.mxu0 0.0
    %777 = vmatpush1.msra.mxu0 0.0
    %778 = vmatprep.subr.mxu0 0.0
    %779 = vmatpush1.msra.mxu0 0.0
    %780 = vmatprep.subr.mxu0 0.0
    %781 = vmatpush1.msra.mxu0 0.0
    %782 = vmatprep.subr.mxu0 0.0
    %783 = vmatpush1.msra.mxu0 0.0
    %784 = vmatprep.subr.mxu0 0.0
    %785 = vmatpush1.msra.mxu0 0.0
    %786 = vmatprep.subr.mxu0 0.0
    %787 = vmatpush1.msra.mxu0 0.0
    %788 = vmatprep.subr.mxu0 0.0
    %789 = vmatpush1.msra.mxu0 0.0
    %790 = vmatprep.subr.mxu0 0.0
    %791 = vmatpush1.msra.mxu0 0.0
    %792 = vmatprep.subr.mxu0 0.0
    %793 = vmatpush1.msra.mxu0 0.0
    %794 = vmatprep.subr.mxu0 0.0
    %795 = vmatpush1.msra.mxu0 0.0
    %796 = vmatprep.subr.mxu0 0.0
    %797 = vmatpush1.msra.mxu0 0.0
    %798 = vmatprep.subr.mxu0 0.0
    %799 = vmatpush1.msra.mxu0 0.0
    %800 = vmatprep.subr.mxu0 0.0
    %801 = vmatpush1.msra.mxu0 0.0
    %802 = vmatprep.subr.mxu0 0.0
    %803 = vmatpush1.msra.mxu0 0.0
    %804 = vmatprep.mubr.f32.mxu0 0.0
    %805 = vmatmul.mubr.f32.gmra.mrb[0].mxu0 %v735
    %v806 = vpop.f32.mrb[0].mxu0
    %v807 = vadd.f32 0.0, %v806
    %v808 = vpop.f32.mrb[0].mxu0
    %809 = vmatprep.mubr.f32.mxu0 0.0
    %810 = vmatmul.mubr.f32.gmra.mrb[0].mxu0 %v738
    %v811 = vpop.f32.mrb[0].mxu0
    %v812 = vadd.f32 0.0, %v811
    %v813 = vpop.f32.mrb[0].mxu0
    %814 = vdwg.mxu0
    %v815 = vld [vmem:[%s27] sm:$0xff]
    %v816 = vld [vmem:[%s27 + $0x8] sm:$0xff]
    %v817 = vld [vmem:[%s27 + $0x10] sm:$0xff]
    %v818 = vld [vmem:[%s27 + $0x18] sm:$0xff]
    %v820 = vsel %vm430, %v720, 0
    %v823 = vsel %vm430, %v725, 0
    %825 = vmatprep.subr.mxu0 0.0
    %826 = vmatpush1.msra.mxu0 %v815
    %827 = vmatprep.subr.mxu0 0.0
    %828 = vmatpush1.msra.mxu0 %v816
    %829 = vmatprep.subr.mxu0 0.0
    %830 = vmatpush1.msra.mxu0 0.0
    %831 = vmatprep.subr.mxu0 0.0
    %832 = vmatpush1.msra.mxu0 0.0
    %833 = vmatprep.subr.mxu0 0.0
    %834 = vmatpush1.msra.mxu0 0.0
    %835 = vmatprep.subr.mxu0 0.0
    %836 = vmatpush1.msra.mxu0 0.0
    %837 = vmatprep.subr.mxu0 0.0
    %838 = vmatpush1.msra.mxu0 0.0
    %839 = vmatprep.subr.mxu0 0.0
    %840 = vmatpush1.msra.mxu0 0.0
    %841 = vmatprep.subr.mxu0 0.0
    %842 = vmatpush1.msra.mxu0 0.0
    %843 = vmatprep.subr.mxu0 0.0
    %844 = vmatpush1.msra.mxu0 0.0
    %845 = vmatprep.subr.mxu0 0.0
    %846 = vmatpush1.msra.mxu0 0.0
    %847 = vmatprep.subr.mxu0 0.0
    %848 = vmatpush1.msra.mxu0 0.0
    %849 = vmatprep.subr.mxu0 0.0
    %850 = vmatpush1.msra.mxu0 0.0
    %851 = vmatprep.subr.mxu0 0.0
    %852 = vmatpush1.msra.mxu0 0.0
    %853 = vmatprep.subr.mxu0 0.0
    %854 = vmatpush1.msra.mxu0 0.0
    %855 = vmatprep.subr.mxu0 0.0
    %856 = vmatpush1.msra.mxu0 0.0
    %857 = vmatprep.subr.mxu0 0.0
    %858 = vmatpush1.msra.mxu0 0.0
    %859 = vmatprep.subr.mxu0 0.0
    %860 = vmatpush1.msra.mxu0 0.0
    %861 = vmatprep.subr.mxu0 0.0
    %862 = vmatpush1.msra.mxu0 0.0
    %863 = vmatprep.subr.mxu0 0.0
    %864 = vmatpush1.msra.mxu0 0.0
    %865 = vmatprep.subr.mxu0 0.0
    %866 = vmatpush1.msra.mxu0 0.0
    %867 = vmatprep.subr.mxu0 0.0
    %868 = vmatpush1.msra.mxu0 0.0
    %869 = vmatprep.subr.mxu0 0.0
    %870 = vmatpush1.msra.mxu0 0.0
    %871 = vmatprep.subr.mxu0 0.0
    %872 = vmatpush1.msra.mxu0 0.0
    %873 = vmatprep.subr.mxu0 0.0
    %874 = vmatpush1.msra.mxu0 0.0
    %875 = vmatprep.subr.mxu0 0.0
    %876 = vmatpush1.msra.mxu0 0.0
    %877 = vmatprep.subr.mxu0 0.0
    %878 = vmatpush1.msra.mxu0 0.0
    %879 = vmatprep.subr.mxu0 0.0
    %880 = vmatpush1.msra.mxu0 0.0
    %881 = vmatprep.subr.mxu0 0.0
    %882 = vmatpush1.msra.mxu0 0.0
    %883 = vmatprep.subr.mxu0 0.0
    %884 = vmatpush1.msra.mxu0 0.0
    %885 = vmatprep.subr.mxu0 0.0
    %886 = vmatpush1.msra.mxu0 0.0
    %887 = vmatprep.subr.mxu0 0.0
    %888 = vmatpush1.msra.mxu0 0.0
    %889 = vmatprep.mubr.f32.mxu0 0.0
    %890 = vmatmul.mubr.f32.gmra.mrb[0].mxu0 %v820
    %v891 = vpop.f32.mrb[0].mxu0
    %v892 = vadd.f32 0.0, %v891
    %v893 = vpop.f32.mrb[0].mxu0
    %894 = vmatprep.mubr.f32.mxu0 0.0
    %895 = vmatmul.mubr.f32.gmra.mrb[0].mxu0 %v823
    %v896 = vpop.f32.mrb[0].mxu0
    %v897 = vadd.f32 0.0, %v896
    %v898 = vpop.f32.mrb[0].mxu0
    %899 = vdwg.mxu0
    %v901 = vsel %vm430, %v807, 0
    %v904 = vsel %vm430, %v812, 0
    %906 = vmatprep.subr.mxu0 0.0
    %907 = vmatpush1.msra.mxu0 %v817
    %908 = vmatprep.subr.mxu0 0.0
    %909 = vmatpush1.msra.mxu0 %v818
    %910 = vmatprep.subr.mxu0 0.0
    %911 = vmatpush1.msra.mxu0 0.0
    %912 = vmatprep.subr.mxu0 0.0
    %913 = vmatpush1.msra.mxu0 0.0
    %914 = vmatprep.subr.mxu0 0.0
    %915 = vmatpush1.msra.mxu0 0.0
    %916 = vmatprep.subr.mxu0 0.0
    %917 = vmatpush1.msra.mxu0 0.0
    %918 = vmatprep.subr.mxu0 0.0
    %919 = vmatpush1.msra.mxu0 0.0
    %920 = vmatprep.subr.mxu0 0.0
    %921 = vmatpush1.msra.mxu0 0.0
    %922 = vmatprep.subr.mxu0 0.0
    %923 = vmatpush1.msra.mxu0 0.0
    %924 = vmatprep.subr.mxu0 0.0
    %925 = vmatpush1.msra.mxu0 0.0
    %926 = vmatprep.subr.mxu0 0.0
    %927 = vmatpush1.msra.mxu0 0.0
    %928 = vmatprep.subr.mxu0 0.0
    %929 = vmatpush1.msra.mxu0 0.0
    %930 = vmatprep.subr.mxu0 0.0
    %931 = vmatpush1.msra.mxu0 0.0
    %932 = vmatprep.subr.mxu0 0.0
    %933 = vmatpush1.msra.mxu0 0.0
    %934 = vmatprep.subr.mxu0 0.0
    %935 = vmatpush1.msra.mxu0 0.0
    %936 = vmatprep.subr.mxu0 0.0
    %937 = vmatpush1.msra.mxu0 0.0
    %938 = vmatprep.subr.mxu0 0.0
    %939 = vmatpush1.msra.mxu0 0.0
    %940 = vmatprep.subr.mxu0 0.0
    %941 = vmatpush1.msra.mxu0 0.0
    %942 = vmatprep.subr.mxu0 0.0
    %943 = vmatpush1.msra.mxu0 0.0
    %944 = vmatprep.subr.mxu0 0.0
    %945 = vmatpush1.msra.mxu0 0.0
    %946 = vmatprep.subr.mxu0 0.0
    %947 = vmatpush1.msra.mxu0 0.0
    %948 = vmatprep.subr.mxu0 0.0
    %949 = vmatpush1.msra.mxu0 0.0
    %950 = vmatprep.subr.mxu0 0.0
    %951 = vmatpush1.msra.mxu0 0.0
    %952 = vmatprep.subr.mxu0 0.0
    %953 = vmatpush1.msra.mxu0 0.0
    %954 = vmatprep.subr.mxu0 0.0
    %955 = vmatpush1.msra.mxu0 0.0
    %956 = vmatprep.subr.mxu0 0.0
    %957 = vmatpush1.msra.mxu0 0.0
    %958 = vmatprep.subr.mxu0 0.0
    %959 = vmatpush1.msra.mxu0 0.0
    %960 = vmatprep.subr.mxu0 0.0
    %961 = vmatpush1.msra.mxu0 0.0
    %962 = vmatprep.subr.mxu0 0.0
    %963 = vmatpush1.msra.mxu0 0.0
    %964 = vmatprep.subr.mxu0 0.0
    %965 = vmatpush1.msra.mxu0 0.0
    %966 = vmatprep.subr.mxu0 0.0
    %967 = vmatpush1.msra.mxu0 0.0
    %968 = vmatprep.subr.mxu0 0.0
    %969 = vmatpush1.msra.mxu0 0.0
    %970 = vmatprep.mubr.f32.mxu0 0.0
    %971 = vmatmul.mubr.f32.gmra.mrb[0].mxu0 %v901
    %v972 = vpop.f32.mrb[0].mxu0
    %v973 = vadd.f32 0.0, %v972
    %v974 = vpop.f32.mrb[0].mxu0
    %975 = vmatprep.mubr.f32.mxu0 0.0
    %976 = vmatmul.mubr.f32.gmra.mrb[0].mxu0 %v904
    %v977 = vpop.f32.mrb[0].mxu0
    %v978 = vadd.f32 0.0, %v977
    %v979 = vpop.f32.mrb[0].mxu0
    %980 = vdwg.mxu0
    %v981 = vsel %vm161, %v892, 0.0
    %v982 = vsel %vm161, %v973, 0.0
    %v983 = vadd.f32 %v981, %v982
    %v984 = vsel %vm161, %v897, 0.0
    %v985 = vsel %vm161, %v978, 0.0
    %v986 = vadd.f32 %v984, %v985
    %v987 = vld [vmem:[%s29] sm:$0x1]
    %v989 = vlaneseq
    %v990 = vshrl.u32 %v989, 7
    %v991 = vsub.s32 0, %v990
    %v992 = vrot.slane %v987, %v991
    %v994 = vadd.f32 %v983, %v992
    %v995 = vadd.f32 %v986, %v992
    %v996 = vadd.f32 %v994, %v203
    %v997 = vadd.f32 %v995, %v204
    %v998 = vld [vmem:[%s31] sm:$0x1]
    %v999 = vld [vmem:[%s33] sm:$0x1]
    %v1000 = vsel %vm161, %v996, 0.0
    %1001 = vadd.xlane.f32.xlu0 %v1000
    %v1002 = vpop.xlane.xlu0 %1001
    %v1003 = vsel %vm161, %v997, 0.0
    %1004 = vadd.xlane.f32.xlu0 %v1003
    %v1005 = vpop.xlane.xlu0 %1004
    %v1006 = vmul.f32 %v1002, %v168
    %v1007 = vmul.f32 %v1005, %v168
    %v1008 = vsub.f32 %v996, %v1006
    %v1009 = vsub.f32 %v997, %v1007
    %v1010 = vmul.f32 %v1008, %v1008
    %v1011 = vmul.f32 %v1009, %v1009
    %v1012 = vsel %vm161, %v1010, 0.0
    %1013 = vadd.xlane.f32.xlu0 %v1012
    %v1014 = vpop.xlane.xlu0 %1013
    %v1015 = vsel %vm161, %v1011, 0.0
    %1016 = vadd.xlane.f32.xlu0 %v1015
    %v1017 = vpop.xlane.xlu0 %1016
    %v1018 = vmul.f32 %v1014, %v168
    %v1019 = vmul.f32 %v1017, %v168
    %v1020 = vadd.f32 %v1018, 1e-12
    %v1021 = vadd.f32 %v1019, 1e-12
    %v1022 = vrsqrt.pop %v1020
    %v1023 = vrsqrt.pop %v1021
    %v1024 = vmul.f32 %v1008, %v1022
    %v1025 = vmul.f32 %v1009, %v1023
    %v1027 = vlaneseq
    %v1028 = vshrl.u32 %v1027, 7
    %v1029 = vsub.s32 0, %v1028
    %v1030 = vrot.slane %v998, %v1029
    %v1032 = vmul.f32 %v1024, %v1030
    %v1033 = vmul.f32 %v1025, %v1030
    %v1035 = vlaneseq
    %v1036 = vshrl.u32 %v1035, 7
    %v1037 = vsub.s32 0, %v1036
    %v1038 = vrot.slane %v999, %v1037
    %v1040 = vadd.f32 %v1032, %v1038
    %v1041 = vadd.f32 %v1033, %v1038
    %v1042 = vld [vmem:[%s35] sm:$0xff]
    %v1043 = vld [vmem:[%s35 + $0x8] sm:$0xff]
    %v1044 = vld [vmem:[%s35 + $0x10] sm:$0xff]
    %v1045 = vld [vmem:[%s35 + $0x18] sm:$0xff]
    %v1046 = vld [vmem:[%s37] sm:$0x1]
    %v1048 = vlaneseq
    %v1049 = vshrl.u32 %v1048, 7
    %v1050 = vsub.s32 0, %v1049
    %v1051 = vrot.slane %v1046, %v1050
    %v1054 = vsel %vm161, %v1040, 0
    %v1057 = vsel %vm161, %v1041, 0
    %1059 = vmatprep.subr.mxu0 0.0
    %1060 = vmatpush1.msra.mxu0 %v1042
    %1061 = vmatprep.subr.mxu0 0.0
    %1062 = vmatpush1.msra.mxu0 %v1043
    %1063 = vmatprep.subr.mxu0 0.0
    %1064 = vmatpush1.msra.mxu0 %v1044
    %1065 = vmatprep.subr.mxu0 0.0
    %1066 = vmatpush1.msra.mxu0 %v1045
    %1067 = vmatprep.subr.mxu0 0.0
    %1068 = vmatpush1.msra.mxu0 0.0
    %1069 = vmatprep.subr.mxu0 0.0
    %1070 = vmatpush1.msra.mxu0 0.0
    %1071 = vmatprep.subr.mxu0 0.0
    %1072 = vmatpush1.msra.mxu0 0.0
    %1073 = vmatprep.subr.mxu0 0.0
    %1074 = vmatpush1.msra.mxu0 0.0
    %1075 = vmatprep.subr.mxu0 0.0
    %1076 = vmatpush1.msra.mxu0 0.0
    %1077 = vmatprep.subr.mxu0 0.0
    %1078 = vmatpush1.msra.mxu0 0.0
    %1079 = vmatprep.subr.mxu0 0.0
    %1080 = vmatpush1.msra.mxu0 0.0
    %1081 = vmatprep.subr.mxu0 0.0
    %1082 = vmatpush1.msra.mxu0 0.0
    %1083 = vmatprep.subr.mxu0 0.0
    %1084 = vmatpush1.msra.mxu0 0.0
    %1085 = vmatprep.subr.mxu0 0.0
    %1086 = vmatpush1.msra.mxu0 0.0
    %1087 = vmatprep.subr.mxu0 0.0
    %1088 = vmatpush1.msra.mxu0 0.0
    %1089 = vmatprep.subr.mxu0 0.0
    %1090 = vmatpush1.msra.mxu0 0.0
    %1091 = vmatprep.subr.mxu0 0.0
    %1092 = vmatpush1.msra.mxu0 0.0
    %1093 = vmatprep.subr.mxu0 0.0
    %1094 = vmatpush1.msra.mxu0 0.0
    %1095 = vmatprep.subr.mxu0 0.0
    %1096 = vmatpush1.msra.mxu0 0.0
    %1097 = vmatprep.subr.mxu0 0.0
    %1098 = vmatpush1.msra.mxu0 0.0
    %1099 = vmatprep.subr.mxu0 0.0
    %1100 = vmatpush1.msra.mxu0 0.0
    %1101 = vmatprep.subr.mxu0 0.0
    %1102 = vmatpush1.msra.mxu0 0.0
    %1103 = vmatprep.subr.mxu0 0.0
    %1104 = vmatpush1.msra.mxu0 0.0
    %1105 = vmatprep.subr.mxu0 0.0
    %1106 = vmatpush1.msra.mxu0 0.0
    %1107 = vmatprep.subr.mxu0 0.0
    %1108 = vmatpush1.msra.mxu0 0.0
    %1109 = vmatprep.subr.mxu0 0.0
    %1110 = vmatpush1.msra.mxu0 0.0
    %1111 = vmatprep.subr.mxu0 0.0
    %1112 = vmatpush1.msra.mxu0 0.0
    %1113 = vmatprep.subr.mxu0 0.0
    %1114 = vmatpush1.msra.mxu0 0.0
    %1115 = vmatprep.subr.mxu0 0.0
    %1116 = vmatpush1.msra.mxu0 0.0
    %1117 = vmatprep.subr.mxu0 0.0
    %1118 = vmatpush1.msra.mxu0 0.0
    %1119 = vmatprep.subr.mxu0 0.0
    %1120 = vmatpush1.msra.mxu0 0.0
    %1121 = vmatprep.subr.mxu0 0.0
    %1122 = vmatpush1.msra.mxu0 0.0
    %1123 = vmatprep.mubr.f32.mxu0 0.0
    %1124 = vmatmul.mubr.f32.gmra.mrb[0].mxu0 %v1054
    %v1125 = vpop.f32.mrb[0].mxu0
    %v1126 = vadd.f32 %v1051, %v1125
    %v1127 = vpop.f32.mrb[0].mxu0
    %1128 = vmatprep.mubr.f32.mxu0 0.0
    %1129 = vmatmul.mubr.f32.gmra.mrb[0].mxu0 %v1057
    %v1130 = vpop.f32.mrb[0].mxu0
    %v1131 = vadd.f32 %v1051, %v1130
    %v1132 = vpop.f32.mrb[0].mxu0
    %1133 = vdwg.mxu0
    %v1134 = vmul.f32 %v1126, 0.5
    %v1135 = vmul.f32 %v1131, 0.5
    %v1136 = vmul.f32 %v1126, 0.044715
    %v1137 = vmul.f32 %v1131, 0.044715
    %v1138 = vmul.f32 %v1136, %v1126
    %v1139 = vmul.f32 %v1137, %v1131
    %v1140 = vmul.f32 %v1138, %v1126
    %v1141 = vmul.f32 %v1139, %v1131
    %v1142 = vadd.f32 %v1126, %v1140
    %v1143 = vadd.f32 %v1131, %v1141
    %v1144 = vmul.f32 %v1142, 0.7978846
    %v1145 = vmul.f32 %v1143, 0.7978846
    %v1146 = vtanh.pop %v1144
    %v1147 = vtanh.pop %v1145
    %v1148 = vadd.f32 %v1146, 1.0
    %v1149 = vadd.f32 %v1147, 1.0
    %v1150 = vmul.f32 %v1134, %v1148
    %v1151 = vmul.f32 %v1135, %v1149
    %v1152 = vld [vmem:[%s39] sm:$0xff]
    %v1153 = vld [vmem:[%s39 + $0x8] sm:$0xff]
    %v1154 = vld [vmem:[%s39 + $0x10] sm:$0xff]
    %v1155 = vld [vmem:[%s39 + $0x18] sm:$0xff]
    %v1156 = vld [vmem:[%s39 + $0x20] sm:$0xff]
    %v1157 = vld [vmem:[%s39 + $0x28] sm:$0xff]
    %v1158 = vld [vmem:[%s39 + $0x30] sm:$0xff]
    %v1159 = vld [vmem:[%s39 + $0x38] sm:$0xff]
    %v1160 = vld [vmem:[%s41] sm:$0x1]
    %v1162 = vlaneseq
    %v1163 = vshrl.u32 %v1162, 7
    %v1164 = vsub.s32 0, %v1163
    %v1165 = vrot.slane %v1160, %v1164
    %vm1167 = vcmask 523264
    %v1169 = vsel %vm1167, %v1150, 0
    %v1172 = vsel %vm1167, %v1151, 0
    %1174 = vmatprep.subr.mxu0 0.0
    %1175 = vmatpush1.msra.mxu0 %v1152
    %1176 = vmatprep.subr.mxu0 0.0
    %1177 = vmatpush1.msra.mxu0 %v1153
    %1178 = vmatprep.subr.mxu0 0.0
    %1179 = vmatpush1.msra.mxu0 %v1154
    %1180 = vmatprep.subr.mxu0 0.0
    %1181 = vmatpush1.msra.mxu0 %v1155
    %1182 = vmatprep.subr.mxu0 0.0
    %1183 = vmatpush1.msra.mxu0 %v1156
    %1184 = vmatprep.subr.mxu0 0.0
    %1185 = vmatpush1.msra.mxu0 %v1157
    %1186 = vmatprep.subr.mxu0 0.0
    %1187 = vmatpush1.msra.mxu0 %v1158
    %1188 = vmatprep.subr.mxu0 0.0
    %1189 = vmatpush1.msra.mxu0 %v1159
    %1190 = vmatprep.subr.mxu0 0.0
    %1191 = vmatpush1.msra.mxu0 0.0
    %1192 = vmatprep.subr.mxu0 0.0
    %1193 = vmatpush1.msra.mxu0 0.0
    %1194 = vmatprep.subr.mxu0 0.0
    %1195 = vmatpush1.msra.mxu0 0.0
    %1196 = vmatprep.subr.mxu0 0.0
    %1197 = vmatpush1.msra.mxu0 0.0
    %1198 = vmatprep.subr.mxu0 0.0
    %1199 = vmatpush1.msra.mxu0 0.0
    %1200 = vmatprep.subr.mxu0 0.0
    %1201 = vmatpush1.msra.mxu0 0.0
    %1202 = vmatprep.subr.mxu0 0.0
    %1203 = vmatpush1.msra.mxu0 0.0
    %1204 = vmatprep.subr.mxu0 0.0
    %1205 = vmatpush1.msra.mxu0 0.0
    %1206 = vmatprep.subr.mxu0 0.0
    %1207 = vmatpush1.msra.mxu0 0.0
    %1208 = vmatprep.subr.mxu0 0.0
    %1209 = vmatpush1.msra.mxu0 0.0
    %1210 = vmatprep.subr.mxu0 0.0
    %1211 = vmatpush1.msra.mxu0 0.0
    %1212 = vmatprep.subr.mxu0 0.0
    %1213 = vmatpush1.msra.mxu0 0.0
    %1214 = vmatprep.subr.mxu0 0.0
    %1215 = vmatpush1.msra.mxu0 0.0
    %1216 = vmatprep.subr.mxu0 0.0
    %1217 = vmatpush1.msra.mxu0 0.0
    %1218 = vmatprep.subr.mxu0 0.0
    %1219 = vmatpush1.msra.mxu0 0.0
    %1220 = vmatprep.subr.mxu0 0.0
    %1221 = vmatpush1.msra.mxu0 0.0
    %1222 = vmatprep.subr.mxu0 0.0
    %1223 = vmatpush1.msra.mxu0 0.0
    %1224 = vmatprep.subr.mxu0 0.0
    %1225 = vmatpush1.msra.mxu0 0.0
    %1226 = vmatprep.subr.mxu0 0.0
    %1227 = vmatpush1.msra.mxu0 0.0
    %1228 = vmatprep.subr.mxu0 0.0
    %1229 = vmatpush1.msra.mxu0 0.0
    %1230 = vmatprep.subr.mxu0 0.0
    %1231 = vmatpush1.msra.mxu0 0.0
    %1232 = vmatprep.subr.mxu0 0.0
    %1233 = vmatpush1.msra.mxu0 0.0
    %1234 = vmatprep.subr.mxu0 0.0
    %1235 = vmatpush1.msra.mxu0 0.0
    %1236 = vmatprep.subr.mxu0 0.0
    %1237 = vmatpush1.msra.mxu0 0.0
    %1238 = vmatprep.mubr.f32.mxu0 0.0
    %1239 = vmatmul.mubr.f32.gmra.mrb[0].mxu0 %v1169
    %v1240 = vpop.f32.mrb[0].mxu0
    %v1241 = vadd.f32 %v1165, %v1240
    %v1242 = vpop.f32.mrb[0].mxu0
    %1243 = vmatprep.mubr.f32.mxu0 0.0
    %1244 = vmatmul.mubr.f32.gmra.mrb[0].mxu0 %v1172
    %v1245 = vpop.f32.mrb[0].mxu0
    %v1246 = vadd.f32 %v1165, %v1245
    %v1247 = vpop.f32.mrb[0].mxu0
    %1248 = vdwg.mxu0
    %v1249 = vadd.f32 %v1241, %v1040
    %v1250 = vadd.f32 %v1246, %v1041
    %v1251 = vld [vmem:[%s43] sm:$0x1]
    %v1252 = vld [vmem:[%s45] sm:$0x1]
    %v1253 = vsel %vm161, %v1249, 0.0
    %1254 = vadd.xlane.f32.xlu0 %v1253
    %v1255 = vpop.xlane.xlu0 %1254
    %v1256 = vsel %vm161, %v1250, 0.0
    %1257 = vadd.xlane.f32.xlu0 %v1256
    %v1258 = vpop.xlane.xlu0 %1257
    %v1259 = vmul.f32 %v1255, %v168
    %v1260 = vmul.f32 %v1258, %v168
    %v1261 = vsub.f32 %v1249, %v1259
    %v1262 = vsub.f32 %v1250, %v1260
    %v1263 = vmul.f32 %v1261, %v1261
    %v1264 = vmul.f32 %v1262, %v1262
    %v1265 = vsel %vm161, %v1263, 0.0
    %1266 = vadd.xlane.f32.xlu0 %v1265
    %v1267 = vpop.xlane.xlu0 %1266
    %v1268 = vsel %vm161, %v1264, 0.0
    %1269 = vadd.xlane.f32.xlu0 %v1268
    %v1270 = vpop.xlane.xlu0 %1269
    %v1271 = vmul.f32 %v1267, %v168
    %v1272 = vmul.f32 %v1270, %v168
    %v1273 = vadd.f32 %v1271, 1e-12
    %v1274 = vadd.f32 %v1272, 1e-12
    %v1275 = vrsqrt.pop %v1273
    %v1276 = vrsqrt.pop %v1274
    %v1277 = vmul.f32 %v1261, %v1275
    %v1278 = vmul.f32 %v1262, %v1276
    %v1280 = vlaneseq
    %v1281 = vshrl.u32 %v1280, 7
    %v1282 = vsub.s32 0, %v1281
    %v1283 = vrot.slane %v1251, %v1282
    %v1285 = vmul.f32 %v1277, %v1283
    %v1286 = vmul.f32 %v1278, %v1283
    %v1288 = vlaneseq
    %v1289 = vshrl.u32 %v1288, 7
    %v1290 = vsub.s32 0, %v1289
    %v1291 = vrot.slane %v1252, %v1290
    %v1293 = vadd.f32 %v1285, %v1291
    %v1294 = vadd.f32 %v1286, %v1291
    %s1295 = scalar_lea.vmem %s19, 32
    %v1296 = vld [vmem:[%s1295] sm:$0xff]
    %v1297 = vld [vmem:[%s1295 + $0x8] sm:$0xff]
    %v1298 = vld [vmem:[%s1295 + $0x10] sm:$0xff]
    %v1299 = vld [vmem:[%s1295 + $0x18] sm:$0xff]
    %s1300 = scalar_lea.vmem %s21, 1
    %v1301 = vld [vmem:[%s1300] sm:$0x1]
    %v1303 = vlaneseq
    %v1304 = vshrl.u32 %v1303, 7
    %v1305 = vsub.s32 0, %v1304
    %v1306 = vrot.slane %v1301, %v1305
    %v1309 = vsel %vm161, %v1293, 0
    %v1312 = vsel %vm161, %v1294, 0
    %1314 = vmatprep.subr.mxu0 0.0
    %1315 = vmatpush1.msra.mxu0 %v1296
    %1316 = vmatprep.subr.mxu0 0.0
    %1317 = vmatpush1.msra.mxu0 %v1297
    %1318 = vmatprep.subr.mxu0 0.0
    %1319 = vmatpush1.msra.mxu0 %v1298
    %1320 = vmatprep.subr.mxu0 0.0
    %1321 = vmatpush1.msra.mxu0 %v1299
    %1322 = vmatprep.subr.mxu0 0.0
    %1323 = vmatpush1.msra.mxu0 0.0
    %1324 = vmatprep.subr.mxu0 0.0
    %1325 = vmatpush1.msra.mxu0 0.0
    %1326 = vmatprep.subr.mxu0 0.0
    %1327 = vmatpush1.msra.mxu0 0.0
    %1328 = vmatprep.subr.mxu0 0.0
    %1329 = vmatpush1.msra.mxu0 0.0
    %1330 = vmatprep.subr.mxu0 0.0
    %1331 = vmatpush1.msra.mxu0 0.0
    %1332 = vmatprep.subr.mxu0 0.0
    %1333 = vmatpush1.msra.mxu0 0.0
    %1334 = vmatprep.subr.mxu0 0.0
    %1335 = vmatpush1.msra.mxu0 0.0
    %1336 = vmatprep.subr.mxu0 0.0
    %1337 = vmatpush1.msra.mxu0 0.0
    %1338 = vmatprep.subr.mxu0 0.0
    %1339 = vmatpush1.msra.mxu0 0.0
    %1340 = vmatprep.subr.mxu0 0.0
    %1341 = vmatpush1.msra.mxu0 0.0
    %1342 = vmatprep.subr.mxu0 0.0
    %1343 = vmatpush1.msra.mxu0 0.0
    %1344 = vmatprep.subr.mxu0 0.0
    %1345 = vmatpush1.msra.mxu0 0.0
    %1346 = vmatprep.subr.mxu0 0.0
    %1347 = vmatpush1.msra.mxu0 0.0
    %1348 = vmatprep.subr.mxu0 0.0
    %1349 = vmatpush1.msra.mxu0 0.0
    %1350 = vmatprep.subr.mxu0 0.0
    %1351 = vmatpush1.msra.mxu0 0.0
    %1352 = vmatprep.subr.mxu0 0.0
    %1353 = vmatpush1.msra.mxu0 0.0
    %1354 = vmatprep.subr.mxu0 0.0
    %1355 = vmatpush1.msra.mxu0 0.0
    %1356 = vmatprep.subr.mxu0 0.0
    %1357 = vmatpush1.msra.mxu0 0.0
    %1358 = vmatprep.subr.mxu0 0.0
    %1359 = vmatpush1.msra.mxu0 0.0
    %1360 = vmatprep.subr.mxu0 0.0
    %1361 = vmatpush1.msra.mxu0 0.0
    %1362 = vmatprep.subr.mxu0 0.0
    %1363 = vmatpush1.msra.mxu0 0.0
    %1364 = vmatprep.subr.mxu0 0.0
    %1365 = vmatpush1.msra.mxu0 0.0
    %1366 = vmatprep.subr.mxu0 0.0
    %1367 = vmatpush1.msra.mxu0 0.0
    %1368 = vmatprep.subr.mxu0 0.0
    %1369 = vmatpush1.msra.mxu0 0.0
    %1370 = vmatprep.subr.mxu0 0.0
    %1371 = vmatpush1.msra.mxu0 0.0
    %1372 = vmatprep.subr.mxu0 0.0
    %1373 = vmatpush1.msra.mxu0 0.0
    %1374 = vmatprep.subr.mxu0 0.0
    %1375 = vmatpush1.msra.mxu0 0.0
    %1376 = vmatprep.subr.mxu0 0.0
    %1377 = vmatpush1.msra.mxu0 0.0
    %1378 = vmatprep.mubr.f32.mxu0 0.0
    %1379 = vmatmul.mubr.f32.gmra.mrb[0].mxu0 %v1309
    %v1380 = vpop.f32.mrb[0].mxu0
    %v1381 = vadd.f32 %v1306, %v1380
    %v1382 = vpop.f32.mrb[0].mxu0
    %1383 = vmatprep.mubr.f32.mxu0 0.0
    %1384 = vmatmul.mubr.f32.gmra.mrb[0].mxu0 %v1312
    %v1385 = vpop.f32.mrb[0].mxu0
    %v1386 = vadd.f32 %v1306, %v1385
    %v1387 = vpop.f32.mrb[0].mxu0
    %1388 = vdwg.mxu0
    %s1389 = scalar_lea.vmem %s23, 32
    %v1390 = vld [vmem:[%s1389] sm:$0xff]
    %v1391 = vld [vmem:[%s1389 + $0x8] sm:$0xff]
    %v1392 = vld [vmem:[%s1389 + $0x10] sm:$0xff]
    %v1393 = vld [vmem:[%s1389 + $0x18] sm:$0xff]
    %s1394 = scalar_lea.vmem %s25, 32
    %v1395 = vld [vmem:[%s1394] sm:$0xff]
    %v1396 = vld [vmem:[%s1394 + $0x8] sm:$0xff]
    %v1397 = vld [vmem:[%s1394 + $0x10] sm:$0xff]
    %v1398 = vld [vmem:[%s1394 + $0x18] sm:$0xff]
    %1400 = vset.pattern.permute.xlu0 0
    %1401 = vperm.xlu0 %1400, %v1395
    %v1402 = vpop.permute.xlu0 %1401
    %1405 = vset.pattern.permute.xlu0 0
    %1406 = vperm.xlu0 %1405, %v1396
    %v1407 = vpop.permute.xlu0 %1406
    %1410 = vset.pattern.permute.xlu0 0
    %1411 = vperm.xlu0 %1410, %v1397
    %v1412 = vpop.permute.xlu0 %1411
    %1415 = vset.pattern.permute.xlu0 0
    %1416 = vperm.xlu0 %1415, %v1398
    %v1417 = vpop.permute.xlu0 %1416
    %v1420 = vsel %vm161, %v1390, 0
    %v1423 = vsel %vm161, %v1391, 0
    %v1426 = vsel %vm161, %v1392, 0
    %v1429 = vsel %vm161, %v1393, 0
    %1431 = vmatprep.subr.mxu0 0.0
    %1432 = vmatpush1.xpose.msra.mxu0 %v1309
    %1433 = vmatprep.subr.mxu0 0.0
    %1434 = vmatpush1.xpose.msra.mxu0 %v1312
    %1435 = vmatprep.subr.mxu0 0.0
    %1436 = vmatpush1.xpose.msra.mxu0 0.0
    %1437 = vmatprep.subr.mxu0 0.0
    %1438 = vmatpush1.xpose.msra.mxu0 0.0
    %1439 = vmatprep.subr.mxu0 0.0
    %1440 = vmatpush1.xpose.msra.mxu0 0.0
    %1441 = vmatprep.subr.mxu0 0.0
    %1442 = vmatpush1.xpose.msra.mxu0 0.0
    %1443 = vmatprep.subr.mxu0 0.0
    %1444 = vmatpush1.xpose.msra.mxu0 0.0
    %1445 = vmatprep.subr.mxu0 0.0
    %1446 = vmatpush1.xpose.msra.mxu0 0.0
    %1447 = vmatprep.subr.mxu0 0.0
    %1448 = vmatpush1.xpose.msra.mxu0 0.0
    %1449 = vmatprep.subr.mxu0 0.0
    %1450 = vmatpush1.xpose.msra.mxu0 0.0
    %1451 = vmatprep.subr.mxu0 0.0
    %1452 = vmatpush1.xpose.msra.mxu0 0.0
    %1453 = vmatprep.subr.mxu0 0.0
    %1454 = vmatpush1.xpose.msra.mxu0 0.0
    %1455 = vmatprep.subr.mxu0 0.0
    %1456 = vmatpush1.xpose.msra.mxu0 0.0
    %1457 = vmatprep.subr.mxu0 0.0
    %1458 = vmatpush1.xpose.msra.mxu0 0.0
    %1459 = vmatprep.subr.mxu0 0.0
    %1460 = vmatpush1.xpose.msra.mxu0 0.0
    %1461 = vmatprep.subr.mxu0 0.0
    %1462 = vmatpush1.xpose.msra.mxu0 0.0
    %1463 = vmatprep.subr.mxu0 0.0
    %1464 = vmatpush1.xpose.msra.mxu0 0.0
    %1465 = vmatprep.subr.mxu0 0.0
    %1466 = vmatpush1.xpose.msra.mxu0 0.0
    %1467 = vmatprep.subr.mxu0 0.0
    %1468 = vmatpush1.xpose.msra.mxu0 0.0
    %1469 = vmatprep.subr.mxu0 0.0
    %1470 = vmatpush1.xpose.msra.mxu0 0.0
    %1471 = vmatprep.subr.mxu0 0.0
    %1472 = vmatpush1.xpose.msra.mxu0 0.0
    %1473 = vmatprep.subr.mxu0 0.0
    %1474 = vmatpush1.xpose.msra.mxu0 0.0
    %1475 = vmatprep.subr.mxu0 0.0
    %1476 = vmatpush1.xpose.msra.mxu0 0.0
    %1477 = vmatprep.subr.mxu0 0.0
    %1478 = vmatpush1.xpose.msra.mxu0 0.0
    %1479 = vmatprep.subr.mxu0 0.0
    %1480 = vmatpush1.xpose.msra.mxu0 0.0
    %1481 = vmatprep.subr.mxu0 0.0
    %1482 = vmatpush1.xpose.msra.mxu0 0.0
    %1483 = vmatprep.subr.mxu0 0.0
    %1484 = vmatpush1.xpose.msra.mxu0 0.0
    %1485 = vmatprep.subr.mxu0 0.0
    %1486 = vmatpush1.xpose.msra.mxu0 0.0
    %1487 = vmatprep.subr.mxu0 0.0
    %1488 = vmatpush1.xpose.msra.mxu0 0.0
    %1489 = vmatprep.subr.mxu0 0.0
    %1490 = vmatpush1.xpose.msra.mxu0 0.0
    %1491 = vmatprep.subr.mxu0 0.0
    %1492 = vmatpush1.xpose.msra.mxu0 0.0
    %1493 = vmatprep.subr.mxu0 0.0
    %1494 = vmatpush1.xpose.msra.mxu0 0.0
    %1495 = vmatprep.mubr.f32.mxu0 0.0
    %1496 = vmatmul.mubr.f32.gmra.mrb[0].mxu0 %v1420
    %v1497 = vpop.f32.mrb[0].mxu0
    %v1498 = vadd.f32 %v1402, %v1497
    %v1499 = vpop.f32.mrb[0].mxu0
    %1500 = vmatprep.mubr.f32.mxu0 0.0
    %1501 = vmatmul.mubr.f32.gmra.mrb[0].mxu0 %v1423
    %v1502 = vpop.f32.mrb[0].mxu0
    %v1503 = vadd.f32 %v1407, %v1502
    %v1504 = vpop.f32.mrb[0].mxu0
    %1505 = vmatprep.mubr.f32.mxu0 0.0
    %1506 = vmatmul.mubr.f32.gmra.mrb[0].mxu0 %v1426
    %v1507 = vpop.f32.mrb[0].mxu0
    %v1508 = vadd.f32 %v1412, %v1507
    %v1509 = vpop.f32.mrb[0].mxu0
    %1510 = vmatprep.mubr.f32.mxu0 0.0
    %1511 = vmatmul.mubr.f32.gmra.mrb[0].mxu0 %v1429
    %v1512 = vpop.f32.mrb[0].mxu0
    %v1513 = vadd.f32 %v1417, %v1512
    %v1514 = vpop.f32.mrb[0].mxu0
    %1515 = vdwg.mxu0
    %1518 = vrot.lane.b32.xlu0 %v1381, 112
    %v1519 = vpop.permute.xlu0 %1518
    %1520 = vrot.lane.b32.xlu0 %v1386, 112
    %v1521 = vpop.permute.xlu0 %1520
    %v1522 = vsel %vm430, %v1381, 0
    %v1524 = vsel %vm430, %v1386, 0
    %1526 = vmatprep.subr.mxu0 0.0
    %1527 = vmatpush1.msra.mxu0 %v1498
    %1528 = vmatprep.subr.mxu0 0.0
    %1529 = vmatpush1.msra.mxu0 %v1503
    %1530 = vmatprep.subr.mxu0 0.0
    %1531 = vmatpush1.msra.mxu0 0.0
    %1532 = vmatprep.subr.mxu0 0.0
    %1533 = vmatpush1.msra.mxu0 0.0
    %1534 = vmatprep.subr.mxu0 0.0
    %1535 = vmatpush1.msra.mxu0 0.0
    %1536 = vmatprep.subr.mxu0 0.0
    %1537 = vmatpush1.msra.mxu0 0.0
    %1538 = vmatprep.subr.mxu0 0.0
    %1539 = vmatpush1.msra.mxu0 0.0
    %1540 = vmatprep.subr.mxu0 0.0
    %1541 = vmatpush1.msra.mxu0 0.0
    %1542 = vmatprep.subr.mxu0 0.0
    %1543 = vmatpush1.msra.mxu0 0.0
    %1544 = vmatprep.subr.mxu0 0.0
    %1545 = vmatpush1.msra.mxu0 0.0
    %1546 = vmatprep.subr.mxu0 0.0
    %1547 = vmatpush1.msra.mxu0 0.0
    %1548 = vmatprep.subr.mxu0 0.0
    %1549 = vmatpush1.msra.mxu0 0.0
    %1550 = vmatprep.subr.mxu0 0.0
    %1551 = vmatpush1.msra.mxu0 0.0
    %1552 = vmatprep.subr.mxu0 0.0
    %1553 = vmatpush1.msra.mxu0 0.0
    %1554 = vmatprep.subr.mxu0 0.0
    %1555 = vmatpush1.msra.mxu0 0.0
    %1556 = vmatprep.subr.mxu0 0.0
    %1557 = vmatpush1.msra.mxu0 0.0
    %1558 = vmatprep.subr.mxu0 0.0
    %1559 = vmatpush1.msra.mxu0 0.0
    %1560 = vmatprep.subr.mxu0 0.0
    %1561 = vmatpush1.msra.mxu0 0.0
    %1562 = vmatprep.subr.mxu0 0.0
    %1563 = vmatpush1.msra.mxu0 0.0
    %1564 = vmatprep.subr.mxu0 0.0
    %1565 = vmatpush1.msra.mxu0 0.0
    %1566 = vmatprep.subr.mxu0 0.0
    %1567 = vmatpush1.msra.mxu0 0.0
    %1568 = vmatprep.subr.mxu0 0.0
    %1569 = vmatpush1.msra.mxu0 0.0
    %1570 = vmatprep.subr.mxu0 0.0
    %1571 = vmatpush1.msra.mxu0 0.0
    %1572 = vmatprep.subr.mxu0 0.0
    %1573 = vmatpush1.msra.mxu0 0.0
    %1574 = vmatprep.subr.mxu0 0.0
    %1575 = vmatpush1.msra.mxu0 0.0
    %1576 = vmatprep.subr.mxu0 0.0
    %1577 = vmatpush1.msra.mxu0 0.0
    %1578 = vmatprep.subr.mxu0 0.0
    %1579 = vmatpush1.msra.mxu0 0.0
    %1580 = vmatprep.subr.mxu0 0.0
    %1581 = vmatpush1.msra.mxu0 0.0
    %1582 = vmatprep.subr.mxu0 0.0
    %1583 = vmatpush1.msra.mxu0 0.0
    %1584 = vmatprep.subr.mxu0 0.0
    %1585 = vmatpush1.msra.mxu0 0.0
    %1586 = vmatprep.subr.mxu0 0.0
    %1587 = vmatpush1.msra.mxu0 0.0
    %1588 = vmatprep.subr.mxu0 0.0
    %1589 = vmatpush1.msra.mxu0 0.0
    %1590 = vmatprep.mubr.f32.mxu0 0.0
    %1591 = vmatmul.mubr.f32.gmra.mrb[0].mxu0 %v1522
    %v1592 = vpop.f32.mrb[0].mxu0
    %v1593 = vadd.f32 0.0, %v1592
    %v1594 = vpop.f32.mrb[0].mxu0
    %1595 = vmatprep.mubr.f32.mxu0 0.0
    %1596 = vmatmul.mubr.f32.gmra.mrb[0].mxu0 %v1524
    %v1597 = vpop.f32.mrb[0].mxu0
    %v1598 = vadd.f32 0.0, %v1597
    %v1599 = vpop.f32.mrb[0].mxu0
    %1600 = vdwg.mxu0
    %v1601 = vsel %vm430, %v1519, 0
    %v1603 = vsel %vm430, %v1521, 0
    %1605 = vmatprep.subr.mxu0 0.0
    %1606 = vmatpush1.msra.mxu0 %v1508
    %1607 = vmatprep.subr.mxu0 0.0
    %1608 = vmatpush1.msra.mxu0 %v1513
    %1609 = vmatprep.subr.mxu0 0.0
    %1610 = vmatpush1.msra.mxu0 0.0
    %1611 = vmatprep.subr.mxu0 0.0
    %1612 = vmatpush1.msra.mxu0 0.0
    %1613 = vmatprep.subr.mxu0 0.0
    %1614 = vmatpush1.msra.mxu0 0.0
    %1615 = vmatprep.subr.mxu0 0.0
    %1616 = vmatpush1.msra.mxu0 0.0
    %1617 = vmatprep.subr.mxu0 0.0
    %1618 = vmatpush1.msra.mxu0 0.0
    %1619 = vmatprep.subr.mxu0 0.0
    %1620 = vmatpush1.msra.mxu0 0.0
    %1621 = vmatprep.subr.mxu0 0.0
    %1622 = vmatpush1.msra.mxu0 0.0
    %1623 = vmatprep.subr.mxu0 0.0
    %1624 = vmatpush1.msra.mxu0 0.0
    %1625 = vmatprep.subr.mxu0 0.0
    %1626 = vmatpush1.msra.mxu0 0.0
    %1627 = vmatprep.subr.mxu0 0.0
    %1628 = vmatpush1.msra.mxu0 0.0
    %1629 = vmatprep.subr.mxu0 0.0
    %1630 = vmatpush1.msra.mxu0 0.0
    %1631 = vmatprep.subr.mxu0 0.0
    %1632 = vmatpush1.msra.mxu0 0.0
    %1633 = vmatprep.subr.mxu0 0.0
    %1634 = vmatpush1.msra.mxu0 0.0
    %1635 = vmatprep.subr.mxu0 0.0
    %1636 = vmatpush1.msra.mxu0 0.0
    %1637 = vmatprep.subr.mxu0 0.0
    %1638 = vmatpush1.msra.mxu0 0.0
    %1639 = vmatprep.subr.mxu0 0.0
    %1640 = vmatpush1.msra.mxu0 0.0
    %1641 = vmatprep.subr.mxu0 0.0
    %1642 = vmatpush1.msra.mxu0 0.0
    %1643 = vmatprep.subr.mxu0 0.0
    %1644 = vmatpush1.msra.mxu0 0.0
    %1645 = vmatprep.subr.mxu0 0.0
    %1646 = vmatpush1.msra.mxu0 0.0
    %1647 = vmatprep.subr.mxu0 0.0
    %1648 = vmatpush1.msra.mxu0 0.0
    %1649 = vmatprep.subr.mxu0 0.0
    %1650 = vmatpush1.msra.mxu0 0.0
    %1651 = vmatprep.subr.mxu0 0.0
    %1652 = vmatpush1.msra.mxu0 0.0
    %1653 = vmatprep.subr.mxu0 0.0
    %1654 = vmatpush1.msra.mxu0 0.0
    %1655 = vmatprep.subr.mxu0 0.0
    %1656 = vmatpush1.msra.mxu0 0.0
    %1657 = vmatprep.subr.mxu0 0.0
    %1658 = vmatpush1.msra.mxu0 0.0
    %1659 = vmatprep.subr.mxu0 0.0
    %1660 = vmatpush1.msra.mxu0 0.0
    %1661 = vmatprep.subr.mxu0 0.0
    %1662 = vmatpush1.msra.mxu0 0.0
    %1663 = vmatprep.subr.mxu0 0.0
    %1664 = vmatpush1.msra.mxu0 0.0
    %1665 = vmatprep.subr.mxu0 0.0
    %1666 = vmatpush1.msra.mxu0 0.0
    %1667 = vmatprep.subr.mxu0 0.0
    %1668 = vmatpush1.msra.mxu0 0.0
    %1669 = vmatprep.mubr.f32.mxu0 0.0
    %1670 = vmatmul.mubr.f32.gmra.mrb[0].mxu0 %v1601
    %v1671 = vpop.f32.mrb[0].mxu0
    %v1672 = vadd.f32 0.0, %v1671
    %v1673 = vpop.f32.mrb[0].mxu0
    %1674 = vmatprep.mubr.f32.mxu0 0.0
    %1675 = vmatmul.mubr.f32.gmra.mrb[0].mxu0 %v1603
    %v1676 = vpop.f32.mrb[0].mxu0
    %v1677 = vadd.f32 0.0, %v1676
    %v1678 = vpop.f32.mrb[0].mxu0
    %1679 = vdwg.mxu0
    %v1680 = vmul.f32 %v1593, 0.25
    %v1681 = vmul.f32 %v1598, 0.25
    %v1682 = vmul.f32 %v1672, 0.25
    %v1683 = vmul.f32 %v1677, 0.25
    %v1684 = vadd.f32 %v1680, %v205
    %v1685 = vadd.f32 %v1681, %v206
    %v1686 = vadd.f32 %v1682, %v205
    %v1687 = vadd.f32 %v1683, %v206
    %v1688 = vsel %vm430, %v1684, -inf
    %1689 = vmax.xlane.f32.xlu0 %v1688
    %v1690 = vpop.xlane.xlu0 %1689
    %v1691 = vsel %vm430, %v1685, -inf
    %1692 = vmax.xlane.f32.xlu0 %v1691
    %v1693 = vpop.xlane.xlu0 %1692
    %v1694 = vsel %vm430, %v1686, -inf
    %1695 = vmax.xlane.f32.xlu0 %v1694
    %v1696 = vpop.xlane.xlu0 %1695
    %v1697 = vsel %vm430, %v1687, -inf
    %1698 = vmax.xlane.f32.xlu0 %v1697
    %v1699 = vpop.xlane.xlu0 %1698
    %v1700 = vsub.f32 %v1684, %v1690
    %v1701 = vsub.f32 %v1685, %v1693
    %v1702 = vsub.f32 %v1686, %v1696
    %v1703 = vsub.f32 %v1687, %v1699
    %v1704 = vmul.f32 %v1700, 1.442695
    %v1705 = vpow.pop %v1704
    %v1706 = vmul.f32 %v1701, 1.442695
    %v1707 = vpow.pop %v1706
    %v1708 = vmul.f32 %v1702, 1.442695
    %v1709 = vpow.pop %v1708
    %v1710 = vmul.f32 %v1703, 1.442695
    %v1711 = vpow.pop %v1710
    %v1712 = vsel %vm430, %v1705, 0.0
    %1713 = vadd.xlane.f32.xlu0 %v1712
    %v1714 = vpop.xlane.xlu0 %1713
    %v1715 = vsel %vm430, %v1707, 0.0
    %1716 = vadd.xlane.f32.xlu0 %v1715
    %v1717 = vpop.xlane.xlu0 %1716
    %v1718 = vsel %vm430, %v1709, 0.0
    %1719 = vadd.xlane.f32.xlu0 %v1718
    %v1720 = vpop.xlane.xlu0 %1719
    %v1721 = vsel %vm430, %v1711, 0.0
    %1722 = vadd.xlane.f32.xlu0 %v1721
    %v1723 = vpop.xlane.xlu0 %1722
    %v1724 = vrcp.pop %v1714
    %v1725 = vmul.f32 %v1705, %v1724
    %v1726 = vrcp.pop %v1717
    %v1727 = vmul.f32 %v1707, %v1726
    %v1728 = vrcp.pop %v1720
    %v1729 = vmul.f32 %v1709, %v1728
    %v1730 = vrcp.pop %v1723
    %v1731 = vmul.f32 %v1711, %v1730
    %1732 = vrot.lane.b32.xlu0 %v1381, 96
    %v1733 = vpop.permute.xlu0 %1732
    %1734 = vrot.lane.b32.xlu0 %v1386, 96
    %v1735 = vpop.permute.xlu0 %1734
    %v1739 = vsel %vm430, %v1725, 0
    %v1742 = vsel %vm430, %v1727, 0
    %1744 = vmatprep.subr.mxu0 0.0
    %1745 = vmatpush1.msra.mxu0 %v1733
    %1746 = vmatprep.subr.mxu0 0.0
    %1747 = vmatpush1.msra.mxu0 %v1735
    %1748 = vmatprep.subr.mxu0 0.0
    %1749 = vmatpush1.msra.mxu0 0.0
    %1750 = vmatprep.subr.mxu0 0.0
    %1751 = vmatpush1.msra.mxu0 0.0
    %1752 = vmatprep.subr.mxu0 0.0
    %1753 = vmatpush1.msra.mxu0 0.0
    %1754 = vmatprep.subr.mxu0 0.0
    %1755 = vmatpush1.msra.mxu0 0.0
    %1756 = vmatprep.subr.mxu0 0.0
    %1757 = vmatpush1.msra.mxu0 0.0
    %1758 = vmatprep.subr.mxu0 0.0
    %1759 = vmatpush1.msra.mxu0 0.0
    %1760 = vmatprep.subr.mxu0 0.0
    %1761 = vmatpush1.msra.mxu0 0.0
    %1762 = vmatprep.subr.mxu0 0.0
    %1763 = vmatpush1.msra.mxu0 0.0
    %1764 = vmatprep.subr.mxu0 0.0
    %1765 = vmatpush1.msra.mxu0 0.0
    %1766 = vmatprep.subr.mxu0 0.0
    %1767 = vmatpush1.msra.mxu0 0.0
    %1768 = vmatprep.subr.mxu0 0.0
    %1769 = vmatpush1.msra.mxu0 0.0
    %1770 = vmatprep.subr.mxu0 0.0
    %1771 = vmatpush1.msra.mxu0 0.0
    %1772 = vmatprep.subr.mxu0 0.0
    %1773 = vmatpush1.msra.mxu0 0.0
    %1774 = vmatprep.subr.mxu0 0.0
    %1775 = vmatpush1.msra.mxu0 0.0
    %1776 = vmatprep.subr.mxu0 0.0
    %1777 = vmatpush1.msra.mxu0 0.0
    %1778 = vmatprep.subr.mxu0 0.0
    %1779 = vmatpush1.msra.mxu0 0.0
    %1780 = vmatprep.subr.mxu0 0.0
    %1781 = vmatpush1.msra.mxu0 0.0
    %1782 = vmatprep.subr.mxu0 0.0
    %1783 = vmatpush1.msra.mxu0 0.0
    %1784 = vmatprep.subr.mxu0 0.0
    %1785 = vmatpush1.msra.mxu0 0.0
    %1786 = vmatprep.subr.mxu0 0.0
    %1787 = vmatpush1.msra.mxu0 0.0
    %1788 = vmatprep.subr.mxu0 0.0
    %1789 = vmatpush1.msra.mxu0 0.0
    %1790 = vmatprep.subr.mxu0 0.0
    %1791 = vmatpush1.msra.mxu0 0.0
    %1792 = vmatprep.subr.mxu0 0.0
    %1793 = vmatpush1.msra.mxu0 0.0
    %1794 = vmatprep.subr.mxu0 0.0
    %1795 = vmatpush1.msra.mxu0 0.0
    %1796 = vmatprep.subr.mxu0 0.0
    %1797 = vmatpush1.msra.mxu0 0.0
    %1798 = vmatprep.subr.mxu0 0.0
    %1799 = vmatpush1.msra.mxu0 0.0
    %1800 = vmatprep.subr.mxu0 0.0
    %1801 = vmatpush1.msra.mxu0 0.0
    %1802 = vmatprep.subr.mxu0 0.0
    %1803 = vmatpush1.msra.mxu0 0.0
    %1804 = vmatprep.subr.mxu0 0.0
    %1805 = vmatpush1.msra.mxu0 0.0
    %1806 = vmatprep.subr.mxu0 0.0
    %1807 = vmatpush1.msra.mxu0 0.0
    %1808 = vmatprep.mubr.f32.mxu0 0.0
    %1809 = vmatmul.mubr.f32.gmra.mrb[0].mxu0 %v1739
    %v1810 = vpop.f32.mrb[0].mxu0
    %v1811 = vadd.f32 0.0, %v1810
    %v1812 = vpop.f32.mrb[0].mxu0
    %1813 = vmatprep.mubr.f32.mxu0 0.0
    %1814 = vmatmul.mubr.f32.gmra.mrb[0].mxu0 %v1742
    %v1815 = vpop.f32.mrb[0].mxu0
    %v1816 = vadd.f32 0.0, %v1815
    %v1817 = vpop.f32.mrb[0].mxu0
    %1818 = vdwg.mxu0
    %1819 = vrot.lane.b32.xlu0 %v1519, 96
    %v1820 = vpop.permute.xlu0 %1819
    %1821 = vrot.lane.b32.xlu0 %v1521, 96
    %v1822 = vpop.permute.xlu0 %1821
    %v1826 = vsel %vm430, %v1729, 0
    %v1829 = vsel %vm430, %v1731, 0
    %1831 = vmatprep.subr.mxu0 0.0
    %1832 = vmatpush1.msra.mxu0 %v1820
    %1833 = vmatprep.subr.mxu0 0.0
    %1834 = vmatpush1.msra.mxu0 %v1822
    %1835 = vmatprep.subr.mxu0 0.0
    %1836 = vmatpush1.msra.mxu0 0.0
    %1837 = vmatprep.subr.mxu0 0.0
    %1838 = vmatpush1.msra.mxu0 0.0
    %1839 = vmatprep.subr.mxu0 0.0
    %1840 = vmatpush1.msra.mxu0 0.0
    %1841 = vmatprep.subr.mxu0 0.0
    %1842 = vmatpush1.msra.mxu0 0.0
    %1843 = vmatprep.subr.mxu0 0.0
    %1844 = vmatpush1.msra.mxu0 0.0
    %1845 = vmatprep.subr.mxu0 0.0
    %1846 = vmatpush1.msra.mxu0 0.0
    %1847 = vmatprep.subr.mxu0 0.0
    %1848 = vmatpush1.msra.mxu0 0.0
    %1849 = vmatprep.subr.mxu0 0.0
    %1850 = vmatpush1.msra.mxu0 0.0
    %1851 = vmatprep.subr.mxu0 0.0
    %1852 = vmatpush1.msra.mxu0 0.0
    %1853 = vmatprep.subr.mxu0 0.0
    %1854 = vmatpush1.msra.mxu0 0.0
    %1855 = vmatprep.subr.mxu0 0.0
    %1856 = vmatpush1.msra.mxu0 0.0
    %1857 = vmatprep.subr.mxu0 0.0
    %1858 = vmatpush1.msra.mxu0 0.0
    %1859 = vmatprep.subr.mxu0 0.0
    %1860 = vmatpush1.msra.mxu0 0.0
    %1861 = vmatprep.subr.mxu0 0.0
    %1862 = vmatpush1.msra.mxu0 0.0
    %1863 = vmatprep.subr.mxu0 0.0
    %1864 = vmatpush1.msra.mxu0 0.0
    %1865 = vmatprep.subr.mxu0 0.0
    %1866 = vmatpush1.msra.mxu0 0.0
    %1867 = vmatprep.subr.mxu0 0.0
    %1868 = vmatpush1.msra.mxu0 0.0
    %1869 = vmatprep.subr.mxu0 0.0
    %1870 = vmatpush1.msra.mxu0 0.0
    %1871 = vmatprep.subr.mxu0 0.0
    %1872 = vmatpush1.msra.mxu0 0.0
    %1873 = vmatprep.subr.mxu0 0.0
    %1874 = vmatpush1.msra.mxu0 0.0
    %1875 = vmatprep.subr.mxu0 0.0
    %1876 = vmatpush1.msra.mxu0 0.0
    %1877 = vmatprep.subr.mxu0 0.0
    %1878 = vmatpush1.msra.mxu0 0.0
    %1879 = vmatprep.subr.mxu0 0.0
    %1880 = vmatpush1.msra.mxu0 0.0
    %1881 = vmatprep.subr.mxu0 0.0
    %1882 = vmatpush1.msra.mxu0 0.0
    %1883 = vmatprep.subr.mxu0 0.0
    %1884 = vmatpush1.msra.mxu0 0.0
    %1885 = vmatprep.subr.mxu0 0.0
    %1886 = vmatpush1.msra.mxu0 0.0
    %1887 = vmatprep.subr.mxu0 0.0
    %1888 = vmatpush1.msra.mxu0 0.0
    %1889 = vmatprep.subr.mxu0 0.0
    %1890 = vmatpush1.msra.mxu0 0.0
    %1891 = vmatprep.subr.mxu0 0.0
    %1892 = vmatpush1.msra.mxu0 0.0
    %1893 = vmatprep.subr.mxu0 0.0
    %1894 = vmatpush1.msra.mxu0 0.0
    %1895 = vmatprep.mubr.f32.mxu0 0.0
    %1896 = vmatmul.mubr.f32.gmra.mrb[0].mxu0 %v1826
    %v1897 = vpop.f32.mrb[0].mxu0
    %v1898 = vadd.f32 0.0, %v1897
    %v1899 = vpop.f32.mrb[0].mxu0
    %1900 = vmatprep.mubr.f32.mxu0 0.0
    %1901 = vmatmul.mubr.f32.gmra.mrb[0].mxu0 %v1829
    %v1902 = vpop.f32.mrb[0].mxu0
    %v1903 = vadd.f32 0.0, %v1902
    %v1904 = vpop.f32.mrb[0].mxu0
    %1905 = vdwg.mxu0
    %s1906 = scalar_lea.vmem %s27, 32
    %v1907 = vld [vmem:[%s1906] sm:$0xff]
    %v1908 = vld [vmem:[%s1906 + $0x8] sm:$0xff]
    %v1909 = vld [vmem:[%s1906 + $0x10] sm:$0xff]
    %v1910 = vld [vmem:[%s1906 + $0x18] sm:$0xff]
    %v1912 = vsel %vm430, %v1811, 0
    %v1915 = vsel %vm430, %v1816, 0
    %1917 = vmatprep.subr.mxu0 0.0
    %1918 = vmatpush1.msra.mxu0 %v1907
    %1919 = vmatprep.subr.mxu0 0.0
    %1920 = vmatpush1.msra.mxu0 %v1908
    %1921 = vmatprep.subr.mxu0 0.0
    %1922 = vmatpush1.msra.mxu0 0.0
    %1923 = vmatprep.subr.mxu0 0.0
    %1924 = vmatpush1.msra.mxu0 0.0
    %1925 = vmatprep.subr.mxu0 0.0
    %1926 = vmatpush1.msra.mxu0 0.0
    %1927 = vmatprep.subr.mxu0 0.0
    %1928 = vmatpush1.msra.mxu0 0.0
    %1929 = vmatprep.subr.mxu0 0.0
    %1930 = vmatpush1.msra.mxu0 0.0
    %1931 = vmatprep.subr.mxu0 0.0
    %1932 = vmatpush1.msra.mxu0 0.0
    %1933 = vmatprep.subr.mxu0 0.0
    %1934 = vmatpush1.msra.mxu0 0.0
    %1935 = vmatprep.subr.mxu0 0.0
    %1936 = vmatpush1.msra.mxu0 0.0
    %1937 = vmatprep.subr.mxu0 0.0
    %1938 = vmatpush1.msra.mxu0 0.0
    %1939 = vmatprep.subr.mxu0 0.0
    %1940 = vmatpush1.msra.mxu0 0.0
    %1941 = vmatprep.subr.mxu0 0.0
    %1942 = vmatpush1.msra.mxu0 0.0
    %1943 = vmatprep.subr.mxu0 0.0
    %1944 = vmatpush1.msra.mxu0 0.0
    %1945 = vmatprep.subr.mxu0 0.0
    %1946 = vmatpush1.msra.mxu0 0.0
    %1947 = vmatprep.subr.mxu0 0.0
    %1948 = vmatpush1.msra.mxu0 0.0
    %1949 = vmatprep.subr.mxu0 0.0
    %1950 = vmatpush1.msra.mxu0 0.0
    %1951 = vmatprep.subr.mxu0 0.0
    %1952 = vmatpush1.msra.mxu0 0.0
    %1953 = vmatprep.subr.mxu0 0.0
    %1954 = vmatpush1.msra.mxu0 0.0
    %1955 = vmatprep.subr.mxu0 0.0
    %1956 = vmatpush1.msra.mxu0 0.0
    %1957 = vmatprep.subr.mxu0 0.0
    %1958 = vmatpush1.msra.mxu0 0.0
    %1959 = vmatprep.subr.mxu0 0.0
    %1960 = vmatpush1.msra.mxu0 0.0
    %1961 = vmatprep.subr.mxu0 0.0
    %1962 = vmatpush1.msra.mxu0 0.0
    %1963 = vmatprep.subr.mxu0 0.0
    %1964 = vmatpush1.msra.mxu0 0.0
    %1965 = vmatprep.subr.mxu0 0.0
    %1966 = vmatpush1.msra.mxu0 0.0
    %1967 = vmatprep.subr.mxu0 0.0
    %1968 = vmatpush1.msra.mxu0 0.0
    %1969 = vmatprep.subr.mxu0 0.0
    %1970 = vmatpush1.msra.mxu0 0.0
    %1971 = vmatprep.subr.mxu0 0.0
    %1972 = vmatpush1.msra.mxu0 0.0
    %1973 = vmatprep.subr.mxu0 0.0
    %1974 = vmatpush1.msra.mxu0 0.0
    %1975 = vmatprep.subr.mxu0 0.0
    %1976 = vmatpush1.msra.mxu0 0.0
    %1977 = vmatprep.subr.mxu0 0.0
    %1978 = vmatpush1.msra.mxu0 0.0
    %1979 = vmatprep.subr.mxu0 0.0
    %1980 = vmatpush1.msra.mxu0 0.0
    %1981 = vmatprep.mubr.f32.mxu0 0.0
    %1982 = vmatmul.mubr.f32.gmra.mrb[0].mxu0 %v1912
    %v1983 = vpop.f32.mrb[0].mxu0
    %v1984 = vadd.f32 0.0, %v1983
    %v1985 = vpop.f32.mrb[0].mxu0
    %1986 = vmatprep.mubr.f32.mxu0 0.0
    %1987 = vmatmul.mubr.f32.gmra.mrb[0].mxu0 %v1915
    %v1988 = vpop.f32.mrb[0].mxu0
    %v1989 = vadd.f32 0.0, %v1988
    %v1990 = vpop.f32.mrb[0].mxu0
    %1991 = vdwg.mxu0
    %v1993 = vsel %vm430, %v1898, 0
    %v1996 = vsel %vm430, %v1903, 0
    %1998 = vmatprep.subr.mxu0 0.0
    %1999 = vmatpush1.msra.mxu0 %v1909
    %2000 = vmatprep.subr.mxu0 0.0
    %2001 = vmatpush1.msra.mxu0 %v1910
    %2002 = vmatprep.subr.mxu0 0.0
    %2003 = vmatpush1.msra.mxu0 0.0
    %2004 = vmatprep.subr.mxu0 0.0
    %2005 = vmatpush1.msra.mxu0 0.0
    %2006 = vmatprep.subr.mxu0 0.0
    %2007 = vmatpush1.msra.mxu0 0.0
    %2008 = vmatprep.subr.mxu0 0.0
    %2009 = vmatpush1.msra.mxu0 0.0
    %2010 = vmatprep.subr.mxu0 0.0
    %2011 = vmatpush1.msra.mxu0 0.0
    %2012 = vmatprep.subr.mxu0 0.0
    %2013 = vmatpush1.msra.mxu0 0.0
    %2014 = vmatprep.subr.mxu0 0.0
    %2015 = vmatpush1.msra.mxu0 0.0
    %2016 = vmatprep.subr.mxu0 0.0
    %2017 = vmatpush1.msra.mxu0 0.0
    %2018 = vmatprep.subr.mxu0 0.0
    %2019 = vmatpush1.msra.mxu0 0.0
    %2020 = vmatprep.subr.mxu0 0.0
    %2021 = vmatpush1.msra.mxu0 0.0
    %2022 = vmatprep.subr.mxu0 0.0
    %2023 = vmatpush1.msra.mxu0 0.0
    %2024 = vmatprep.subr.mxu0 0.0
    %2025 = vmatpush1.msra.mxu0 0.0
    %2026 = vmatprep.subr.mxu0 0.0
    %2027 = vmatpush1.msra.mxu0 0.0
    %2028 = vmatprep.subr.mxu0 0.0
    %2029 = vmatpush1.msra.mxu0 0.0
    %2030 = vmatprep.subr.mxu0 0.0
    %2031 = vmatpush1.msra.mxu0 0.0
    %2032 = vmatprep.subr.mxu0 0.0
    %2033 = vmatpush1.msra.mxu0 0.0
    %2034 = vmatprep.subr.mxu0 0.0
    %2035 = vmatpush1.msra.mxu0 0.0
    %2036 = vmatprep.subr.mxu0 0.0
    %2037 = vmatpush1.msra.mxu0 0.0
    %2038 = vmatprep.subr.mxu0 0.0
    %2039 = vmatpush1.msra.mxu0 0.0
    %2040 = vmatprep.subr.mxu0 0.0
    %2041 = vmatpush1.msra.mxu0 0.0
    %2042 = vmatprep.subr.mxu0 0.0
    %2043 = vmatpush1.msra.mxu0 0.0
    %2044 = vmatprep.subr.mxu0 0.0
    %2045 = vmatpush1.msra.mxu0 0.0
    %2046 = vmatprep.subr.mxu0 0.0
    %2047 = vmatpush1.msra.mxu0 0.0
    %2048 = vmatprep.subr.mxu0 0.0
    %2049 = vmatpush1.msra.mxu0 0.0
    %2050 = vmatprep.subr.mxu0 0.0
    %2051 = vmatpush1.msra.mxu0 0.0
    %2052 = vmatprep.subr.mxu0 0.0
    %2053 = vmatpush1.msra.mxu0 0.0
    %2054 = vmatprep.subr.mxu0 0.0
    %2055 = vmatpush1.msra.mxu0 0.0
    %2056 = vmatprep.subr.mxu0 0.0
    %2057 = vmatpush1.msra.mxu0 0.0
    %2058 = vmatprep.subr.mxu0 0.0
    %2059 = vmatpush1.msra.mxu0 0.0
    %2060 = vmatprep.subr.mxu0 0.0
    %2061 = vmatpush1.msra.mxu0 0.0
    %2062 = vmatprep.mubr.f32.mxu0 0.0
    %2063 = vmatmul.mubr.f32.gmra.mrb[0].mxu0 %v1993
    %v2064 = vpop.f32.mrb[0].mxu0
    %v2065 = vadd.f32 0.0, %v2064
    %v2066 = vpop.f32.mrb[0].mxu0
    %2067 = vmatprep.mubr.f32.mxu0 0.0
    %2068 = vmatmul.mubr.f32.gmra.mrb[0].mxu0 %v1996
    %v2069 = vpop.f32.mrb[0].mxu0
    %v2070 = vadd.f32 0.0, %v2069
    %v2071 = vpop.f32.mrb[0].mxu0
    %2072 = vdwg.mxu0
    %v2073 = vsel %vm161, %v1984, 0.0
    %v2074 = vsel %vm161, %v2065, 0.0
    %v2075 = vadd.f32 %v2073, %v2074
    %v2076 = vsel %vm161, %v1989, 0.0
    %v2077 = vsel %vm161, %v2070, 0.0
    %v2078 = vadd.f32 %v2076, %v2077
    %s2079 = scalar_lea.vmem %s29, 1
    %v2080 = vld [vmem:[%s2079] sm:$0x1]
    %v2082 = vlaneseq
    %v2083 = vshrl.u32 %v2082, 7
    %v2084 = vsub.s32 0, %v2083
    %v2085 = vrot.slane %v2080, %v2084
    %v2087 = vadd.f32 %v2075, %v2085
    %v2088 = vadd.f32 %v2078, %v2085
    %v2089 = vadd.f32 %v2087, %v1293
    %v2090 = vadd.f32 %v2088, %v1294
    %s2091 = scalar_lea.vmem %s31, 1
    %v2092 = vld [vmem:[%s2091] sm:$0x1]
    %s2093 = scalar_lea.vmem %s33, 1
    %v2094 = vld [vmem:[%s2093] sm:$0x1]
    %v2095 = vsel %vm161, %v2089, 0.0
    %2096 = vadd.xlane.f32.xlu0 %v2095
    %v2097 = vpop.xlane.xlu0 %2096
    %v2098 = vsel %vm161, %v2090, 0.0
    %2099 = vadd.xlane.f32.xlu0 %v2098
    %v2100 = vpop.xlane.xlu0 %2099
    %v2101 = vmul.f32 %v2097, %v168
    %v2102 = vmul.f32 %v2100, %v168
    %v2103 = vsub.f32 %v2089, %v2101
    %v2104 = vsub.f32 %v2090, %v2102
    %v2105 = vmul.f32 %v2103, %v2103
    %v2106 = vmul.f32 %v2104, %v2104
    %v2107 = vsel %vm161, %v2105, 0.0
    %2108 = vadd.xlane.f32.xlu0 %v2107
    %v2109 = vpop.xlane.xlu0 %2108
    %v2110 = vsel %vm161, %v2106, 0.0
    %2111 = vadd.xlane.f32.xlu0 %v2110
    %v2112 = vpop.xlane.xlu0 %2111
    %v2113 = vmul.f32 %v2109, %v168
    %v2114 = vmul.f32 %v2112, %v168
    %v2115 = vadd.f32 %v2113, 1e-12
    %v2116 = vadd.f32 %v2114, 1e-12
    %v2117 = vrsqrt.pop %v2115
    %v2118 = vrsqrt.pop %v2116
    %v2119 = vmul.f32 %v2103, %v2117
    %v2120 = vmul.f32 %v2104, %v2118
    %v2122 = vlaneseq
    %v2123 = vshrl.u32 %v2122, 7
    %v2124 = vsub.s32 0, %v2123
    %v2125 = vrot.slane %v2092, %v2124
    %v2127 = vmul.f32 %v2119, %v2125
    %v2128 = vmul.f32 %v2120, %v2125
    %v2130 = vlaneseq
    %v2131 = vshrl.u32 %v2130, 7
    %v2132 = vsub.s32 0, %v2131
    %v2133 = vrot.slane %v2094, %v2132
    %v2135 = vadd.f32 %v2127, %v2133
    %v2136 = vadd.f32 %v2128, %v2133
    %s2137 = scalar_lea.vmem %s35, 32
    %v2138 = vld [vmem:[%s2137] sm:$0xff]
    %v2139 = vld [vmem:[%s2137 + $0x8] sm:$0xff]
    %v2140 = vld [vmem:[%s2137 + $0x10] sm:$0xff]
    %v2141 = vld [vmem:[%s2137 + $0x18] sm:$0xff]
    %s2142 = scalar_lea.vmem %s37, 1
    %v2143 = vld [vmem:[%s2142] sm:$0x1]
    %v2145 = vlaneseq
    %v2146 = vshrl.u32 %v2145, 7
    %v2147 = vsub.s32 0, %v2146
    %v2148 = vrot.slane %v2143, %v2147
    %v2151 = vsel %vm161, %v2135, 0
    %v2154 = vsel %vm161, %v2136, 0
    %2156 = vmatprep.subr.mxu0 0.0
    %2157 = vmatpush1.msra.mxu0 %v2138
    %2158 = vmatprep.subr.mxu0 0.0
    %2159 = vmatpush1.msra.mxu0 %v2139
    %2160 = vmatprep.subr.mxu0 0.0
    %2161 = vmatpush1.msra.mxu0 %v2140
    %2162 = vmatprep.subr.mxu0 0.0
    %2163 = vmatpush1.msra.mxu0 %v2141
    %2164 = vmatprep.subr.mxu0 0.0
    %2165 = vmatpush1.msra.mxu0 0.0
    %2166 = vmatprep.subr.mxu0 0.0
    %2167 = vmatpush1.msra.mxu0 0.0
    %2168 = vmatprep.subr.mxu0 0.0
    %2169 = vmatpush1.msra.mxu0 0.0
    %2170 = vmatprep.subr.mxu0 0.0
    %2171 = vmatpush1.msra.mxu0 0.0
    %2172 = vmatprep.subr.mxu0 0.0
    %2173 = vmatpush1.msra.mxu0 0.0
    %2174 = vmatprep.subr.mxu0 0.0
    %2175 = vmatpush1.msra.mxu0 0.0
    %2176 = vmatprep.subr.mxu0 0.0
    %2177 = vmatpush1.msra.mxu0 0.0
    %2178 = vmatprep.subr.mxu0 0.0
    %2179 = vmatpush1.msra.mxu0 0.0
    %2180 = vmatprep.subr.mxu0 0.0
    %2181 = vmatpush1.msra.mxu0 0.0
    %2182 = vmatprep.subr.mxu0 0.0
    %2183 = vmatpush1.msra.mxu0 0.0
    %2184 = vmatprep.subr.mxu0 0.0
    %2185 = vmatpush1.msra.mxu0 0.0
    %2186 = vmatprep.subr.mxu0 0.0
    %2187 = vmatpush1.msra.mxu0 0.0
    %2188 = vmatprep.subr.mxu0 0.0
    %2189 = vmatpush1.msra.mxu0 0.0
    %2190 = vmatprep.subr.mxu0 0.0
    %2191 = vmatpush1.msra.mxu0 0.0
    %2192 = vmatprep.subr.mxu0 0.0
    %2193 = vmatpush1.msra.mxu0 0.0
    %2194 = vmatprep.subr.mxu0 0.0
    %2195 = vmatpush1.msra.mxu0 0.0
    %2196 = vmatprep.subr.mxu0 0.0
    %2197 = vmatpush1.msra.mxu0 0.0
    %2198 = vmatprep.subr.mxu0 0.0
    %2199 = vmatpush1.msra.mxu0 0.0
    %2200 = vmatprep.subr.mxu0 0.0
    %2201 = vmatpush1.msra.mxu0 0.0
    %2202 = vmatprep.subr.mxu0 0.0
    %2203 = vmatpush1.msra.mxu0 0.0
    %2204 = vmatprep.subr.mxu0 0.0
    %2205 = vmatpush1.msra.mxu0 0.0
    %2206 = vmatprep.subr.mxu0 0.0
    %2207 = vmatpush1.msra.mxu0 0.0
    %2208 = vmatprep.subr.mxu0 0.0
    %2209 = vmatpush1.msra.mxu0 0.0
    %2210 = vmatprep.subr.mxu0 0.0
    %2211 = vmatpush1.msra.mxu0 0.0
    %2212 = vmatprep.subr.mxu0 0.0
    %2213 = vmatpush1.msra.mxu0 0.0
    %2214 = vmatprep.subr.mxu0 0.0
    %2215 = vmatpush1.msra.mxu0 0.0
    %2216 = vmatprep.subr.mxu0 0.0
    %2217 = vmatpush1.msra.mxu0 0.0
    %2218 = vmatprep.subr.mxu0 0.0
    %2219 = vmatpush1.msra.mxu0 0.0
    %2220 = vmatprep.mubr.f32.mxu0 0.0
    %2221 = vmatmul.mubr.f32.gmra.mrb[0].mxu0 %v2151
    %v2222 = vpop.f32.mrb[0].mxu0
    %v2223 = vadd.f32 %v2148, %v2222
    %v2224 = vpop.f32.mrb[0].mxu0
    %2225 = vmatprep.mubr.f32.mxu0 0.0
    %2226 = vmatmul.mubr.f32.gmra.mrb[0].mxu0 %v2154
    %v2227 = vpop.f32.mrb[0].mxu0
    %v2228 = vadd.f32 %v2148, %v2227
    %v2229 = vpop.f32.mrb[0].mxu0
    %2230 = vdwg.mxu0
    %v2231 = vmul.f32 %v2223, 0.5
    %v2232 = vmul.f32 %v2228, 0.5
    %v2233 = vmul.f32 %v2223, 0.044715
    %v2234 = vmul.f32 %v2228, 0.044715
    %v2235 = vmul.f32 %v2233, %v2223
    %v2236 = vmul.f32 %v2234, %v2228
    %v2237 = vmul.f32 %v2235, %v2223
    %v2238 = vmul.f32 %v2236, %v2228
    %v2239 = vadd.f32 %v2223, %v2237
    %v2240 = vadd.f32 %v2228, %v2238
    %v2241 = vmul.f32 %v2239, 0.7978846
    %v2242 = vmul.f32 %v2240, 0.7978846
    %v2243 = vtanh.pop %v2241
    %v2244 = vtanh.pop %v2242
    %v2245 = vadd.f32 %v2243, 1.0
    %v2246 = vadd.f32 %v2244, 1.0
    %v2247 = vmul.f32 %v2231, %v2245
    %v2248 = vmul.f32 %v2232, %v2246
    %s2249 = scalar_lea.vmem %s39, 64
    %v2250 = vld [vmem:[%s2249] sm:$0xff]
    %v2251 = vld [vmem:[%s2249 + $0x8] sm:$0xff]
    %v2252 = vld [vmem:[%s2249 + $0x10] sm:$0xff]
    %v2253 = vld [vmem:[%s2249 + $0x18] sm:$0xff]
    %v2254 = vld [vmem:[%s2249 + $0x20] sm:$0xff]
    %v2255 = vld [vmem:[%s2249 + $0x28] sm:$0xff]
    %v2256 = vld [vmem:[%s2249 + $0x30] sm:$0xff]
    %v2257 = vld [vmem:[%s2249 + $0x38] sm:$0xff]
    %s2258 = scalar_lea.vmem %s41, 1
    %v2259 = vld [vmem:[%s2258] sm:$0x1]
    %v2261 = vlaneseq
    %v2262 = vshrl.u32 %v2261, 7
    %v2263 = vsub.s32 0, %v2262
    %v2264 = vrot.slane %v2259, %v2263
    %v2267 = vsel %vm1167, %v2247, 0
    %v2270 = vsel %vm1167, %v2248, 0
    %2272 = vmatprep.subr.mxu0 0.0
    %2273 = vmatpush1.msra.mxu0 %v2250
    %2274 = vmatprep.subr.mxu0 0.0
    %2275 = vmatpush1.msra.mxu0 %v2251
    %2276 = vmatprep.subr.mxu0 0.0
    %2277 = vmatpush1.msra.mxu0 %v2252
    %2278 = vmatprep.subr.mxu0 0.0
    %2279 = vmatpush1.msra.mxu0 %v2253
    %2280 = vmatprep.subr.mxu0 0.0
    %2281 = vmatpush1.msra.mxu0 %v2254
    %2282 = vmatprep.subr.mxu0 0.0
    %2283 = vmatpush1.msra.mxu0 %v2255
    %2284 = vmatprep.subr.mxu0 0.0
    %2285 = vmatpush1.msra.mxu0 %v2256
    %2286 = vmatprep.subr.mxu0 0.0
    %2287 = vmatpush1.msra.mxu0 %v2257
    %2288 = vmatprep.subr.mxu0 0.0
    %2289 = vmatpush1.msra.mxu0 0.0
    %2290 = vmatprep.subr.mxu0 0.0
    %2291 = vmatpush1.msra.mxu0 0.0
    %2292 = vmatprep.subr.mxu0 0.0
    %2293 = vmatpush1.msra.mxu0 0.0
    %2294 = vmatprep.subr.mxu0 0.0
    %2295 = vmatpush1.msra.mxu0 0.0
    %2296 = vmatprep.subr.mxu0 0.0
    %2297 = vmatpush1.msra.mxu0 0.0
    %2298 = vmatprep.subr.mxu0 0.0
    %2299 = vmatpush1.msra.mxu0 0.0
    %2300 = vmatprep.subr.mxu0 0.0
    %2301 = vmatpush1.msra.mxu0 0.0
    %2302 = vmatprep.subr.mxu0 0.0
    %2303 = vmatpush1.msra.mxu0 0.0
    %2304 = vmatprep.subr.mxu0 0.0
    %2305 = vmatpush1.msra.mxu0 0.0
    %2306 = vmatprep.subr.mxu0 0.0
    %2307 = vmatpush1.msra.mxu0 0.0
    %2308 = vmatprep.subr.mxu0 0.0
    %2309 = vmatpush1.msra.mxu0 0.0
    %2310 = vmatprep.subr.mxu0 0.0
    %2311 = vmatpush1.msra.mxu0 0.0
    %2312 = vmatprep.subr.mxu0 0.0
    %2313 = vmatpush1.msra.mxu0 0.0
    %2314 = vmatprep.subr.mxu0 0.0
    %2315 = vmatpush1.msra.mxu0 0.0
    %2316 = vmatprep.subr.mxu0 0.0
    %2317 = vmatpush1.msra.mxu0 0.0
    %2318 = vmatprep.subr.mxu0 0.0
    %2319 = vmatpush1.msra.mxu0 0.0
    %2320 = vmatprep.subr.mxu0 0.0
    %2321 = vmatpush1.msra.mxu0 0.0
    %2322 = vmatprep.subr.mxu0 0.0
    %2323 = vmatpush1.msra.mxu0 0.0
    %2324 = vmatprep.subr.mxu0 0.0
    %2325 = vmatpush1.msra.mxu0 0.0
    %2326 = vmatprep.subr.mxu0 0.0
    %2327 = vmatpush1.msra.mxu0 0.0
    %2328 = vmatprep.subr.mxu0 0.0
    %2329 = vmatpush1.msra.mxu0 0.0
    %2330 = vmatprep.subr.mxu0 0.0
    %2331 = vmatpush1.msra.mxu0 0.0
    %2332 = vmatprep.subr.mxu0 0.0
    %2333 = vmatpush1.msra.mxu0 0.0
    %2334 = vmatprep.subr.mxu0 0.0
    %2335 = vmatpush1.msra.mxu0 0.0
    %2336 = vmatprep.mubr.f32.mxu0 0.0
    %2337 = vmatmul.mubr.f32.gmra.mrb[0].mxu0 %v2267
    %v2338 = vpop.f32.mrb[0].mxu0
    %v2339 = vadd.f32 %v2264, %v2338
    %v2340 = vpop.f32.mrb[0].mxu0
    %2341 = vmatprep.mubr.f32.mxu0 0.0
    %2342 = vmatmul.mubr.f32.gmra.mrb[0].mxu0 %v2270
    %v2343 = vpop.f32.mrb[0].mxu0
    %v2344 = vadd.f32 %v2264, %v2343
    %v2345 = vpop.f32.mrb[0].mxu0
    %2346 = vdwg.mxu0
    %v2347 = vadd.f32 %v2339, %v2135
    %v2348 = vadd.f32 %v2344, %v2136
    %s2349 = scalar_lea.vmem %s43, 1
    %v2350 = vld [vmem:[%s2349] sm:$0x1]
    %s2351 = scalar_lea.vmem %s45, 1
    %v2352 = vld [vmem:[%s2351] sm:$0x1]
    %v2353 = vsel %vm161, %v2347, 0.0
    %2354 = vadd.xlane.f32.xlu0 %v2353
    %v2355 = vpop.xlane.xlu0 %2354
    %v2356 = vsel %vm161, %v2348, 0.0
    %2357 = vadd.xlane.f32.xlu0 %v2356
    %v2358 = vpop.xlane.xlu0 %2357
    %v2359 = vmul.f32 %v2355, %v168
    %v2360 = vmul.f32 %v2358, %v168
    %v2361 = vsub.f32 %v2347, %v2359
    %v2362 = vsub.f32 %v2348, %v2360
    %v2363 = vmul.f32 %v2361, %v2361
    %v2364 = vmul.f32 %v2362, %v2362
    %v2365 = vsel %vm161, %v2363, 0.0
    %2366 = vadd.xlane.f32.xlu0 %v2365
    %v2367 = vpop.xlane.xlu0 %2366
    %v2368 = vsel %vm161, %v2364, 0.0
    %2369 = vadd.xlane.f32.xlu0 %v2368
    %v2370 = vpop.xlane.xlu0 %2369
    %v2371 = vmul.f32 %v2367, %v168
    %v2372 = vmul.f32 %v2370, %v168
    %v2373 = vadd.f32 %v2371, 1e-12
    %v2374 = vadd.f32 %v2372, 1e-12
    %v2375 = vrsqrt.pop %v2373
    %v2376 = vrsqrt.pop %v2374
    %v2377 = vmul.f32 %v2361, %v2375
    %v2378 = vmul.f32 %v2362, %v2376
    %v2380 = vlaneseq
    %v2381 = vshrl.u32 %v2380, 7
    %v2382 = vsub.s32 0, %v2381
    %v2383 = vrot.slane %v2350, %v2382
    %v2385 = vmul.f32 %v2377, %v2383
    %v2386 = vmul.f32 %v2378, %v2383
    %v2388 = vlaneseq
    %v2389 = vshrl.u32 %v2388, 7
    %v2390 = vsub.s32 0, %v2389
    %v2391 = vrot.slane %v2352, %v2390
    %v2393 = vadd.f32 %v2385, %v2391
    %v2394 = vadd.f32 %v2386, %v2391
    %v2395 = vld [vmem:[%s47] sm:$0xff]
    %v2396 = vld [vmem:[%s47 + $0x8] sm:$0xff]
    %v2397 = vld [vmem:[%s47 + $0x10] sm:$0xff]
    %v2398 = vld [vmem:[%s47 + $0x18] sm:$0xff]
    %v2399 = vld [vmem:[%s49] sm:$0x1]
    %v2401 = vlaneseq
    %v2402 = vshrl.u32 %v2401, 7
    %v2403 = vsub.s32 0, %v2402
    %v2404 = vrot.slane %v2399, %v2403
    %v2407 = vsel %vm161, %v2393, 0
    %v2410 = vsel %vm161, %v2394, 0
    %2412 = vmatprep.subr.mxu0 0.0
    %2413 = vmatpush1.msra.mxu0 %v2395
    %2414 = vmatprep.subr.mxu0 0.0
    %2415 = vmatpush1.msra.mxu0 %v2396
    %2416 = vmatprep.subr.mxu0 0.0
    %2417 = vmatpush1.msra.mxu0 %v2397
    %2418 = vmatprep.subr.mxu0 0.0
    %2419 = vmatpush1.msra.mxu0 %v2398
    %2420 = vmatprep.subr.mxu0 0.0
    %2421 = vmatpush1.msra.mxu0 0.0
    %2422 = vmatprep.subr.mxu0 0.0
    %2423 = vmatpush1.msra.mxu0 0.0
    %2424 = vmatprep.subr.mxu0 0.0
    %2425 = vmatpush1.msra.mxu0 0.0
    %2426 = vmatprep.subr.mxu0 0.0
    %2427 = vmatpush1.msra.mxu0 0.0
    %2428 = vmatprep.subr.mxu0 0.0
    %2429 = vmatpush1.msra.mxu0 0.0
    %2430 = vmatprep.subr.mxu0 0.0
    %2431 = vmatpush1.msra.mxu0 0.0
    %2432 = vmatprep.subr.mxu0 0.0
    %2433 = vmatpush1.msra.mxu0 0.0
    %2434 = vmatprep.subr.mxu0 0.0
    %2435 = vmatpush1.msra.mxu0 0.0
    %2436 = vmatprep.subr.mxu0 0.0
    %2437 = vmatpush1.msra.mxu0 0.0
    %2438 = vmatprep.subr.mxu0 0.0
    %2439 = vmatpush1.msra.mxu0 0.0
    %2440 = vmatprep.subr.mxu0 0.0
    %2441 = vmatpush1.msra.mxu0 0.0
    %2442 = vmatprep.subr.mxu0 0.0
    %2443 = vmatpush1.msra.mxu0 0.0
    %2444 = vmatprep.subr.mxu0 0.0
    %2445 = vmatpush1.msra.mxu0 0.0
    %2446 = vmatprep.subr.mxu0 0.0
    %2447 = vmatpush1.msra.mxu0 0.0
    %2448 = vmatprep.subr.mxu0 0.0
    %2449 = vmatpush1.msra.mxu0 0.0
    %2450 = vmatprep.subr.mxu0 0.0
    %2451 = vmatpush1.msra.mxu0 0.0
    %2452 = vmatprep.subr.mxu0 0.0
    %2453 = vmatpush1.msra.mxu0 0.0
    %2454 = vmatprep.subr.mxu0 0.0
    %2455 = vmatpush1.msra.mxu0 0.0
    %2456 = vmatprep.subr.mxu0 0.0
    %2457 = vmatpush1.msra.mxu0 0.0
    %2458 = vmatprep.subr.mxu0 0.0
    %2459 = vmatpush1.msra.mxu0 0.0
    %2460 = vmatprep.subr.mxu0 0.0
    %2461 = vmatpush1.msra.mxu0 0.0
    %2462 = vmatprep.subr.mxu0 0.0
    %2463 = vmatpush1.msra.mxu0 0.0
    %2464 = vmatprep.subr.mxu0 0.0
    %2465 = vmatpush1.msra.mxu0 0.0
    %2466 = vmatprep.subr.mxu0 0.0
    %2467 = vmatpush1.msra.mxu0 0.0
    %2468 = vmatprep.subr.mxu0 0.0
    %2469 = vmatpush1.msra.mxu0 0.0
    %2470 = vmatprep.subr.mxu0 0.0
    %2471 = vmatpush1.msra.mxu0 0.0
    %2472 = vmatprep.subr.mxu0 0.0
    %2473 = vmatpush1.msra.mxu0 0.0
    %2474 = vmatprep.subr.mxu0 0.0
    %2475 = vmatpush1.msra.mxu0 0.0
    %2476 = vmatprep.mubr.f32.mxu0 0.0
    %2477 = vmatmul.mubr.f32.gmra.mrb[0].mxu0 %v2407
    %v2478 = vpop.f32.mrb[0].mxu0
    %v2479 = vadd.f32 %v2404, %v2478
    %v2480 = vpop.f32.mrb[0].mxu0
    %2481 = vmatprep.mubr.f32.mxu0 0.0
    %2482 = vmatmul.mubr.f32.gmra.mrb[0].mxu0 %v2410
    %v2483 = vpop.f32.mrb[0].mxu0
    %v2484 = vadd.f32 %v2404, %v2483
    %v2485 = vpop.f32.mrb[0].mxu0
    %2486 = vdwg.mxu0
    %vm2487 = vcmask 39936
    %2488 = vst.msk [vmem:[%s57] sm:$0xff] %vm2487, %v2479
    %2489 = vst.msk [vmem:[%s57 + $0x8] sm:$0xff] %vm2487, %v2484
    %v2490 = vld [vmem:[%s51] sm:$0x1f]
    %v2491 = vld [vmem:[%s53] sm:$0x1]
    %v2492 = vld [vmem:[%s55] sm:$0x1]
    %v2493 = vlaneseq
    %v2494 = vand.u32 %v2493, 127
    %v2495 = vld [vmem:[%s7] sm:$0x3]
    %2496 = vset.pattern.permute.xlu0 0
    %2497 = vperm.xlu0 %2496, %v2495
    %v2498 = vpop.permute.xlu0 %2497
    %vm2499 = vcmp.eq.s32.totalorder %v2494, %v2498
    %v2500 = vsel %vm2499, 1, 0
    %v2501 = vcvt.s32.f32 %v2500
    %v2503 = vlaneseq
    %v2504 = vshrl.u32 %v2503, 7
    %v2505 = vsub.s32 0, %v2504
    %v2506 = vrot.slane %v2491, %v2505
    %v2508 = vadd.f32 %v2506, %v2479
    %v2509 = vmul.f32 %v2508, %v2501
    %v2510 = vld [vmem:[%s5 + $0x2] sm:$0x3]
    %v2511 = vld [vmem:[%s7 + $0x2] sm:$0x3]
    %2512 = vset.pattern.permute.xlu0 0
    %2513 = vperm.xlu0 %2512, %v2511
    %v2514 = vpop.permute.xlu0 %2513
    %vm2515 = vcmp.eq.s32.totalorder %v2494, %v2514
    %v2516 = vsel %vm2515, 1, 0
    %v2517 = vcvt.s32.f32 %v2516
    %v2519 = vrot.slane %v2517, 6
    %v2521 = vmul.f32 %v2479, %v2519
    %2523 = vset.pattern.permute.xlu0 0
    %2524 = vperm.xlu0 %2523, %v2510
    %v2525 = vpop.permute.xlu0 %2524
    %v2526 = vrot.slane %v2525, 6
    %v2528 = vmul.f32 %v2521, %v2526
    %v2530 = vrot.slane %v2528, 2
    %v2532 = vadd.f32 %v2509, %v2530
    %vm2533 = vcmp.gt.f32.partialorder %v2510, 0.0
    %v2534 = vsel %vm2533, 1, 0
    %2535 = vset.pattern.permute.xlu0 0
    %2536 = vperm.xlu0 %2535, %v2534
    %v2537 = vpop.permute.xlu0 %2536
    %vm2538 = vcmp.eq.s32.totalorder %v2537, 1
    %v2539 = vsel %vm2538, %v2517, %v2501
    %v2542 = vunpack.c.l.s4 1966171168
    %v2543 = vunpack.c.0.s8 %v2542
    %v2544 = vlaneseq
    %v2545 = vshrl.u32 %v2544, 7
    %v2546 = vsub.s32 %v2543, %v2545
    %v2547 = vrot.slane %v2508, %v2546
    %v2548 = vcombine.high %v2547, %v2547
    %v2550 = vunpack.c.l.s4 1966171168
    %v2551 = vunpack.c.0.s8 %v2550
    %v2552 = vlaneseq
    %v2553 = vshrl.u32 %v2552, 7
    %v2554 = vsub.s32 %v2551, %v2553
    %v2555 = vrot.slane %v2547, %v2554
    %v2557 = vunpack.c.l.s4 1966171168
    %v2558 = vunpack.c.0.s8 %v2557
    %v2559 = vlaneseq
    %v2560 = vshrl.u32 %v2559, 7
    %v2561 = vsub.s32 %v2558, %v2560
    %v2562 = vrot.slane %v2548, %v2561
    %v2563 = vlaneseq
    %v2564 = vshrl.u32 %v2563, 7
    %v2565 = vsub.s32 0, %v2564
    %v2566 = vrot.slane %v2555, %v2565
    %v2567 = vlaneseq
    %v2568 = vshrl.u32 %v2567, 7
    %v2569 = vsub.s32 0, %v2568
    %v2570 = vrot.slane %v2562, %v2569
    %v2573 = vadd.f32 %v2566, %v2490
    %v2574 = vadd.f32 %v2570, %v2490
    %vm2575 = vcmask 36864
    %v2576 = vsel %vm2575, %v2573, -inf
    %2577 = vmax.xlane.f32.xlu0 %v2576
    %v2578 = vpop.xlane.xlu0 %2577
    %v2579 = vsel %vm2575, %v2574, -inf
    %2580 = vmax.xlane.f32.xlu0 %v2579
    %v2581 = vpop.xlane.xlu0 %2580
    %v2582 = vsub.f32 %v2573, %v2578
    %v2583 = vsub.f32 %v2574, %v2581
    %v2584 = vmul.f32 %v2582, 1.442695
    %v2585 = vpow.pop %v2584
    %v2586 = vmul.f32 %v2583, 1.442695
    %v2587 = vpow.pop %v2586
    %v2588 = vsel %vm2575, %v2585, 0.0
    %2589 = vadd.xlane.f32.xlu0 %v2588
    %v2590 = vpop.xlane.xlu0 %2589
    %v2591 = vsel %vm2575, %v2587, 0.0
    %2592 = vadd.xlane.f32.xlu0 %v2591
    %v2593 = vpop.xlane.xlu0 %2592
    %v2594 = vlog2.pop %v2590
    %v2595 = vmul.f32 %v2594, 0.6931472
    %v2596 = vlog2.pop %v2593
    %v2597 = vmul.f32 %v2596, 0.6931472
    %v2598 = vadd.f32 %v2578, %v2595
    %v2599 = vadd.f32 %v2581, %v2597
    %v2601 = vlaneseq
    %v2602 = vshrl.u32 %v2601, 7
    %v2603 = vsub.s32 2, %v2602
    %v2604 = vrot.slane %v2479, %v2603
    %2606 = vbcast.lane.b32.xlu0 %v2604, 256
    %v2607 = vpop.permute.xlu0 %2606
    %v2608 = vlaneseq
    %v2609 = vshrl.u32 %v2608, 7
    %v2610 = vsub.s32 3, %v2609
    %v2611 = vrot.slane %v2479, %v2610
    %2613 = vbcast.lane.b32.xlu0 %v2611, 256
    %v2614 = vpop.permute.xlu0 %2613
    %v2617 = vadd.f32 %v2598, %v2607
    %v2618 = vadd.f32 %v2599, %v2614
    %2621 = vset.pattern.permute.xlu0 0
    %2622 = vperm.xlu0 %2621, %v2617
    %v2623 = vpop.permute.xlu0 %2622
    %2624 = vset.pattern.permute.xlu0 0
    %2625 = vperm.xlu0 %2624, %v2618
    %v2626 = vpop.permute.xlu0 %2625
    %v2627 = vlaneseq
    %v2628 = vshrl.u32 %v2627, 7
    %v2629 = vsub.s32 %v2494, %v2628
    %v2630 = vrot.slane %v2623, %v2629
    %v2631 = vlaneseq
    %v2632 = vshrl.u32 %v2631, 7
    %v2633 = vsub.s32 %v2494, %v2632
    %v2634 = vrot.slane %v2626, %v2633
    %vm2635 = vcmask 1041409
    %v2636 = vsel %vm2635, %v2634, %v2630
    %v2638 = vsel %vm2538, %v2636, %v2508
    %v2639 = vld [vmem:[%s5 + $0x4] sm:$0x3]
    %v2640 = vld [vmem:[%s7 + $0x4] sm:$0x3]
    %2641 = vset.pattern.permute.xlu0 0
    %2642 = vperm.xlu0 %2641, %v2640
    %v2643 = vpop.permute.xlu0 %2642
    %vm2644 = vcmp.eq.s32.totalorder %v2494, %v2643
    %v2645 = vsel %vm2644, 1, 0
    %v2646 = vcvt.s32.f32 %v2645
    %v2648 = vrot.slane %v2646, 4
    %v2650 = vmul.f32 %v2479, %v2648
    %2652 = vset.pattern.permute.xlu0 0
    %2653 = vperm.xlu0 %2652, %v2639
    %v2654 = vpop.permute.xlu0 %2653
    %v2655 = vrot.slane %v2654, 4
    %v2657 = vmul.f32 %v2650, %v2655
    %v2659 = vrot.slane %v2657, 4
    %v2661 = vadd.f32 %v2532, %v2659
    %vm2662 = vcmp.gt.f32.partialorder %v2639, 0.0
    %v2663 = vsel %vm2662, 1, 0
    %2664 = vset.pattern.permute.xlu0 0
    %2665 = vperm.xlu0 %2664, %v2663
    %v2666 = vpop.permute.xlu0 %2665
    %vm2667 = vcmp.eq.s32.totalorder %v2666, 1
    %v2668 = vsel %vm2667, %v2646, %v2539
    %v2671 = vunpack.c.l.s4 1966171168
    %v2672 = vunpack.c.0.s8 %v2671
    %v2673 = vlaneseq
    %v2674 = vshrl.u32 %v2673, 7
    %v2675 = vsub.s32 %v2672, %v2674
    %v2676 = vrot.slane %v2638, %v2675
    %v2677 = vcombine.high %v2676, %v2676
    %v2679 = vunpack.c.l.s4 1966171168
    %v2680 = vunpack.c.0.s8 %v2679
    %v2681 = vlaneseq
    %v2682 = vshrl.u32 %v2681, 7
    %v2683 = vsub.s32 %v2680, %v2682
    %v2684 = vrot.slane %v2676, %v2683
    %v2686 = vunpack.c.l.s4 1966171168
    %v2687 = vunpack.c.0.s8 %v2686
    %v2688 = vlaneseq
    %v2689 = vshrl.u32 %v2688, 7
    %v2690 = vsub.s32 %v2687, %v2689
    %v2691 = vrot.slane %v2677, %v2690
    %v2692 = vlaneseq
    %v2693 = vshrl.u32 %v2692, 7
    %v2694 = vsub.s32 0, %v2693
    %v2695 = vrot.slane %v2684, %v2694
    %v2696 = vlaneseq
    %v2697 = vshrl.u32 %v2696, 7
    %v2698 = vsub.s32 0, %v2697
    %v2699 = vrot.slane %v2691, %v2698
    %v2702 = vadd.f32 %v2695, %v2490
    %v2703 = vadd.f32 %v2699, %v2490
    %v2704 = vsel %vm2575, %v2702, -inf
    %2705 = vmax.xlane.f32.xlu0 %v2704
    %v2706 = vpop.xlane.xlu0 %2705
    %v2707 = vsel %vm2575, %v2703, -inf
    %2708 = vmax.xlane.f32.xlu0 %v2707
    %v2709 = vpop.xlane.xlu0 %2708
    %v2710 = vsub.f32 %v2702, %v2706
    %v2711 = vsub.f32 %v2703, %v2709
    %v2712 = vmul.f32 %v2710, 1.442695
    %v2713 = vpow.pop %v2712
    %v2714 = vmul.f32 %v2711, 1.442695
    %v2715 = vpow.pop %v2714
    %v2716 = vsel %vm2575, %v2713, 0.0
    %2717 = vadd.xlane.f32.xlu0 %v2716
    %v2718 = vpop.xlane.xlu0 %2717
    %v2719 = vsel %vm2575, %v2715, 0.0
    %2720 = vadd.xlane.f32.xlu0 %v2719
    %v2721 = vpop.xlane.xlu0 %2720
    %v2722 = vlog2.pop %v2718
    %v2723 = vmul.f32 %v2722, 0.6931472
    %v2724 = vlog2.pop %v2721
    %v2725 = vmul.f32 %v2724, 0.6931472
    %v2726 = vadd.f32 %v2706, %v2723
    %v2727 = vadd.f32 %v2709, %v2725
    %v2728 = vlaneseq
    %v2729 = vshrl.u32 %v2728, 7
    %v2730 = vsub.s32 4, %v2729
    %v2731 = vrot.slane %v2479, %v2730
    %2733 = vbcast.lane.b32.xlu0 %v2731, 256
    %v2734 = vpop.permute.xlu0 %2733
    %v2735 = vlaneseq
    %v2736 = vshrl.u32 %v2735, 7
    %v2737 = vsub.s32 5, %v2736
    %v2738 = vrot.slane %v2479, %v2737
    %2740 = vbcast.lane.b32.xlu0 %v2738, 256
    %v2741 = vpop.permute.xlu0 %2740
    %v2744 = vadd.f32 %v2726, %v2734
    %v2745 = vadd.f32 %v2727, %v2741
    %2748 = vset.pattern.permute.xlu0 0
    %2749 = vperm.xlu0 %2748, %v2744
    %v2750 = vpop.permute.xlu0 %2749
    %2751 = vset.pattern.permute.xlu0 0
    %2752 = vperm.xlu0 %2751, %v2745
    %v2753 = vpop.permute.xlu0 %2752
    %v2754 = vlaneseq
    %v2755 = vshrl.u32 %v2754, 7
    %v2756 = vsub.s32 %v2494, %v2755
    %v2757 = vrot.slane %v2750, %v2756
    %v2758 = vlaneseq
    %v2759 = vshrl.u32 %v2758, 7
    %v2760 = vsub.s32 %v2494, %v2759
    %v2761 = vrot.slane %v2753, %v2760
    %v2762 = vsel %vm2635, %v2761, %v2757
    %v2764 = vsel %vm2667, %v2762, %v2638
    %v2765 = vld [vmem:[%s5 + $0x6] sm:$0x3]
    %v2766 = vld [vmem:[%s7 + $0x6] sm:$0x3]
    %2767 = vset.pattern.permute.xlu0 0
    %2768 = vperm.xlu0 %2767, %v2766
    %v2769 = vpop.permute.xlu0 %2768
    %vm2770 = vcmp.eq.s32.totalorder %v2494, %v2769
    %v2771 = vsel %vm2770, 1, 0
    %v2772 = vcvt.s32.f32 %v2771
    %v2774 = vrot.slane %v2772, 2
    %v2776 = vmul.f32 %v2479, %v2774
    %2778 = vset.pattern.permute.xlu0 0
    %2779 = vperm.xlu0 %2778, %v2765
    %v2780 = vpop.permute.xlu0 %2779
    %v2781 = vrot.slane %v2780, 2
    %v2783 = vmul.f32 %v2776, %v2781
    %v2785 = vrot.slane %v2783, 6
    %v2787 = vadd.f32 %v2661, %v2785
    %vm2788 = vcmp.gt.f32.partialorder %v2765, 0.0
    %v2789 = vsel %vm2788, 1, 0
    %2790 = vset.pattern.permute.xlu0 0
    %2791 = vperm.xlu0 %2790, %v2789
    %v2792 = vpop.permute.xlu0 %2791
    %vm2793 = vcmp.eq.s32.totalorder %v2792, 1
    %v2794 = vsel %vm2793, %v2772, %v2668
    %v2797 = vunpack.c.l.s4 1966171168
    %v2798 = vunpack.c.0.s8 %v2797
    %v2799 = vlaneseq
    %v2800 = vshrl.u32 %v2799, 7
    %v2801 = vsub.s32 %v2798, %v2800
    %v2802 = vrot.slane %v2764, %v2801
    %v2803 = vcombine.high %v2802, %v2802
    %v2805 = vunpack.c.l.s4 1966171168
    %v2806 = vunpack.c.0.s8 %v2805
    %v2807 = vlaneseq
    %v2808 = vshrl.u32 %v2807, 7
    %v2809 = vsub.s32 %v2806, %v2808
    %v2810 = vrot.slane %v2802, %v2809
    %v2812 = vunpack.c.l.s4 1966171168
    %v2813 = vunpack.c.0.s8 %v2812
    %v2814 = vlaneseq
    %v2815 = vshrl.u32 %v2814, 7
    %v2816 = vsub.s32 %v2813, %v2815
    %v2817 = vrot.slane %v2803, %v2816
    %v2818 = vlaneseq
    %v2819 = vshrl.u32 %v2818, 7
    %v2820 = vsub.s32 0, %v2819
    %v2821 = vrot.slane %v2810, %v2820
    %v2822 = vlaneseq
    %v2823 = vshrl.u32 %v2822, 7
    %v2824 = vsub.s32 0, %v2823
    %v2825 = vrot.slane %v2817, %v2824
    %v2828 = vadd.f32 %v2821, %v2490
    %v2829 = vadd.f32 %v2825, %v2490
    %v2830 = vsel %vm2575, %v2828, -inf
    %2831 = vmax.xlane.f32.xlu0 %v2830
    %v2832 = vpop.xlane.xlu0 %2831
    %v2833 = vsel %vm2575, %v2829, -inf
    %2834 = vmax.xlane.f32.xlu0 %v2833
    %v2835 = vpop.xlane.xlu0 %2834
    %v2836 = vsub.f32 %v2828, %v2832
    %v2837 = vsub.f32 %v2829, %v2835
    %v2838 = vmul.f32 %v2836, 1.442695
    %v2839 = vpow.pop %v2838
    %v2840 = vmul.f32 %v2837, 1.442695
    %v2841 = vpow.pop %v2840
    %v2842 = vsel %vm2575, %v2839, 0.0
    %2843 = vadd.xlane.f32.xlu0 %v2842
    %v2844 = vpop.xlane.xlu0 %2843
    %v2845 = vsel %vm2575, %v2841, 0.0
    %2846 = vadd.xlane.f32.xlu0 %v2845
    %v2847 = vpop.xlane.xlu0 %2846
    %v2848 = vlog2.pop %v2844
    %v2849 = vmul.f32 %v2848, 0.6931472
    %v2850 = vlog2.pop %v2847
    %v2851 = vmul.f32 %v2850, 0.6931472
    %v2852 = vadd.f32 %v2832, %v2849
    %v2853 = vadd.f32 %v2835, %v2851
    %v2854 = vlaneseq
    %v2855 = vshrl.u32 %v2854, 7
    %v2856 = vsub.s32 6, %v2855
    %v2857 = vrot.slane %v2479, %v2856
    %2859 = vbcast.lane.b32.xlu0 %v2857, 256
    %v2860 = vpop.permute.xlu0 %2859
    %v2861 = vlaneseq
    %v2862 = vshrl.u32 %v2861, 7
    %v2863 = vsub.s32 7, %v2862
    %v2864 = vrot.slane %v2479, %v2863
    %2866 = vbcast.lane.b32.xlu0 %v2864, 256
    %v2867 = vpop.permute.xlu0 %2866
    %v2870 = vadd.f32 %v2852, %v2860
    %v2871 = vadd.f32 %v2853, %v2867
    %2874 = vset.pattern.permute.xlu0 0
    %2875 = vperm.xlu0 %2874, %v2870
    %v2876 = vpop.permute.xlu0 %2875
    %2877 = vset.pattern.permute.xlu0 0
    %2878 = vperm.xlu0 %2877, %v2871
    %v2879 = vpop.permute.xlu0 %2878
    %v2880 = vlaneseq
    %v2881 = vshrl.u32 %v2880, 7
    %v2882 = vsub.s32 %v2494, %v2881
    %v2883 = vrot.slane %v2876, %v2882
    %v2884 = vlaneseq
    %v2885 = vshrl.u32 %v2884, 7
    %v2886 = vsub.s32 %v2494, %v2885
    %v2887 = vrot.slane %v2879, %v2886
    %v2888 = vsel %vm2635, %v2887, %v2883
    %v2890 = vsel %vm2793, %v2888, %v2764
    %v2891 = vld [vmem:[%s5 + $0x8] sm:$0x3]
    %v2892 = vld [vmem:[%s7 + $0x8] sm:$0x3]
    %2893 = vset.pattern.permute.xlu0 0
    %2894 = vperm.xlu0 %2893, %v2892
    %v2895 = vpop.permute.xlu0 %2894
    %vm2896 = vcmp.eq.s32.totalorder %v2494, %v2895
    %v2897 = vsel %vm2896, 1, 0
    %v2898 = vcvt.s32.f32 %v2897
    %v2899 = vmul.f32 %v2484, %v2898
    %2901 = vset.pattern.permute.xlu0 0
    %2902 = vperm.xlu0 %2901, %v2891
    %v2903 = vpop.permute.xlu0 %2902
    %v2905 = vmul.f32 %v2899, %v2903
    %v2906 = vadd.f32 %v2787, %v2905
    %vm2907 = vcmp.gt.f32.partialorder %v2891, 0.0
    %v2908 = vsel %vm2907, 1, 0
    %2909 = vset.pattern.permute.xlu0 0
    %2910 = vperm.xlu0 %2909, %v2908
    %v2911 = vpop.permute.xlu0 %2910
    %vm2912 = vcmp.eq.s32.totalorder %v2911, 1
    %v2913 = vsel %vm2912, %v2898, %v2794
    %v2916 = vunpack.c.l.s4 1966171168
    %v2917 = vunpack.c.0.s8 %v2916
    %v2918 = vlaneseq
    %v2919 = vshrl.u32 %v2918, 7
    %v2920 = vsub.s32 %v2917, %v2919
    %v2921 = vrot.slane %v2890, %v2920
    %v2922 = vcombine.high %v2921, %v2921
    %v2924 = vunpack.c.l.s4 1966171168
    %v2925 = vunpack.c.0.s8 %v2924
    %v2926 = vlaneseq
    %v2927 = vshrl.u32 %v2926, 7
    %v2928 = vsub.s32 %v2925, %v2927
    %v2929 = vrot.slane %v2921, %v2928
    %v2931 = vunpack.c.l.s4 1966171168
    %v2932 = vunpack.c.0.s8 %v2931
    %v2933 = vlaneseq
    %v2934 = vshrl.u32 %v2933, 7
    %v2935 = vsub.s32 %v2932, %v2934
    %v2936 = vrot.slane %v2922, %v2935
    %v2937 = vlaneseq
    %v2938 = vshrl.u32 %v2937, 7
    %v2939 = vsub.s32 0, %v2938
    %v2940 = vrot.slane %v2929, %v2939
    %v2941 = vlaneseq
    %v2942 = vshrl.u32 %v2941, 7
    %v2943 = vsub.s32 0, %v2942
    %v2944 = vrot.slane %v2936, %v2943
    %v2947 = vadd.f32 %v2940, %v2490
    %v2948 = vadd.f32 %v2944, %v2490
    %v2949 = vsel %vm2575, %v2947, -inf
    %2950 = vmax.xlane.f32.xlu0 %v2949
    %v2951 = vpop.xlane.xlu0 %2950
    %v2952 = vsel %vm2575, %v2948, -inf
    %2953 = vmax.xlane.f32.xlu0 %v2952
    %v2954 = vpop.xlane.xlu0 %2953
    %v2955 = vsub.f32 %v2947, %v2951
    %v2956 = vsub.f32 %v2948, %v2954
    %v2957 = vmul.f32 %v2955, 1.442695
    %v2958 = vpow.pop %v2957
    %v2959 = vmul.f32 %v2956, 1.442695
    %v2960 = vpow.pop %v2959
    %v2961 = vsel %vm2575, %v2958, 0.0
    %2962 = vadd.xlane.f32.xlu0 %v2961
    %v2963 = vpop.xlane.xlu0 %2962
    %v2964 = vsel %vm2575, %v2960, 0.0
    %2965 = vadd.xlane.f32.xlu0 %v2964
    %v2966 = vpop.xlane.xlu0 %2965
    %v2967 = vlog2.pop %v2963
    %v2968 = vmul.f32 %v2967, 0.6931472
    %v2969 = vlog2.pop %v2966
    %v2970 = vmul.f32 %v2969, 0.6931472
    %v2971 = vadd.f32 %v2951, %v2968
    %v2972 = vadd.f32 %v2954, %v2970
    %v2974 = vlaneseq
    %v2975 = vshrl.u32 %v2974, 7
    %v2976 = vsub.s32 0, %v2975
    %v2977 = vrot.slane %v2484, %v2976
    %2979 = vbcast.lane.b32.xlu0 %v2977, 256
    %v2980 = vpop.permute.xlu0 %2979
    %v2981 = vlaneseq
    %v2982 = vshrl.u32 %v2981, 7
    %v2983 = vsub.s32 1, %v2982
    %v2984 = vrot.slane %v2484, %v2983
    %2986 = vbcast.lane.b32.xlu0 %v2984, 256
    %v2987 = vpop.permute.xlu0 %2986
    %v2990 = vadd.f32 %v2971, %v2980
    %v2991 = vadd.f32 %v2972, %v2987
    %2994 = vset.pattern.permute.xlu0 0
    %2995 = vperm.xlu0 %2994, %v2990
    %v2996 = vpop.permute.xlu0 %2995
    %2997 = vset.pattern.permute.xlu0 0
    %2998 = vperm.xlu0 %2997, %v2991
    %v2999 = vpop.permute.xlu0 %2998
    %v3000 = vlaneseq
    %v3001 = vshrl.u32 %v3000, 7
    %v3002 = vsub.s32 %v2494, %v3001
    %v3003 = vrot.slane %v2996, %v3002
    %v3004 = vlaneseq
    %v3005 = vshrl.u32 %v3004, 7
    %v3006 = vsub.s32 %v2494, %v3005
    %v3007 = vrot.slane %v2999, %v3006
    %v3008 = vsel %vm2635, %v3007, %v3003
    %v3010 = vsel %vm2912, %v3008, %v2890
    %v3011 = vld [vmem:[%s5 + $0xa] sm:$0x3]
    %v3012 = vld [vmem:[%s7 + $0xa] sm:$0x3]
    %3013 = vset.pattern.permute.xlu0 0
    %3014 = vperm.xlu0 %3013, %v3012
    %v3015 = vpop.permute.xlu0 %3014
    %vm3016 = vcmp.eq.s32.totalorder %v2494, %v3015
    %v3017 = vsel %vm3016, 1, 0
    %v3018 = vcvt.s32.f32 %v3017
    %v3020 = vrot.slane %v3018, 6
    %v3022 = vmul.f32 %v2484, %v3020
    %3024 = vset.pattern.permute.xlu0 0
    %3025 = vperm.xlu0 %3024, %v3011
    %v3026 = vpop.permute.xlu0 %3025
    %v3027 = vrot.slane %v3026, 6
    %v3029 = vmul.f32 %v3022, %v3027
    %v3031 = vrot.slane %v3029, 2
    %v3033 = vadd.f32 %v2906, %v3031
    %vm3034 = vcmp.gt.f32.partialorder %v3011, 0.0
    %v3035 = vsel %vm3034, 1, 0
    %3036 = vset.pattern.permute.xlu0 0
    %3037 = vperm.xlu0 %3036, %v3035
    %v3038 = vpop.permute.xlu0 %3037
    %vm3039 = vcmp.eq.s32.totalorder %v3038, 1
    %v3040 = vsel %vm3039, %v3018, %v2913
    %v3043 = vunpack.c.l.s4 1966171168
    %v3044 = vunpack.c.0.s8 %v3043
    %v3045 = vlaneseq
    %v3046 = vshrl.u32 %v3045, 7
    %v3047 = vsub.s32 %v3044, %v3046
    %v3048 = vrot.slane %v3010, %v3047
    %v3049 = vcombine.high %v3048, %v3048
    %v3051 = vunpack.c.l.s4 1966171168
    %v3052 = vunpack.c.0.s8 %v3051
    %v3053 = vlaneseq
    %v3054 = vshrl.u32 %v3053, 7
    %v3055 = vsub.s32 %v3052, %v3054
    %v3056 = vrot.slane %v3048, %v3055
    %v3058 = vunpack.c.l.s4 1966171168
    %v3059 = vunpack.c.0.s8 %v3058
    %v3060 = vlaneseq
    %v3061 = vshrl.u32 %v3060, 7
    %v3062 = vsub.s32 %v3059, %v3061
    %v3063 = vrot.slane %v3049, %v3062
    %v3064 = vlaneseq
    %v3065 = vshrl.u32 %v3064, 7
    %v3066 = vsub.s32 0, %v3065
    %v3067 = vrot.slane %v3056, %v3066
    %v3068 = vlaneseq
    %v3069 = vshrl.u32 %v3068, 7
    %v3070 = vsub.s32 0, %v3069
    %v3071 = vrot.slane %v3063, %v3070
    %v3074 = vadd.f32 %v3067, %v2490
    %v3075 = vadd.f32 %v3071, %v2490
    %v3076 = vsel %vm2575, %v3074, -inf
    %3077 = vmax.xlane.f32.xlu0 %v3076
    %v3078 = vpop.xlane.xlu0 %3077
    %v3079 = vsel %vm2575, %v3075, -inf
    %3080 = vmax.xlane.f32.xlu0 %v3079
    %v3081 = vpop.xlane.xlu0 %3080
    %v3082 = vsub.f32 %v3074, %v3078
    %v3083 = vsub.f32 %v3075, %v3081
    %v3084 = vmul.f32 %v3082, 1.442695
    %v3085 = vpow.pop %v3084
    %v3086 = vmul.f32 %v3083, 1.442695
    %v3087 = vpow.pop %v3086
    %v3088 = vsel %vm2575, %v3085, 0.0
    %3089 = vadd.xlane.f32.xlu0 %v3088
    %v3090 = vpop.xlane.xlu0 %3089
    %v3091 = vsel %vm2575, %v3087, 0.0
    %3092 = vadd.xlane.f32.xlu0 %v3091
    %v3093 = vpop.xlane.xlu0 %3092
    %v3094 = vlog2.pop %v3090
    %v3095 = vmul.f32 %v3094, 0.6931472
    %v3096 = vlog2.pop %v3093
    %v3097 = vmul.f32 %v3096, 0.6931472
    %v3098 = vadd.f32 %v3078, %v3095
    %v3099 = vadd.f32 %v3081, %v3097
    %v3100 = vlaneseq
    %v3101 = vshrl.u32 %v3100, 7
    %v3102 = vsub.s32 2, %v3101
    %v3103 = vrot.slane %v2484, %v3102
    %3105 = vbcast.lane.b32.xlu0 %v3103, 256
    %v3106 = vpop.permute.xlu0 %3105
    %v3107 = vlaneseq
    %v3108 = vshrl.u32 %v3107, 7
    %v3109 = vsub.s32 3, %v3108
    %v3110 = vrot.slane %v2484, %v3109
    %3112 = vbcast.lane.b32.xlu0 %v3110, 256
    %v3113 = vpop.permute.xlu0 %3112
    %v3116 = vadd.f32 %v3098, %v3106
    %v3117 = vadd.f32 %v3099, %v3113
    %3120 = vset.pattern.permute.xlu0 0
    %3121 = vperm.xlu0 %3120, %v3116
    %v3122 = vpop.permute.xlu0 %3121
    %3123 = vset.pattern.permute.xlu0 0
    %3124 = vperm.xlu0 %3123, %v3117
    %v3125 = vpop.permute.xlu0 %3124
    %v3126 = vlaneseq
    %v3127 = vshrl.u32 %v3126, 7
    %v3128 = vsub.s32 %v2494, %v3127
    %v3129 = vrot.slane %v3122, %v3128
    %v3130 = vlaneseq
    %v3131 = vshrl.u32 %v3130, 7
    %v3132 = vsub.s32 %v2494, %v3131
    %v3133 = vrot.slane %v3125, %v3132
    %v3134 = vsel %vm2635, %v3133, %v3129
    %v3136 = vsel %vm3039, %v3134, %v3010
    %v3137 = vld [vmem:[%s5 + $0xc] sm:$0x3]
    %v3138 = vld [vmem:[%s7 + $0xc] sm:$0x3]
    %3139 = vset.pattern.permute.xlu0 0
    %3140 = vperm.xlu0 %3139, %v3138
    %v3141 = vpop.permute.xlu0 %3140
    %vm3142 = vcmp.eq.s32.totalorder %v2494, %v3141
    %v3143 = vsel %vm3142, 1, 0
    %v3144 = vcvt.s32.f32 %v3143
    %v3146 = vrot.slane %v3144, 4
    %v3148 = vmul.f32 %v2484, %v3146
    %3150 = vset.pattern.permute.xlu0 0
    %3151 = vperm.xlu0 %3150, %v3137
    %v3152 = vpop.permute.xlu0 %3151
    %v3153 = vrot.slane %v3152, 4
    %v3155 = vmul.f32 %v3148, %v3153
    %v3157 = vrot.slane %v3155, 4
    %v3159 = vadd.f32 %v3033, %v3157
    %vm3160 = vcmp.gt.f32.partialorder %v3137, 0.0
    %v3161 = vsel %vm3160, 1, 0
    %3162 = vset.pattern.permute.xlu0 0
    %3163 = vperm.xlu0 %3162, %v3161
    %v3164 = vpop.permute.xlu0 %3163
    %vm3165 = vcmp.eq.s32.totalorder %v3164, 1
    %v3166 = vsel %vm3165, %v3144, %v3040
    %v3169 = vunpack.c.l.s4 1966171168
    %v3170 = vunpack.c.0.s8 %v3169
    %v3171 = vlaneseq
    %v3172 = vshrl.u32 %v3171, 7
    %v3173 = vsub.s32 %v3170, %v3172
    %v3174 = vrot.slane %v3136, %v3173
    %v3175 = vcombine.high %v3174, %v3174
    %v3177 = vunpack.c.l.s4 1966171168
    %v3178 = vunpack.c.0.s8 %v3177
    %v3179 = vlaneseq
    %v3180 = vshrl.u32 %v3179, 7
    %v3181 = vsub.s32 %v3178, %v3180
    %v3182 = vrot.slane %v3174, %v3181
    %v3184 = vunpack.c.l.s4 1966171168
    %v3185 = vunpack.c.0.s8 %v3184
    %v3186 = vlaneseq
    %v3187 = vshrl.u32 %v3186, 7
    %v3188 = vsub.s32 %v3185, %v3187
    %v3189 = vrot.slane %v3175, %v3188
    %v3190 = vlaneseq
    %v3191 = vshrl.u32 %v3190, 7
    %v3192 = vsub.s32 0, %v3191
    %v3193 = vrot.slane %v3182, %v3192
    %v3194 = vlaneseq
    %v3195 = vshrl.u32 %v3194, 7
    %v3196 = vsub.s32 0, %v3195
    %v3197 = vrot.slane %v3189, %v3196
    %v3200 = vadd.f32 %v3193, %v2490
    %v3201 = vadd.f32 %v3197, %v2490
    %v3202 = vsel %vm2575, %v3200, -inf
    %3203 = vmax.xlane.f32.xlu0 %v3202
    %v3204 = vpop.xlane.xlu0 %3203
    %v3205 = vsel %vm2575, %v3201, -inf
    %3206 = vmax.xlane.f32.xlu0 %v3205
    %v3207 = vpop.xlane.xlu0 %3206
    %v3208 = vsub.f32 %v3200, %v3204
    %v3209 = vsub.f32 %v3201, %v3207
    %v3210 = vmul.f32 %v3208, 1.442695
    %v3211 = vpow.pop %v3210
    %v3212 = vmul.f32 %v3209, 1.442695
    %v3213 = vpow.pop %v3212
    %v3214 = vsel %vm2575, %v3211, 0.0
    %3215 = vadd.xlane.f32.xlu0 %v3214
    %v3216 = vpop.xlane.xlu0 %3215
    %v3217 = vsel %vm2575, %v3213, 0.0
    %3218 = vadd.xlane.f32.xlu0 %v3217
    %v3219 = vpop.xlane.xlu0 %3218
    %v3220 = vlog2.pop %v3216
    %v3221 = vmul.f32 %v3220, 0.6931472
    %v3222 = vlog2.pop %v3219
    %v3223 = vmul.f32 %v3222, 0.6931472
    %v3224 = vadd.f32 %v3204, %v3221
    %v3225 = vadd.f32 %v3207, %v3223
    %v3226 = vlaneseq
    %v3227 = vshrl.u32 %v3226, 7
    %v3228 = vsub.s32 4, %v3227
    %v3229 = vrot.slane %v2484, %v3228
    %3231 = vbcast.lane.b32.xlu0 %v3229, 256
    %v3232 = vpop.permute.xlu0 %3231
    %v3233 = vlaneseq
    %v3234 = vshrl.u32 %v3233, 7
    %v3235 = vsub.s32 5, %v3234
    %v3236 = vrot.slane %v2484, %v3235
    %3238 = vbcast.lane.b32.xlu0 %v3236, 256
    %v3239 = vpop.permute.xlu0 %3238
    %v3242 = vadd.f32 %v3224, %v3232
    %v3243 = vadd.f32 %v3225, %v3239
    %3246 = vset.pattern.permute.xlu0 0
    %3247 = vperm.xlu0 %3246, %v3242
    %v3248 = vpop.permute.xlu0 %3247
    %3249 = vset.pattern.permute.xlu0 0
    %3250 = vperm.xlu0 %3249, %v3243
    %v3251 = vpop.permute.xlu0 %3250
    %v3252 = vlaneseq
    %v3253 = vshrl.u32 %v3252, 7
    %v3254 = vsub.s32 %v2494, %v3253
    %v3255 = vrot.slane %v3248, %v3254
    %v3256 = vlaneseq
    %v3257 = vshrl.u32 %v3256, 7
    %v3258 = vsub.s32 %v2494, %v3257
    %v3259 = vrot.slane %v3251, %v3258
    %v3260 = vsel %vm2635, %v3259, %v3255
    %v3262 = vsel %vm3165, %v3260, %v3136
    %v3263 = vld [vmem:[%s5 + $0xe] sm:$0x3]
    %v3264 = vld [vmem:[%s7 + $0xe] sm:$0x3]
    %3265 = vset.pattern.permute.xlu0 0
    %3266 = vperm.xlu0 %3265, %v3264
    %v3267 = vpop.permute.xlu0 %3266
    %vm3268 = vcmp.eq.s32.totalorder %v2494, %v3267
    %v3269 = vsel %vm3268, 1, 0
    %v3270 = vcvt.s32.f32 %v3269
    %v3272 = vrot.slane %v3270, 2
    %v3274 = vmul.f32 %v2484, %v3272
    %3276 = vset.pattern.permute.xlu0 0
    %3277 = vperm.xlu0 %3276, %v3263
    %v3278 = vpop.permute.xlu0 %3277
    %v3279 = vrot.slane %v3278, 2
    %v3281 = vmul.f32 %v3274, %v3279
    %v3283 = vrot.slane %v3281, 6
    %v3285 = vadd.f32 %v3159, %v3283
    %vm3286 = vcmp.gt.f32.partialorder %v3263, 0.0
    %v3287 = vsel %vm3286, 1, 0
    %3288 = vset.pattern.permute.xlu0 0
    %3289 = vperm.xlu0 %3288, %v3287
    %v3290 = vpop.permute.xlu0 %3289
    %vm3291 = vcmp.eq.s32.totalorder %v3290, 1
    %v3292 = vsel %vm3291, %v3270, %v3166
    %v3295 = vunpack.c.l.s4 1966171168
    %v3296 = vunpack.c.0.s8 %v3295
    %v3297 = vlaneseq
    %v3298 = vshrl.u32 %v3297, 7
    %v3299 = vsub.s32 %v3296, %v3298
    %v3300 = vrot.slane %v3262, %v3299
    %v3301 = vcombine.high %v3300, %v3300
    %v3303 = vunpack.c.l.s4 1966171168
    %v3304 = vunpack.c.0.s8 %v3303
    %v3305 = vlaneseq
    %v3306 = vshrl.u32 %v3305, 7
    %v3307 = vsub.s32 %v3304, %v3306
    %v3308 = vrot.slane %v3300, %v3307
    %v3310 = vunpack.c.l.s4 1966171168
    %v3311 = vunpack.c.0.s8 %v3310
    %v3312 = vlaneseq
    %v3313 = vshrl.u32 %v3312, 7
    %v3314 = vsub.s32 %v3311, %v3313
    %v3315 = vrot.slane %v3301, %v3314
    %v3316 = vlaneseq
    %v3317 = vshrl.u32 %v3316, 7
    %v3318 = vsub.s32 0, %v3317
    %v3319 = vrot.slane %v3308, %v3318
    %v3320 = vlaneseq
    %v3321 = vshrl.u32 %v3320, 7
    %v3322 = vsub.s32 0, %v3321
    %v3323 = vrot.slane %v3315, %v3322
    %v3326 = vadd.f32 %v3319, %v2490
    %v3327 = vadd.f32 %v3323, %v2490
    %v3328 = vsel %vm2575, %v3326, -inf
    %3329 = vmax.xlane.f32.xlu0 %v3328
    %v3330 = vpop.xlane.xlu0 %3329
    %v3331 = vsel %vm2575, %v3327, -inf
    %3332 = vmax.xlane.f32.xlu0 %v3331
    %v3333 = vpop.xlane.xlu0 %3332
    %v3334 = vsub.f32 %v3326, %v3330
    %v3335 = vsub.f32 %v3327, %v3333
    %v3336 = vmul.f32 %v3334, 1.442695
    %v3337 = vpow.pop %v3336
    %v3338 = vmul.f32 %v3335, 1.442695
    %v3339 = vpow.pop %v3338
    %v3340 = vsel %vm2575, %v3337, 0.0
    %3341 = vadd.xlane.f32.xlu0 %v3340
    %v3342 = vpop.xlane.xlu0 %3341
    %v3343 = vsel %vm2575, %v3339, 0.0
    %3344 = vadd.xlane.f32.xlu0 %v3343
    %v3345 = vpop.xlane.xlu0 %3344
    %v3346 = vlog2.pop %v3342
    %v3347 = vmul.f32 %v3346, 0.6931472
    %v3348 = vlog2.pop %v3345
    %v3349 = vmul.f32 %v3348, 0.6931472
    %v3350 = vadd.f32 %v3330, %v3347
    %v3351 = vadd.f32 %v3333, %v3349
    %v3352 = vlaneseq
    %v3353 = vshrl.u32 %v3352, 7
    %v3354 = vsub.s32 6, %v3353
    %v3355 = vrot.slane %v2484, %v3354
    %3357 = vbcast.lane.b32.xlu0 %v3355, 256
    %v3358 = vpop.permute.xlu0 %3357
    %v3359 = vlaneseq
    %v3360 = vshrl.u32 %v3359, 7
    %v3361 = vsub.s32 7, %v3360
    %v3362 = vrot.slane %v2484, %v3361
    %3364 = vbcast.lane.b32.xlu0 %v3362, 256
    %v3365 = vpop.permute.xlu0 %3364
    %v3368 = vadd.f32 %v3350, %v3358
    %v3369 = vadd.f32 %v3351, %v3365
    %3372 = vset.pattern.permute.xlu0 0
    %3373 = vperm.xlu0 %3372, %v3368
    %v3374 = vpop.permute.xlu0 %3373
    %3375 = vset.pattern.permute.xlu0 0
    %3376 = vperm.xlu0 %3375, %v3369
    %v3377 = vpop.permute.xlu0 %3376
    %v3378 = vlaneseq
    %v3379 = vshrl.u32 %v3378, 7
    %v3380 = vsub.s32 %v2494, %v3379
    %v3381 = vrot.slane %v3374, %v3380
    %v3382 = vlaneseq
    %v3383 = vshrl.u32 %v3382, 7
    %v3384 = vsub.s32 %v2494, %v3383
    %v3385 = vrot.slane %v3377, %v3384
    %v3386 = vsel %vm2635, %v3385, %v3381
    %v3388 = vsel %vm3291, %v3386, %v3262
    %v3390 = vlaneseq
    %v3391 = vshrl.u32 %v3390, 7
    %v3392 = vsub.s32 0, %v3391
    %v3393 = vrot.slane %v2492, %v3392
    %v3395 = vmul.f32 %v3393, %v3292
    %v3396 = vadd.f32 %v3285, %v3395
    %vm3397 = vcmask 33792
    %v3398 = vsel %vm3397, %v3396, 0.0
    %3399 = vadd.xlane.f32.xlu0 %v3398
    %v3400 = vpop.xlane.xlu0 %3399
    %v3401 = vlaneseq
    %v3402 = vshrl.u32 %v3401, 7
    %s3403 = sld [smem:[#allocation2]]
    %s3404 = smul.u32 %s3403, 5
    %s3405 = sld [smem:[#allocation2 + $0x1]]
    %s3406 = sadd.s32 %s3404, %s3405
    %s3407 = sld [smem:[#allocation6 + %s3406]]
    %s3408 = sld [smem:[#allocation4 + $0x1]]
    %p3409 = scmp.gt.s32.totalorder %s3408, 0
    %s3410 = scalar_select %p3409, %s3407, 0.0
    %s3411 = sadd.f32 %s3410, 0.0
    %s3412 = smul.u32 %s3405, 5
    %s3413 = sld [smem:[#allocation2 + $0x2]]
    %s3414 = sadd.s32 %s3412, %s3413
    %s3415 = sld [smem:[#allocation6 + %s3414]]
    %s3416 = sld [smem:[#allocation4 + $0x2]]
    %p3417 = scmp.gt.s32.totalorder %s3416, 0
    %s3418 = scalar_select %p3417, %s3415, 0.0
    %s3419 = sadd.f32 %s3411, %s3418
    %s3420 = smul.u32 %s3413, 5
    %s3421 = sld [smem:[#allocation2 + $0x3]]
    %s3422 = sadd.s32 %s3420, %s3421
    %s3423 = sld [smem:[#allocation6 + %s3422]]
    %s3424 = sld [smem:[#allocation4 + $0x3]]
    %p3425 = scmp.gt.s32.totalorder %s3424, 0
    %s3426 = scalar_select %p3425, %s3423, 0.0
    %s3427 = sadd.f32 %s3419, %s3426
    %s3428 = smul.u32 %s3421, 5
    %s3429 = sld [smem:[#allocation2 + $0x4]]
    %s3430 = sadd.s32 %s3428, %s3429
    %s3431 = sld [smem:[#allocation6 + %s3430]]
    %s3432 = sld [smem:[#allocation4 + $0x4]]
    %p3433 = scmp.gt.s32.totalorder %s3432, 0
    %s3434 = scalar_select %p3433, %s3431, 0.0
    %s3435 = sadd.f32 %s3427, %s3434
    %s3436 = smul.u32 %s3429, 5
    %s3437 = sld [smem:[#allocation2 + $0x5]]
    %s3438 = sadd.s32 %s3436, %s3437
    %s3439 = sld [smem:[#allocation6 + %s3438]]
    %s3440 = sld [smem:[#allocation4 + $0x5]]
    %p3441 = scmp.gt.s32.totalorder %s3440, 0
    %s3442 = scalar_select %p3441, %s3439, 0.0
    %s3443 = sadd.f32 %s3435, %s3442
    %s3444 = smul.u32 %s3437, 5
    %s3445 = sld [smem:[#allocation2 + $0x6]]
    %s3446 = sadd.s32 %s3444, %s3445
    %s3447 = sld [smem:[#allocation6 + %s3446]]
    %s3448 = sld [smem:[#allocation4 + $0x6]]
    %p3449 = scmp.gt.s32.totalorder %s3448, 0
    %s3450 = scalar_select %p3449, %s3447, 0.0
    %s3451 = sadd.f32 %s3443, %s3450
    %s3452 = smul.u32 %s3445, 5
    %s3453 = sld [smem:[#allocation2 + $0x7]]
    %s3454 = sadd.s32 %s3452, %s3453
    %s3455 = sld [smem:[#allocation6 + %s3454]]
    %s3456 = sld [smem:[#allocation4 + $0x7]]
    %p3457 = scmp.gt.s32.totalorder %s3456, 0
    %s3458 = scalar_select %p3457, %s3455, 0.0
    %s3459 = sadd.f32 %s3451, %s3458
    %vm3460 = vcmp.eq.s32.totalorder %v3402, 0
    %v3461 = vstv %s3459
    %v3462 = vsel %vm3460, %v3461, 0.0
    %v3463 = vadd.f32 %v3462, 0.0
    %s3464 = sld [smem:[#allocation2 + $0x80]]
    %s3465 = smul.u32 %s3464, 5
    %s3466 = sld [smem:[#allocation2 + $0x81]]
    %s3467 = sadd.s32 %s3465, %s3466
    %s3468 = sld [smem:[#allocation6 + %s3467]]
    %s3469 = sld [smem:[#allocation4 + $0x81]]
    %p3470 = scmp.gt.s32.totalorder %s3469, 0
    %s3471 = scalar_select %p3470, %s3468, 0.0
    %s3472 = sadd.f32 %s3471, 0.0
    %s3473 = smul.u32 %s3466, 5
    %s3474 = sld [smem:[#allocation2 + $0x82]]
    %s3475 = sadd.s32 %s3473, %s3474
    %s3476 = sld [smem:[#allocation6 + %s3475]]
    %s3477 = sld [smem:[#allocation4 + $0x82]]
    %p3478 = scmp.gt.s32.totalorder %s3477, 0
    %s3479 = scalar_select %p3478, %s3476, 0.0
    %s3480 = sadd.f32 %s3472, %s3479
    %s3481 = smul.u32 %s3474, 5
    %s3482 = sld [smem:[#allocation2 + $0x83]]
    %s3483 = sadd.s32 %s3481, %s3482
    %s3484 = sld [smem:[#allocation6 + %s3483]]
    %s3485 = sld [smem:[#allocation4 + $0x83]]
    %p3486 = scmp.gt.s32.totalorder %s3485, 0
    %s3487 = scalar_select %p3486, %s3484, 0.0
    %s3488 = sadd.f32 %s3480, %s3487
    %s3489 = smul.u32 %s3482, 5
    %s3490 = sld [smem:[#allocation2 + $0x84]]
    %s3491 = sadd.s32 %s3489, %s3490
    %s3492 = sld [smem:[#allocation6 + %s3491]]
    %s3493 = sld [smem:[#allocation4 + $0x84]]
    %p3494 = scmp.gt.s32.totalorder %s3493, 0
    %s3495 = scalar_select %p3494, %s3492, 0.0
    %s3496 = sadd.f32 %s3488, %s3495
    %s3497 = smul.u32 %s3490, 5
    %s3498 = sld [smem:[#allocation2 + $0x85]]
    %s3499 = sadd.s32 %s3497, %s3498
    %s3500 = sld [smem:[#allocation6 + %s3499]]
    %s3501 = sld [smem:[#allocation4 + $0x85]]
    %p3502 = scmp.gt.s32.totalorder %s3501, 0
    %s3503 = scalar_select %p3502, %s3500, 0.0
    %s3504 = sadd.f32 %s3496, %s3503
    %s3505 = smul.u32 %s3498, 5
    %s3506 = sld [smem:[#allocation2 + $0x86]]
    %s3507 = sadd.s32 %s3505, %s3506
    %s3508 = sld [smem:[#allocation6 + %s3507]]
    %s3509 = sld [smem:[#allocation4 + $0x86]]
    %p3510 = scmp.gt.s32.totalorder %s3509, 0
    %s3511 = scalar_select %p3510, %s3508, 0.0
    %s3512 = sadd.f32 %s3504, %s3511
    %s3513 = smul.u32 %s3506, 5
    %s3514 = sld [smem:[#allocation2 + $0x87]]
    %s3515 = sadd.s32 %s3513, %s3514
    %s3516 = sld [smem:[#allocation6 + %s3515]]
    %s3517 = sld [smem:[#allocation4 + $0x87]]
    %p3518 = scmp.gt.s32.totalorder %s3517, 0
    %s3519 = scalar_select %p3518, %s3516, 0.0
    %s3520 = sadd.f32 %s3512, %s3519
    %vm3521 = vcmp.eq.s32.totalorder %v3402, 1
    %v3522 = vstv %s3520
    %v3523 = vsel %vm3521, %v3522, 0.0
    %v3524 = vadd.f32 %v3463, %v3523
    %v3525 = vadd.f32 %v3388, %v3393
    %v3526 = vsel %vm3397, %v3525, -inf
    %3527 = vmax.xlane.f32.xlu0 %v3526
    %v3528 = vpop.xlane.xlu0 %3527
    %v3529 = vsub.f32 %v3525, %v3528
    %v3530 = vmul.f32 %v3529, 1.442695
    %v3531 = vpow.pop %v3530
    %v3532 = vsel %vm3397, %v3531, 0.0
    %3533 = vadd.xlane.f32.xlu0 %v3532
    %v3534 = vpop.xlane.xlu0 %3533
    %v3535 = vlog2.pop %v3534
    %v3536 = vmul.f32 %v3535, 0.6931472
    %v3537 = vadd.f32 %v3528, %v3536
    %v3538 = vadd.f32 %v3400, %v3524
    %v3539 = vsub.f32 %v3537, %v3538
    %vm3540 = vcmask 1024
    %3541 = vst.msk [vmem:[%s59] sm:$0x3] %vm3540, %v3539
    // Predicated region
    $region126: #{bert_crf_forward.1} parent=1 // pred_check
      _
    $region127: #{bert_crf_forward.1} parent=1 // pred_check_branch
      %3543 = sbr.rel (0) target = $region129
    $region128: #{bert_crf_forward.1} parent=1 // pred_region
      _
    $region129: #{bert_crf_forward.1} parent=1 // pred_fallthru
      _
    // Predicated region
    $region130: #{bert_crf_forward.1} parent=1 // pred_check
      _
    $region131: #{bert_crf_forward.1} parent=1 // pred_check_branch
      %3545 = sbr.rel (0) target = $region133
    $region132: #{bert_crf_forward.1} parent=1 // pred_region
      _
    $region133: #{bert_crf_forward.1} parent=1 // pred_fallthru
      _
    // Predicated region
    $region134: #{bert_crf_forward.1} parent=1 // pred_check
      _
    $region135: #{bert_crf_forward.1} parent=1 // pred_check_branch
      %3547 = sbr.rel (0) target = $region137
    $region136: #{bert_crf_forward.1} parent=1 // pred_region
      _
    $region137: #{bert_crf_forward.1} parent=1 // pred_fallthru
      _
    // Predicated region
    $region138: #{bert_crf_forward.1} parent=1 // pred_check
      _
    $region139: #{bert_crf_forward.1} parent=1 // pred_check_branch
      %3549 = sbr.rel (0) target = $region141
    $region140: #{bert_crf_forward.1} parent=1 // pred_region
      _
    $region141: #{bert_crf_forward.1} parent=1 // pred_fallthru
      _
    %3550 = vsyncpa [#allocation3], 1
    %3551 = vsyncpa [#allocation5], 1

</llo_original>
